<compile_context>
chip_gen: v7x
topology: tpu7x:2x2x1
jax: 0.10.0
libtpu: 0.0.40
codegen_flags: <defaults>
</compile_context>

<pallas_src>
from collections import deque
from functools import partial

import jax
import jax.numpy as jnp
from jax.experimental import pallas as pl
from jax.experimental.pallas import tpu as pltpu

EOS_IDX = 3
SOS_IDX = 2


# --------------------------------------------------------------------------
# Pallas kernels
# --------------------------------------------------------------------------
def _encoder_kernel(emb_ref, wih_ref, whh_ref, bih_ref, bhh_ref,
                    fcw_ref, fcb_ref,
                    enc_out_ref, hid_ref,
                    sf_scr, sb_scr):
    """Whole bidirectional GRU encoder in one kernel (static unroll over time).

    emb    : [2, S, B, E]   (dir 0 = forward order, dir 1 = time-reversed)
    wih    : [2, E, 3He]  whh: [2, He, 3He]  bih/bhh: [2, 1, 3He]  (r,z,n fused)
    fcw    : [2He, Hd]    fcb: [1, Hd]
    enc_out: [S, B, 2He]  (fwd state at t ; bwd state already time-reversed)
    hid    : [B, Hd]      tanh(fc([h_f_final ; h_b_final]))
    sf/sb  : [S, B, He]   VMEM scratch for per-time states
    """
    S = emb_ref.shape[1]
    B = emb_ref.shape[2]
    He = whh_ref.shape[1]

    def gru_step(x, h, d):
        gi = jnp.dot(x, wih_ref[d], preferred_element_type=jnp.float32) + bih_ref[d]
        gh = jnp.dot(h, whh_ref[d], preferred_element_type=jnp.float32) + bhh_ref[d]
        r = jax.nn.sigmoid(gi[:, :He] + gh[:, :He])
        z = jax.nn.sigmoid(gi[:, He:2 * He] + gh[:, He:2 * He])
        n = jnp.tanh(gi[:, 2 * He:] + r * gh[:, 2 * He:])
        return (1.0 - z) * n + z * h

    hf = jnp.zeros((B, He), jnp.float32)
    hb = jnp.zeros((B, He), jnp.float32)
    for t in range(S):                       # static unroll: no grid-step overhead
        hf = gru_step(emb_ref[0, t], hf, 0)  # forward dir, time t
        hb = gru_step(emb_ref[1, t], hb, 1)  # backward dir, time S-1-t
        sf_scr[t] = hf
        sb_scr[S - 1 - t] = hb               # write backward states time-reversed

    enc_out_ref[...] = jnp.concatenate([sf_scr[...], sb_scr[...]], axis=-1)
    h_cat = jnp.concatenate([hf, hb], axis=-1)                               # [B, 2He]
    hid_ref[...] = jnp.tanh(
        jnp.dot(h_cat, fcw_ref[...], preferred_element_type=jnp.float32) + fcb_ref[...])


def _make_decoder_kernel(topk):
    """Fused decoder step for all live beam rows (all batch rows batched):
    attention + GRU + fc_out + softmax + top-k.  Attention is vectorized
    across rows; the context is one batched MXU matmul."""

    def kernel(emb_ref, h_ref, enc_ref, awe_ref,
               awh_ref, v_ref,
               wih_ref, whh_ref, bih_ref, bhh_ref,
               fw_ref, fb_ref,
               vals_ref, idx_ref, hnew_ref):
        emb = emb_ref[...]        # [NB, E]
        h = h_ref[...]            # [NB, Hd]
        enc = enc_ref[...]        # [NB, S, 2He]   (per-row encoder outputs)
        awe = awe_ref[...]        # [NB, S, A]     (precomputed enc @ attn_we + b)
        NB, Hd = h.shape

        # --- Bahdanau attention, vectorized over all rows ---
        h_awh = jnp.dot(h, awh_ref[...], preferred_element_type=jnp.float32)   # [NB, A]
        energy = jnp.tanh(h_awh[:, None, :] + awe)                             # [NB, S, A]
        v = v_ref[...]                                                         # [1, A]
        scores = jnp.sum(energy * v[:, None, :], axis=-1)                      # [NB, S]
        m = jnp.max(scores, axis=-1, keepdims=True)
        e = jnp.exp(scores - m)
        attn = e * pl.reciprocal(jnp.sum(e, axis=-1, keepdims=True), approx=True)  # [NB, S]
        # context: one batched MXU matmul  [NB,1,S] x [NB,S,2He] -> [NB,2He]
        weighted = jnp.einsum('nqs,nsd->nqd', attn[:, None, :], enc,
                              preferred_element_type=jnp.float32)[:, 0, :]

        # --- GRU cell over [emb ; weighted], gates (r, z, n) fused ---
        x = jnp.concatenate([emb, weighted], axis=-1)                          # [NB, E+2He]
        gi = (jnp.dot(x, wih_ref[...], preferred_element_type=jnp.float32)
              + bih_ref[...])                                                  # [NB, 3Hd]
        gh = (jnp.dot(h, whh_ref[...], preferred_element_type=jnp.float32)
              + bhh_ref[...])                                                  # [NB, 3Hd]
        r = jax.nn.sigmoid(gi[:, :Hd] + gh[:, :Hd])
        z = jax.nn.sigmoid(gi[:, Hd:2 * Hd] + gh[:, Hd:2 * Hd])
        n = jnp.tanh(gi[:, 2 * Hd:] + r * gh[:, 2 * Hd:])
        h_new = (1.0 - z) * n + z * h                                          # [NB, Hd]

        # --- fused output projection over [h_new ; weighted ; emb] ---
        feat = jnp.concatenate([h_new, weighted, emb], axis=-1)                # [NB, Hd+2He+E]
        logits = (jnp.dot(feat, fw_ref[...], preferred_element_type=jnp.float32)
                  + fb_ref[...])                                               # [NB, V]

        # --- softmax + top-k: rank on exp (monotone in prob, >= 0 so the
        #     -1.0 masking invariant holds), normalize only the K winners ---
        m2 = jnp.max(logits, axis=-1, keepdims=True)
        e2 = jnp.exp(logits - m2)                                              # [NB, V]
        denom = jnp.sum(e2, axis=-1, keepdims=True)                            # [NB, 1]
        V = e2.shape[-1]
        lane = jax.lax.broadcasted_iota(jnp.int32, e2.shape, 1)
        work = e2
        vals_cols, idx_cols = [], []
        for _ in range(topk):
            vk = jnp.max(work, axis=-1, keepdims=True)
            ik = jnp.min(jnp.where(work == vk, lane, V), axis=-1, keepdims=True)
            vals_cols.append(vk)
            idx_cols.append(ik)
            work = jnp.where(lane == ik, -1.0, work)

        vals_ref[...] = jnp.concatenate(vals_cols, axis=-1) / denom            # [NB, K]
        idx_ref[...] = jnp.concatenate(idx_cols, axis=-1)                      # [NB, K]
        hnew_ref[...] = h_new

    return kernel


# --------------------------------------------------------------------------
# pallas_call wrappers
# --------------------------------------------------------------------------
_VMEM_SPEC = pl.BlockSpec(memory_space=pltpu.MemorySpace.VMEM)


@jax.jit
def run_encoder(src, p):
    """src: [S, B] int32 -> (enc_out_bt [B,S,2He], enc_awe_bt [B,S,A], encoder_hidden [B,Hd])."""
    S, B = src.shape
    embedded = p["enc_emb"][src]                               # [S, B, E] (dropout = identity)
    emb2 = jnp.stack([embedded, embedded[::-1]], axis=0)       # [2, S, B, E]
    He = p["enc_whh"].shape[1]
    Hd = p["enc_fc_w"].shape[1]

    enc_out, enc_hidden = pl.pallas_call(
        _encoder_kernel,
        out_shape=(jax.ShapeDtypeStruct((S, B, 2 * He), jnp.float32),
                   jax.ShapeDtypeStruct((B, Hd), jnp.float32)),
        in_specs=[_VMEM_SPEC] * 7,
        out_specs=(_VMEM_SPEC, _VMEM_SPEC),
        scratch_shapes=[pltpu.VMEM((S, B, He), jnp.float32),
                        pltpu.VMEM((S, B, He), jnp.float32)],
    )(emb2, p["enc_wih"], p["enc_whh"], p["enc_bih"], p["enc_bhh"],
      p["enc_fc_w"], p["enc_fc_b"])

    # Attention encoder projection hoisted out of every decode step: computed
    # once per forward (tiny XLA op), reused by all decoder launches.
    enc_awe = jnp.einsum("sbe,ea->sba", enc_out, p["attn_we"]) + p["attn_b"]   # [S, B, A]
    enc_out_bt = jnp.transpose(enc_out, (1, 0, 2))                             # [B, S, 2He]
    enc_awe_bt = jnp.transpose(enc_awe, (1, 0, 2))                             # [B, S, A]
    return enc_out_bt, enc_awe_bt, enc_hidden


@partial(jax.jit, static_argnames=("topk",))
def decoder_step(tok, bidx, hiddens, enc_out_bt, enc_awe_bt, p, *, topk):
    """tok/bidx: [NB] int32 (token, batch-row of each live hypothesis),
    hiddens: tuple of NB [1,Hd] arrays, enc_out_bt: [B,S,2He], enc_awe_bt: [B,S,A].
    Returns (topk values [NB,K], topk indices [NB,K] i32, new hidden [NB,Hd])."""
    emb = p["dec_emb"][tok]                         # [NB, E]
    hidden = jnp.concatenate(hiddens, axis=0)       # [NB, Hd]
    enc_rows = enc_out_bt[bidx]                     # [NB, S, 2He]  per-row gather (XLA)
    awe_rows = enc_awe_bt[bidx]                     # [NB, S, A]
    NB, Hd = hidden.shape
    E = emb.shape[1]
    S = enc_rows.shape[1]
    He2 = enc_rows.shape[2]
    A = awe_rows.shape[2]
    V = p["fc_w"].shape[1]

    flops = 2 * NB * (Hd * A + S * A + S * He2
                      + (E + He2) * 3 * Hd + Hd * 3 * Hd
                      + (Hd + He2 + E) * V)
    trans = NB * (S * A + S + 3 * Hd + V)
    bytes_accessed = 4 * (emb.size + hidden.size + enc_rows.size + awe_rows.size
                          + p["attn_wh"].size + p["attn_v"].size
                          + p["dec_wih"].size + p["dec_whh"].size
                          + p["dec_bih"].size + p["dec_bhh"].size
                          + p["fc_w"].size + p["fc_b"].size
                          + NB * topk * 2 + NB * Hd)

    kernel = _make_decoder_kernel(topk)
    return pl.pallas_call(
        kernel,
        out_shape=(jax.ShapeDtypeStruct((NB, topk), jnp.float32),
                   jax.ShapeDtypeStruct((NB, topk), jnp.int32),
                   jax.ShapeDtypeStruct((NB, Hd), jnp.float32)),
        in_specs=[_VMEM_SPEC] * 12,
        out_specs=(_VMEM_SPEC, _VMEM_SPEC, _VMEM_SPEC),
        cost_estimate=pl.CostEstimate(flops=flops, transcendentals=trans,
                                      bytes_accessed=bytes_accessed),
    )(emb, hidden, enc_rows, awe_rows,
      p["attn_wh"], p["attn_v"],
      p["dec_wih"], p["dec_whh"], p["dec_bih"], p["dec_bhh"],
      p["fc_w"], p["fc_b"])


# --------------------------------------------------------------------------
# Beam search (host control flow, lockstep across batch rows; semantics match
# the per-row loops of the PyTorch reference)
# --------------------------------------------------------------------------
class Node(object):
    def __init__(self, hidden, previous_node, decoder_input, log_prob, length):
        self.hidden = hidden
        self.previous_node = previous_node
        self.decoder_input = decoder_input
        self.log_prob = log_prob
        self.length = length


class _RowState(object):
    __slots__ = ("q", "end_nodes", "finished", "expand_nodes", "root")

    def __init__(self, root):
        self.q = deque([root])
        self.end_nodes = []
        self.finished = False
        self.expand_nodes = []
        self.root = root


def beam_search_forward(src, params, max_len=32, beam_size=2):
    """Faithful port of Beam_Search.forward.  Returns (all_tokens [B,32] i32, all_scores [B,32] f32)."""
    # TODO(synk): queue/priority-queue beam control flow stays on host (no clean Pallas equivalent).
    S, B = src.shape
    enc_out_bt, enc_awe_bt, encoder_hidden = run_encoder(src, params)
    NB = B * beam_size  # fixed row count: all live hypotheses of all batch rows per launch

    rows = []
    for b in range(B):
        root = Node(hidden=encoder_hidden[b:b + 1, :], previous_node=None,
                    decoder_input=SOS_IDX, log_prob=1.0, length=1)
        rows.append(_RowState(root))

    while True:
        # ---- phase 1: per-row dequeue (one iteration of each row's while loop) ----
        expand_all = []   # list of (batch_idx, node), in row order
        any_active = False
        for b in range(B):
            st = rows[b]
            st.expand_nodes = []
            if st.finished:
                continue
            if (not st.q) or len(st.end_nodes) >= beam_size:
                st.finished = True
                continue
            any_active = True
            count = len(st.q)
            for _ in range(count):
                node = st.q.popleft()
                if node.decoder_input == EOS_IDX or node.length >= max_len:
                    st.end_nodes.append(node)
                    break                   # mirrors the reference's break on first terminal
                st.expand_nodes.append(node)
            for nd in st.expand_nodes:
                expand_all.append((b, nd))
        if not any_active:
            break
        if not expand_all:
            continue                        # mirrors `if candidates.qsize() == 0: continue`

        # ---- phase 2: ONE batched fused decoder-step kernel for all rows ----
        tokens = [nd.decoder_input for (_, nd) in expand_all]
        bidxs = [b for (b, _) in expand_all]
        hids = [nd.hidden for (_, nd) in expand_all]
        while len(tokens) < NB:             # pad to fixed NB (padded rows ignored)
            tokens.append(tokens[0])
            bidxs.append(bidxs[0])
            hids.append(hids[0])
        tok = jnp.asarray(tokens, dtype=jnp.int32)
        bidx = jnp.asarray(bidxs, dtype=jnp.int32)

        vals, idxs, h_new = decoder_step(tok, bidx, tuple(hids),
                                         enc_out_bt, enc_awe_bt, params, topk=beam_size)
        vals_h, idxs_h = jax.device_get((vals, idxs))   # single host sync per expansion step

        per_b = {}
        for r, (b, nd) in enumerate(expand_all):
            per_b.setdefault(b, []).append((nd, r))
        for b, items in per_b.items():
            st = rows[b]
            candidates = []
            for nd, r in items:
                new_hidden = h_new[r:r + 1, :]          # [1, Hd], stays on device
                for i in range(beam_size):
                    prob = float(vals_h[r, i]) * nd.log_prob
                    candidates.append((prob, Node(hidden=new_hidden, previous_node=nd,
                                                  decoder_input=int(idxs_h[r, i]),
                                                  log_prob=prob, length=nd.length + 1)))
            # PriorityQueue drained ascending then reversed == descending by prob.
            candidates.sort(key=lambda c: c[0], reverse=True)
            for i in range(min(beam_size, len(candidates))):
                st.q.append(candidates[i][1])

    # ---- back-track best end node per batch row ----
    all_tokens = [[EOS_IDX] * max_len for _ in range(B)]
    all_scores = [[0.0] * max_len for _ in range(B)]
    for b in range(B):
        st = rows[b]
        if not st.end_nodes:
            # Defensive fallback (the reference would crash here); use best remaining node.
            st.end_nodes.append(max(list(st.q), key=lambda nd: nd.log_prob) if st.q else st.root)
        max_node = max(st.end_nodes, key=lambda nd: nd.log_prob)   # topk(1) over end scores
        token_idxs, token_scores = [], []
        while max_node is not None:
            token_idxs = [max_node.decoder_input] + token_idxs
            token_scores = [max_node.log_prob] + token_scores
            max_node = max_node.previous_node
        L = len(token_idxs)
        all_tokens[b][:L] = token_idxs
        all_scores[b][:L] = token_scores

    return (jnp.asarray(all_tokens, dtype=jnp.int32),
            jnp.asarray(all_scores, dtype=jnp.float32))


# --------------------------------------------------------------------------
# Deterministic parameter init (shapes implied by the module's __init__)
# --------------------------------------------------------------------------
def init_params(key, input_dim, output_dim, enc_emb_dim, dec_emb_dim,
                enc_hid_dim, dec_hid_dim, attn_dim):
    keys = list(jax.random.split(key, 32))
    kit = iter(keys)

    def w(shape, scale=0.1):
        return jax.random.normal(next(kit), shape, jnp.float32) * scale

    p = {}
    p["enc_emb"] = w((input_dim, enc_emb_dim))
    p["dec_emb"] = w((output_dim, dec_emb_dim))
    # encoder: 1-layer bidirectional GRU, directions stacked on axis 0,
    # gates (r, z, n) fused along the last dim -> single matmul per step.
    p["enc_wih"] = w((2, enc_emb_dim, 3 * enc_hid_dim))
    p["enc_whh"] = w((2, enc_hid_dim, 3 * enc_hid_dim))
    p["enc_bih"] = w((2, 1, 3 * enc_hid_dim))
    p["enc_bhh"] = w((2, 1, 3 * enc_hid_dim))
    p["enc_fc_w"] = w((2 * enc_hid_dim, dec_hid_dim))
    p["enc_fc_b"] = w((1, dec_hid_dim))
    # attention:  W_attn split into hidden / encoder-output pieces;  v as a row vector
    p["attn_wh"] = w((dec_hid_dim, attn_dim))
    p["attn_we"] = w((2 * enc_hid_dim, attn_dim))
    p["attn_b"] = w((1, attn_dim))
    p["attn_v"] = w((1, attn_dim))
    # decoder GRU over [embedded ; weighted], gates fused
    p["dec_wih"] = w((dec_emb_dim + 2 * enc_hid_dim, 3 * dec_hid_dim))
    p["dec_whh"] = w((dec_hid_dim, 3 * dec_hid_dim))
    p["dec_bih"] = w((1, 3 * dec_hid_dim))
    p["dec_bhh"] = w((1, 3 * dec_hid_dim))
    # fc_out over [output ; weighted ; embedded], fused into one weight
    p["fc_w"] = w((dec_hid_dim + 2 * enc_hid_dim + dec_emb_dim, output_dim))
    p["fc_b"] = w((1, output_dim))
    return p


# --------------------------------------------------------------------------
if __name__ == "__main__":
    INPUT_DIM = 32      # source vocab
    OUTPUT_DIM = 32     # target vocab
    ENC_EMB_DIM = 16
    DEC_EMB_DIM = 16
    ENC_HID_DIM = 32
    DEC_HID_DIM = 32
    ATTN_DIM = 16
    SRC_LEN = 8
    BATCH = 2

    key = jax.random.PRNGKey(0)
    pkey, skey = jax.random.split(key)
    params = init_params(pkey, INPUT_DIM, OUTPUT_DIM, ENC_EMB_DIM, DEC_EMB_DIM,
                         ENC_HID_DIM, DEC_HID_DIM, ATTN_DIM)

    # layout: src is [src_len, batch] int32 (time-major), as in the PyTorch module
    src = jax.random.randint(skey, (SRC_LEN, BATCH), 0, INPUT_DIM, dtype=jnp.int32)

    all_tokens, all_scores = beam_search_forward(src, params)
    jax.block_until_ready(all_tokens)
    jax.block_until_ready(all_scores)
    assert all_tokens.shape == (BATCH, 32) and all_scores.shape == (BATCH, 32)
    print("KERNEL_OK")
</pallas_src>

<mosaic_0001>
module attributes {stable_mosaic.version = 11 : i64} {
  func.func @_encoder_kernel(%arg0: memref<2x8x2x16xf32, #tpu.memory_space<vmem>>, %arg1: memref<2x16x96xf32, #tpu.memory_space<vmem>>, %arg2: memref<2x32x96xf32, #tpu.memory_space<vmem>>, %arg3: memref<2x1x96xf32, #tpu.memory_space<vmem>>, %arg4: memref<2x1x96xf32, #tpu.memory_space<vmem>>, %arg5: memref<64x32xf32, #tpu.memory_space<vmem>>, %arg6: memref<1x32xf32, #tpu.memory_space<vmem>>, %arg7: memref<8x2x64xf32, #tpu.memory_space<vmem>>, %arg8: memref<2x32xf32, #tpu.memory_space<vmem>>, %arg9: memref<8x2x32xf32, #tpu.memory_space<vmem>>, %arg10: memref<8x2x32xf32, #tpu.memory_space<vmem>>) attributes {dimension_semantics = [], scalar_prefetch = 0 : i64, scratch_operands = 2 : i64, tpu.core_type = #tpu.core_type<tc>} {
    %cst = arith.constant 0.000000e+00 : f32
    %0 = vector.broadcast %cst : f32 to vector<2x32xf32>
    %cst_0 = arith.constant 0.000000e+00 : f32
    %1 = vector.broadcast %cst_0 : f32 to vector<2x32xf32>
    %c0 = arith.constant 0 : index
    %c0_1 = arith.constant 0 : index
    %c0_2 = arith.constant 0 : index
    %c0_3 = arith.constant 0 : index
    %2 = vector.load %arg0[%c0, %c0_1, %c0_2, %c0_3] : memref<2x8x2x16xf32, #tpu.memory_space<vmem>>, vector<1x1x2x16xf32>
    %3 = vector.shape_cast %2 : vector<1x1x2x16xf32> to vector<2x16xf32>
    %c0_4 = arith.constant 0 : index
    %c0_5 = arith.constant 0 : index
    %c0_6 = arith.constant 0 : index
    %4 = vector.load %arg1[%c0_4, %c0_5, %c0_6] : memref<2x16x96xf32, #tpu.memory_space<vmem>>, vector<1x16x96xf32>
    %5 = vector.shape_cast %4 : vector<1x16x96xf32> to vector<16x96xf32>
    %cst_7 = arith.constant dense<0.000000e+00> : vector<2x96xf32>
    %6 = tpu.matmul %3, %5, %cst_7 {dimension_numbers = #tpu.dot_dimension_numbers<[1], [0], [0], [1], [0, 0, 1, 1], [], []>} : vector<2x16xf32>, vector<16x96xf32>, vector<2x96xf32> -> vector<2x96xf32>
    %c0_8 = arith.constant 0 : index
    %c0_9 = arith.constant 0 : index
    %c0_10 = arith.constant 0 : index
    %7 = vector.load %arg3[%c0_8, %c0_9, %c0_10] : memref<2x1x96xf32, #tpu.memory_space<vmem>>, vector<1x1x96xf32>
    %8 = vector.shape_cast %7 : vector<1x1x96xf32> to vector<1x96xf32>
    %9 = vector.broadcast %8 : vector<1x96xf32> to vector<2x96xf32>
    %10 = arith.addf %6, %9 : vector<2x96xf32>
    %c0_11 = arith.constant 0 : index
    %c0_12 = arith.constant 0 : index
    %c0_13 = arith.constant 0 : index
    %11 = vector.load %arg2[%c0_11, %c0_12, %c0_13] : memref<2x32x96xf32, #tpu.memory_space<vmem>>, vector<1x32x96xf32>
    %12 = vector.shape_cast %11 : vector<1x32x96xf32> to vector<32x96xf32>
    %cst_14 = arith.constant dense<0.000000e+00> : vector<2x96xf32>
    %13 = tpu.matmul %0, %12, %cst_14 {dimension_numbers = #tpu.dot_dimension_numbers<[1], [0], [0], [1], [0, 0, 1, 1], [], []>} : vector<2x32xf32>, vector<32x96xf32>, vector<2x96xf32> -> vector<2x96xf32>
    %c0_15 = arith.constant 0 : index
    %c0_16 = arith.constant 0 : index
    %c0_17 = arith.constant 0 : index
    %14 = vector.load %arg4[%c0_15, %c0_16, %c0_17] : memref<2x1x96xf32, #tpu.memory_space<vmem>>, vector<1x1x96xf32>
    %15 = vector.shape_cast %14 : vector<1x1x96xf32> to vector<1x96xf32>
    %16 = vector.broadcast %15 : vector<1x96xf32> to vector<2x96xf32>
    %17 = arith.addf %13, %16 : vector<2x96xf32>
    %18 = vector.extract_strided_slice %10 {offsets = [0, 0], sizes = [2, 32], strides = [1, 1]} : vector<2x96xf32> to vector<2x32xf32>
    %19 = vector.extract_strided_slice %17 {offsets = [0, 0], sizes = [2, 32], strides = [1, 1]} : vector<2x96xf32> to vector<2x32xf32>
    %20 = arith.addf %18, %19 : vector<2x32xf32>
    %21 = arith.negf %20 : vector<2x32xf32>
    %22 = math.exp %21 : vector<2x32xf32>
    %cst_18 = arith.constant 1.000000e+00 : f32
    %23 = vector.broadcast %cst_18 : f32 to vector<2x32xf32>
    %24 = arith.addf %23, %22 : vector<2x32xf32>
    %25 = arith.divf %23, %24 : vector<2x32xf32>
    %26 = vector.extract_strided_slice %10 {offsets = [0, 32], sizes = [2, 32], strides = [1, 1]} : vector<2x96xf32> to vector<2x32xf32>
    %27 = vector.extract_strided_slice %17 {offsets = [0, 32], sizes = [2, 32], strides = [1, 1]} : vector<2x96xf32> to vector<2x32xf32>
    %28 = arith.addf %26, %27 : vector<2x32xf32>
    %29 = arith.negf %28 : vector<2x32xf32>
    %30 = math.exp %29 : vector<2x32xf32>
    %cst_19 = arith.constant 1.000000e+00 : f32
    %31 = vector.broadcast %cst_19 : f32 to vector<2x32xf32>
    %32 = arith.addf %31, %30 : vector<2x32xf32>
    %33 = arith.divf %31, %32 : vector<2x32xf32>
    %34 = vector.extract_strided_slice %10 {offsets = [0, 64], sizes = [2, 32], strides = [1, 1]} : vector<2x96xf32> to vector<2x32xf32>
    %35 = vector.extract_strided_slice %17 {offsets = [0, 64], sizes = [2, 32], strides = [1, 1]} : vector<2x96xf32> to vector<2x32xf32>
    %36 = arith.mulf %25, %35 : vector<2x32xf32>
    %37 = arith.addf %34, %36 : vector<2x32xf32>
    %38 = math.tanh %37 : vector<2x32xf32>
    %cst_20 = arith.constant 1.000000e+00 : f32
    %39 = vector.broadcast %cst_20 : f32 to vector<2x32xf32>
    %40 = arith.subf %39, %33 : vector<2x32xf32>
    %41 = arith.mulf %40, %38 : vector<2x32xf32>
    %42 = arith.mulf %33, %0 : vector<2x32xf32>
    %43 = arith.addf %41, %42 : vector<2x32xf32>
    %c1 = arith.constant 1 : index
    %c0_21 = arith.constant 0 : index
    %c0_22 = arith.constant 0 : index
    %c0_23 = arith.constant 0 : index
    %44 = vector.load %arg0[%c1, %c0_21, %c0_22, %c0_23] : memref<2x8x2x16xf32, #tpu.memory_space<vmem>>, vector<1x1x2x16xf32>
    %45 = vector.shape_cast %44 : vector<1x1x2x16xf32> to vector<2x16xf32>
    %c1_24 = arith.constant 1 : index
    %c0_25 = arith.constant 0 : index
    %c0_26 = arith.constant 0 : index
    %46 = vector.load %arg1[%c1_24, %c0_25, %c0_26] : memref<2x16x96xf32, #tpu.memory_space<vmem>>, vector<1x16x96xf32>
    %47 = vector.shape_cast %46 : vector<1x16x96xf32> to vector<16x96xf32>
    %cst_27 = arith.constant dense<0.000000e+00> : vector<2x96xf32>
    %48 = tpu.matmul %45, %47, %cst_27 {dimension_numbers = #tpu.dot_dimension_numbers<[1], [0], [0], [1], [0, 0, 1, 1], [], []>} : vector<2x16xf32>, vector<16x96xf32>, vector<2x96xf32> -> vector<2x96xf32>
    %c1_28 = arith.constant 1 : index
    %c0_29 = arith.constant 0 : index
    %c0_30 = arith.constant 0 : index
    %49 = vector.load %arg3[%c1_28, %c0_29, %c0_30] : memref<2x1x96xf32, #tpu.memory_space<vmem>>, vector<1x1x96xf32>
    %50 = vector.shape_cast %49 : vector<1x1x96xf32> to vector<1x96xf32>
    %51 = vector.broadcast %50 : vector<1x96xf32> to vector<2x96xf32>
    %52 = arith.addf %48, %51 : vector<2x96xf32>
    %c1_31 = arith.constant 1 : index
    %c0_32 = arith.constant 0 : index
    %c0_33 = arith.constant 0 : index
    %53 = vector.load %arg2[%c1_31, %c0_32, %c0_33] : memref<2x32x96xf32, #tpu.memory_space<vmem>>, vector<1x32x96xf32>
    %54 = vector.shape_cast %53 : vector<1x32x96xf32> to vector<32x96xf32>
    %cst_34 = arith.constant dense<0.000000e+00> : vector<2x96xf32>
    %55 = tpu.matmul %1, %54, %cst_34 {dimension_numbers = #tpu.dot_dimension_numbers<[1], [0], [0], [1], [0, 0, 1, 1], [], []>} : vector<2x32xf32>, vector<32x96xf32>, vector<2x96xf32> -> vector<2x96xf32>
    %c1_35 = arith.constant 1 : index
    %c0_36 = arith.constant 0 : index
    %c0_37 = arith.constant 0 : index
    %56 = vector.load %arg4[%c1_35, %c0_36, %c0_37] : memref<2x1x96xf32, #tpu.memory_space<vmem>>, vector<1x1x96xf32>
    %57 = vector.shape_cast %56 : vector<1x1x96xf32> to vector<1x96xf32>
    %58 = vector.broadcast %57 : vector<1x96xf32> to vector<2x96xf32>
    %59 = arith.addf %55, %58 : vector<2x96xf32>
    %60 = vector.extract_strided_slice %52 {offsets = [0, 0], sizes = [2, 32], strides = [1, 1]} : vector<2x96xf32> to vector<2x32xf32>
    %61 = vector.extract_strided_slice %59 {offsets = [0, 0], sizes = [2, 32], strides = [1, 1]} : vector<2x96xf32> to vector<2x32xf32>
    %62 = arith.addf %60, %61 : vector<2x32xf32>
    %63 = arith.negf %62 : vector<2x32xf32>
    %64 = math.exp %63 : vector<2x32xf32>
    %cst_38 = arith.constant 1.000000e+00 : f32
    %65 = vector.broadcast %cst_38 : f32 to vector<2x32xf32>
    %66 = arith.addf %65, %64 : vector<2x32xf32>
    %67 = arith.divf %65, %66 : vector<2x32xf32>
    %68 = vector.extract_strided_slice %52 {offsets = [0, 32], sizes = [2, 32], strides = [1, 1]} : vector<2x96xf32> to vector<2x32xf32>
    %69 = vector.extract_strided_slice %59 {offsets = [0, 32], sizes = [2, 32], strides = [1, 1]} : vector<2x96xf32> to vector<2x32xf32>
    %70 = arith.addf %68, %69 : vector<2x32xf32>
    %71 = arith.negf %70 : vector<2x32xf32>
    %72 = math.exp %71 : vector<2x32xf32>
    %cst_39 = arith.constant 1.000000e+00 : f32
    %73 = vector.broadcast %cst_39 : f32 to vector<2x32xf32>
    %74 = arith.addf %73, %72 : vector<2x32xf32>
    %75 = arith.divf %73, %74 : vector<2x32xf32>
    %76 = vector.extract_strided_slice %52 {offsets = [0, 64], sizes = [2, 32], strides = [1, 1]} : vector<2x96xf32> to vector<2x32xf32>
    %77 = vector.extract_strided_slice %59 {offsets = [0, 64], sizes = [2, 32], strides = [1, 1]} : vector<2x96xf32> to vector<2x32xf32>
    %78 = arith.mulf %67, %77 : vector<2x32xf32>
    %79 = arith.addf %76, %78 : vector<2x32xf32>
    %80 = math.tanh %79 : vector<2x32xf32>
    %cst_40 = arith.constant 1.000000e+00 : f32
    %81 = vector.broadcast %cst_40 : f32 to vector<2x32xf32>
    %82 = arith.subf %81, %75 : vector<2x32xf32>
    %83 = arith.mulf %82, %80 : vector<2x32xf32>
    %84 = arith.mulf %75, %1 : vector<2x32xf32>
    %85 = arith.addf %83, %84 : vector<2x32xf32>
    %c0_41 = arith.constant 0 : index
    %c0_42 = arith.constant 0 : index
    %c0_43 = arith.constant 0 : index
    %86 = vector.load %arg9[%c0_41, %c0_42, %c0_43] : memref<8x2x32xf32, #tpu.memory_space<vmem>>, vector<1x2x32xf32>
    %87 = vector.shape_cast %86 : vector<1x2x32xf32> to vector<2x32xf32>
    %88 = vector.shape_cast %43 : vector<2x32xf32> to vector<1x2x32xf32>
    tpu.vector_store %arg9[%c0_41, %c0_42, %c0_43], %88 {strides = array<i32>} : memref<8x2x32xf32, #tpu.memory_space<vmem>>, vector<1x2x32xf32>,
    %c7 = arith.constant 7 : index
    %c0_44 = arith.constant 0 : index
    %c0_45 = arith.constant 0 : index
    %89 = vector.load %arg10[%c7, %c0_44, %c0_45] : memref<8x2x32xf32, #tpu.memory_space<vmem>>, vector<1x2x32xf32>
    %90 = vector.shape_cast %89 : vector<1x2x32xf32> to vector<2x32xf32>
    %91 = vector.shape_cast %85 : vector<2x32xf32> to vector<1x2x32xf32>
    tpu.vector_store %arg10[%c7, %c0_44, %c0_45], %91 {strides = array<i32>} : memref<8x2x32xf32, #tpu.memory_space<vmem>>, vector<1x2x32xf32>,
    %c0_46 = arith.constant 0 : index
    %c1_47 = arith.constant 1 : index
    %c0_48 = arith.constant 0 : index
    %c0_49 = arith.constant 0 : index
    %92 = vector.load %arg0[%c0_46, %c1_47, %c0_48, %c0_49] : memref<2x8x2x16xf32, #tpu.memory_space<vmem>>, vector<1x1x2x16xf32>
    %93 = vector.shape_cast %92 : vector<1x1x2x16xf32> to vector<2x16xf32>
    %c0_50 = arith.constant 0 : index
    %c0_51 = arith.constant 0 : index
    %c0_52 = arith.constant 0 : index
    %94 = vector.load %arg1[%c0_50, %c0_51, %c0_52] : memref<2x16x96xf32, #tpu.memory_space<vmem>>, vector<1x16x96xf32>
    %95 = vector.shape_cast %94 : vector<1x16x96xf32> to vector<16x96xf32>
    %cst_53 = arith.constant dense<0.000000e+00> : vector<2x96xf32>
    %96 = tpu.matmul %93, %95, %cst_53 {dimension_numbers = #tpu.dot_dimension_numbers<[1], [0], [0], [1], [0, 0, 1, 1], [], []>} : vector<2x16xf32>, vector<16x96xf32>, vector<2x96xf32> -> vector<2x96xf32>
    %c0_54 = arith.constant 0 : index
    %c0_55 = arith.constant 0 : index
    %c0_56 = arith.constant 0 : index
    %97 = vector.load %arg3[%c0_54, %c0_55, %c0_56] : memref<2x1x96xf32, #tpu.memory_space<vmem>>, vector<1x1x96xf32>
    %98 = vector.shape_cast %97 : vector<1x1x96xf32> to vector<1x96xf32>
    %99 = vector.broadcast %98 : vector<1x96xf32> to vector<2x96xf32>
    %100 = arith.addf %96, %99 : vector<2x96xf32>
    %c0_57 = arith.constant 0 : index
    %c0_58 = arith.constant 0 : index
    %c0_59 = arith.constant 0 : index
    %101 = vector.load %arg2[%c0_57, %c0_58, %c0_59] : memref<2x32x96xf32, #tpu.memory_space<vmem>>, vector<1x32x96xf32>
    %102 = vector.shape_cast %101 : vector<1x32x96xf32> to vector<32x96xf32>
    %cst_60 = arith.constant dense<0.000000e+00> : vector<2x96xf32>
    %103 = tpu.matmul %43, %102, %cst_60 {dimension_numbers = #tpu.dot_dimension_numbers<[1], [0], [0], [1], [0, 0, 1, 1], [], []>} : vector<2x32xf32>, vector<32x96xf32>, vector<2x96xf32> -> vector<2x96xf32>
    %c0_61 = arith.constant 0 : index
    %c0_62 = arith.constant 0 : index
    %c0_63 = arith.constant 0 : index
    %104 = vector.load %arg4[%c0_61, %c0_62, %c0_63] : memref<2x1x96xf32, #tpu.memory_space<vmem>>, vector<1x1x96xf32>
    %105 = vector.shape_cast %104 : vector<1x1x96xf32> to vector<1x96xf32>
    %106 = vector.broadcast %105 : vector<1x96xf32> to vector<2x96xf32>
    %107 = arith.addf %103, %106 : vector<2x96xf32>
    %108 = vector.extract_strided_slice %100 {offsets = [0, 0], sizes = [2, 32], strides = [1, 1]} : vector<2x96xf32> to vector<2x32xf32>
    %109 = vector.extract_strided_slice %107 {offsets = [0, 0], sizes = [2, 32], strides = [1, 1]} : vector<2x96xf32> to vector<2x32xf32>
    %110 = arith.addf %108, %109 : vector<2x32xf32>
    %111 = arith.negf %110 : vector<2x32xf32>
    %112 = math.exp %111 : vector<2x32xf32>
    %cst_64 = arith.constant 1.000000e+00 : f32
    %113 = vector.broadcast %cst_64 : f32 to vector<2x32xf32>
    %114 = arith.addf %113, %112 : vector<2x32xf32>
    %115 = arith.divf %113, %114 : vector<2x32xf32>
    %116 = vector.extract_strided_slice %100 {offsets = [0, 32], sizes = [2, 32], strides = [1, 1]} : vector<2x96xf32> to vector<2x32xf32>
    %117 = vector.extract_strided_slice %107 {offsets = [0, 32], sizes = [2, 32], strides = [1, 1]} : vector<2x96xf32> to vector<2x32xf32>
    %118 = arith.addf %116, %117 : vector<2x32xf32>
    %119 = arith.negf %118 : vector<2x32xf32>
    %120 = math.exp %119 : vector<2x32xf32>
    %cst_65 = arith.constant 1.000000e+00 : f32
    %121 = vector.broadcast %cst_65 : f32 to vector<2x32xf32>
    %122 = arith.addf %121, %120 : vector<2x32xf32>
    %123 = arith.divf %121, %122 : vector<2x32xf32>
    %124 = vector.extract_strided_slice %100 {offsets = [0, 64], sizes = [2, 32], strides = [1, 1]} : vector<2x96xf32> to vector<2x32xf32>
    %125 = vector.extract_strided_slice %107 {offsets = [0, 64], sizes = [2, 32], strides = [1, 1]} : vector<2x96xf32> to vector<2x32xf32>
    %126 = arith.mulf %115, %125 : vector<2x32xf32>
    %127 = arith.addf %124, %126 : vector<2x32xf32>
    %128 = math.tanh %127 : vector<2x32xf32>
    %cst_66 = arith.constant 1.000000e+00 : f32
    %129 = vector.broadcast %cst_66 : f32 to vector<2x32xf32>
    %130 = arith.subf %129, %123 : vector<2x32xf32>
    %131 = arith.mulf %130, %128 : vector<2x32xf32>
    %132 = arith.mulf %123, %43 : vector<2x32xf32>
    %133 = arith.addf %131, %132 : vector<2x32xf32>
    %c1_67 = arith.constant 1 : index
    %c1_68 = arith.constant 1 : index
    %c0_69 = arith.constant 0 : index
    %c0_70 = arith.constant 0 : index
    %134 = vector.load %arg0[%c1_67, %c1_68, %c0_69, %c0_70] : memref<2x8x2x16xf32, #tpu.memory_space<vmem>>, vector<1x1x2x16xf32>
    %135 = vector.shape_cast %134 : vector<1x1x2x16xf32> to vector<2x16xf32>
    %c1_71 = arith.constant 1 : index
    %c0_72 = arith.constant 0 : index
    %c0_73 = arith.constant 0 : index
    %136 = vector.load %arg1[%c1_71, %c0_72, %c0_73] : memref<2x16x96xf32, #tpu.memory_space<vmem>>, vector<1x16x96xf32>
    %137 = vector.shape_cast %136 : vector<1x16x96xf32> to vector<16x96xf32>
    %cst_74 = arith.constant dense<0.000000e+00> : vector<2x96xf32>
    %138 = tpu.matmul %135, %137, %cst_74 {dimension_numbers = #tpu.dot_dimension_numbers<[1], [0], [0], [1], [0, 0, 1, 1], [], []>} : vector<2x16xf32>, vector<16x96xf32>, vector<2x96xf32> -> vector<2x96xf32>
    %c1_75 = arith.constant 1 : index
    %c0_76 = arith.constant 0 : index
    %c0_77 = arith.constant 0 : index
    %139 = vector.load %arg3[%c1_75, %c0_76, %c0_77] : memref<2x1x96xf32, #tpu.memory_space<vmem>>, vector<1x1x96xf32>
    %140 = vector.shape_cast %139 : vector<1x1x96xf32> to vector<1x96xf32>
    %141 = vector.broadcast %140 : vector<1x96xf32> to vector<2x96xf32>
    %142 = arith.addf %138, %141 : vector<2x96xf32>
    %c1_78 = arith.constant 1 : index
    %c0_79 = arith.constant 0 : index
    %c0_80 = arith.constant 0 : index
    %143 = vector.load %arg2[%c1_78, %c0_79, %c0_80] : memref<2x32x96xf32, #tpu.memory_space<vmem>>, vector<1x32x96xf32>
    %144 = vector.shape_cast %143 : vector<1x32x96xf32> to vector<32x96xf32>
    %cst_81 = arith.constant dense<0.000000e+00> : vector<2x96xf32>
    %145 = tpu.matmul %85, %144, %cst_81 {dimension_numbers = #tpu.dot_dimension_numbers<[1], [0], [0], [1], [0, 0, 1, 1], [], []>} : vector<2x32xf32>, vector<32x96xf32>, vector<2x96xf32> -> vector<2x96xf32>
    %c1_82 = arith.constant 1 : index
    %c0_83 = arith.constant 0 : index
    %c0_84 = arith.constant 0 : index
    %146 = vector.load %arg4[%c1_82, %c0_83, %c0_84] : memref<2x1x96xf32, #tpu.memory_space<vmem>>, vector<1x1x96xf32>
    %147 = vector.shape_cast %146 : vector<1x1x96xf32> to vector<1x96xf32>
    %148 = vector.broadcast %147 : vector<1x96xf32> to vector<2x96xf32>
    %149 = arith.addf %145, %148 : vector<2x96xf32>
    %150 = vector.extract_strided_slice %142 {offsets = [0, 0], sizes = [2, 32], strides = [1, 1]} : vector<2x96xf32> to vector<2x32xf32>
    %151 = vector.extract_strided_slice %149 {offsets = [0, 0], sizes = [2, 32], strides = [1, 1]} : vector<2x96xf32> to vector<2x32xf32>
    %152 = arith.addf %150, %151 : vector<2x32xf32>
    %153 = arith.negf %152 : vector<2x32xf32>
    %154 = math.exp %153 : vector<2x32xf32>
    %cst_85 = arith.constant 1.000000e+00 : f32
    %155 = vector.broadcast %cst_85 : f32 to vector<2x32xf32>
    %156 = arith.addf %155, %154 : vector<2x32xf32>
    %157 = arith.divf %155, %156 : vector<2x32xf32>
    %158 = vector.extract_strided_slice %142 {offsets = [0, 32], sizes = [2, 32], strides = [1, 1]} : vector<2x96xf32> to vector<2x32xf32>
    %159 = vector.extract_strided_slice %149 {offsets = [0, 32], sizes = [2, 32], strides = [1, 1]} : vector<2x96xf32> to vector<2x32xf32>
    %160 = arith.addf %158, %159 : vector<2x32xf32>
    %161 = arith.negf %160 : vector<2x32xf32>
    %162 = math.exp %161 : vector<2x32xf32>
    %cst_86 = arith.constant 1.000000e+00 : f32
    %163 = vector.broadcast %cst_86 : f32 to vector<2x32xf32>
    %164 = arith.addf %163, %162 : vector<2x32xf32>
    %165 = arith.divf %163, %164 : vector<2x32xf32>
    %166 = vector.extract_strided_slice %142 {offsets = [0, 64], sizes = [2, 32], strides = [1, 1]} : vector<2x96xf32> to vector<2x32xf32>
    %167 = vector.extract_strided_slice %149 {offsets = [0, 64], sizes = [2, 32], strides = [1, 1]} : vector<2x96xf32> to vector<2x32xf32>
    %168 = arith.mulf %157, %167 : vector<2x32xf32>
    %169 = arith.addf %166, %168 : vector<2x32xf32>
    %170 = math.tanh %169 : vector<2x32xf32>
    %cst_87 = arith.constant 1.000000e+00 : f32
    %171 = vector.broadcast %cst_87 : f32 to vector<2x32xf32>
    %172 = arith.subf %171, %165 : vector<2x32xf32>
    %173 = arith.mulf %172, %170 : vector<2x32xf32>
    %174 = arith.mulf %165, %85 : vector<2x32xf32>
    %175 = arith.addf %173, %174 : vector<2x32xf32>
    %c1_88 = arith.constant 1 : index
    %c0_89 = arith.constant 0 : index
    %c0_90 = arith.constant 0 : index
    %176 = vector.load %arg9[%c1_88, %c0_89, %c0_90] : memref<8x2x32xf32, #tpu.memory_space<vmem>>, vector<1x2x32xf32>
    %177 = vector.shape_cast %176 : vector<1x2x32xf32> to vector<2x32xf32>
    %178 = vector.shape_cast %133 : vector<2x32xf32> to vector<1x2x32xf32>
    tpu.vector_store %arg9[%c1_88, %c0_89, %c0_90], %178 {strides = array<i32>} : memref<8x2x32xf32, #tpu.memory_space<vmem>>, vector<1x2x32xf32>,
    %c6 = arith.constant 6 : index
    %c0_91 = arith.constant 0 : index
    %c0_92 = arith.constant 0 : index
    %179 = vector.load %arg10[%c6, %c0_91, %c0_92] : memref<8x2x32xf32, #tpu.memory_space<vmem>>, vector<1x2x32xf32>
    %180 = vector.shape_cast %179 : vector<1x2x32xf32> to vector<2x32xf32>
    %181 = vector.shape_cast %175 : vector<2x32xf32> to vector<1x2x32xf32>
    tpu.vector_store %arg10[%c6, %c0_91, %c0_92], %181 {strides = array<i32>} : memref<8x2x32xf32, #tpu.memory_space<vmem>>, vector<1x2x32xf32>,
    %c0_93 = arith.constant 0 : index
    %c2 = arith.constant 2 : index
    %c0_94 = arith.constant 0 : index
    %c0_95 = arith.constant 0 : index
    %182 = vector.load %arg0[%c0_93, %c2, %c0_94, %c0_95] : memref<2x8x2x16xf32, #tpu.memory_space<vmem>>, vector<1x1x2x16xf32>
    %183 = vector.shape_cast %182 : vector<1x1x2x16xf32> to vector<2x16xf32>
    %c0_96 = arith.constant 0 : index
    %c0_97 = arith.constant 0 : index
    %c0_98 = arith.constant 0 : index
    %184 = vector.load %arg1[%c0_96, %c0_97, %c0_98] : memref<2x16x96xf32, #tpu.memory_space<vmem>>, vector<1x16x96xf32>
    %185 = vector.shape_cast %184 : vector<1x16x96xf32> to vector<16x96xf32>
    %cst_99 = arith.constant dense<0.000000e+00> : vector<2x96xf32>
    %186 = tpu.matmul %183, %185, %cst_99 {dimension_numbers = #tpu.dot_dimension_numbers<[1], [0], [0], [1], [0, 0, 1, 1], [], []>} : vector<2x16xf32>, vector<16x96xf32>, vector<2x96xf32> -> vector<2x96xf32>
    %c0_100 = arith.constant 0 : index
    %c0_101 = arith.constant 0 : index
    %c0_102 = arith.constant 0 : index
    %187 = vector.load %arg3[%c0_100, %c0_101, %c0_102] : memref<2x1x96xf32, #tpu.memory_space<vmem>>, vector<1x1x96xf32>
    %188 = vector.shape_cast %187 : vector<1x1x96xf32> to vector<1x96xf32>
    %189 = vector.broadcast %188 : vector<1x96xf32> to vector<2x96xf32>
    %190 = arith.addf %186, %189 : vector<2x96xf32>
    %c0_103 = arith.constant 0 : index
    %c0_104 = arith.constant 0 : index
    %c0_105 = arith.constant 0 : index
    %191 = vector.load %arg2[%c0_103, %c0_104, %c0_105] : memref<2x32x96xf32, #tpu.memory_space<vmem>>, vector<1x32x96xf32>
    %192 = vector.shape_cast %191 : vector<1x32x96xf32> to vector<32x96xf32>
    %cst_106 = arith.constant dense<0.000000e+00> : vector<2x96xf32>
    %193 = tpu.matmul %133, %192, %cst_106 {dimension_numbers = #tpu.dot_dimension_numbers<[1], [0], [0], [1], [0, 0, 1, 1], [], []>} : vector<2x32xf32>, vector<32x96xf32>, vector<2x96xf32> -> vector<2x96xf32>
    %c0_107 = arith.constant 0 : index
    %c0_108 = arith.constant 0 : index
    %c0_109 = arith.constant 0 : index
    %194 = vector.load %arg4[%c0_107, %c0_108, %c0_109] : memref<2x1x96xf32, #tpu.memory_space<vmem>>, vector<1x1x96xf32>
    %195 = vector.shape_cast %194 : vector<1x1x96xf32> to vector<1x96xf32>
    %196 = vector.broadcast %195 : vector<1x96xf32> to vector<2x96xf32>
    %197 = arith.addf %193, %196 : vector<2x96xf32>
    %198 = vector.extract_strided_slice %190 {offsets = [0, 0], sizes = [2, 32], strides = [1, 1]} : vector<2x96xf32> to vector<2x32xf32>
    %199 = vector.extract_strided_slice %197 {offsets = [0, 0], sizes = [2, 32], strides = [1, 1]} : vector<2x96xf32> to vector<2x32xf32>
    %200 = arith.addf %198, %199 : vector<2x32xf32>
    %201 = arith.negf %200 : vector<2x32xf32>
    %202 = math.exp %201 : vector<2x32xf32>
    %cst_110 = arith.constant 1.000000e+00 : f32
    %203 = vector.broadcast %cst_110 : f32 to vector<2x32xf32>
    %204 = arith.addf %203, %202 : vector<2x32xf32>
    %205 = arith.divf %203, %204 : vector<2x32xf32>
    %206 = vector.extract_strided_slice %190 {offsets = [0, 32], sizes = [2, 32], strides = [1, 1]} : vector<2x96xf32> to vector<2x32xf32>
    %207 = vector.extract_strided_slice %197 {offsets = [0, 32], sizes = [2, 32], strides = [1, 1]} : vector<2x96xf32> to vector<2x32xf32>
    %208 = arith.addf %206, %207 : vector<2x32xf32>
    %209 = arith.negf %208 : vector<2x32xf32>
    %210 = math.exp %209 : vector<2x32xf32>
    %cst_111 = arith.constant 1.000000e+00 : f32
    %211 = vector.broadcast %cst_111 : f32 to vector<2x32xf32>
    %212 = arith.addf %211, %210 : vector<2x32xf32>
    %213 = arith.divf %211, %212 : vector<2x32xf32>
    %214 = vector.extract_strided_slice %190 {offsets = [0, 64], sizes = [2, 32], strides = [1, 1]} : vector<2x96xf32> to vector<2x32xf32>
    %215 = vector.extract_strided_slice %197 {offsets = [0, 64], sizes = [2, 32], strides = [1, 1]} : vector<2x96xf32> to vector<2x32xf32>
    %216 = arith.mulf %205, %215 : vector<2x32xf32>
    %217 = arith.addf %214, %216 : vector<2x32xf32>
    %218 = math.tanh %217 : vector<2x32xf32>
    %cst_112 = arith.constant 1.000000e+00 : f32
    %219 = vector.broadcast %cst_112 : f32 to vector<2x32xf32>
    %220 = arith.subf %219, %213 : vector<2x32xf32>
    %221 = arith.mulf %220, %218 : vector<2x32xf32>
    %222 = arith.mulf %213, %133 : vector<2x32xf32>
    %223 = arith.addf %221, %222 : vector<2x32xf32>
    %c1_113 = arith.constant 1 : index
    %c2_114 = arith.constant 2 : index
    %c0_115 = arith.constant 0 : index
    %c0_116 = arith.constant 0 : index
    %224 = vector.load %arg0[%c1_113, %c2_114, %c0_115, %c0_116] : memref<2x8x2x16xf32, #tpu.memory_space<vmem>>, vector<1x1x2x16xf32>
    %225 = vector.shape_cast %224 : vector<1x1x2x16xf32> to vector<2x16xf32>
    %c1_117 = arith.constant 1 : index
    %c0_118 = arith.constant 0 : index
    %c0_119 = arith.constant 0 : index
    %226 = vector.load %arg1[%c1_117, %c0_118, %c0_119] : memref<2x16x96xf32, #tpu.memory_space<vmem>>, vector<1x16x96xf32>
    %227 = vector.shape_cast %226 : vector<1x16x96xf32> to vector<16x96xf32>
    %cst_120 = arith.constant dense<0.000000e+00> : vector<2x96xf32>
    %228 = tpu.matmul %225, %227, %cst_120 {dimension_numbers = #tpu.dot_dimension_numbers<[1], [0], [0], [1], [0, 0, 1, 1], [], []>} : vector<2x16xf32>, vector<16x96xf32>, vector<2x96xf32> -> vector<2x96xf32>
    %c1_121 = arith.constant 1 : index
    %c0_122 = arith.constant 0 : index
    %c0_123 = arith.constant 0 : index
    %229 = vector.load %arg3[%c1_121, %c0_122, %c0_123] : memref<2x1x96xf32, #tpu.memory_space<vmem>>, vector<1x1x96xf32>
    %230 = vector.shape_cast %229 : vector<1x1x96xf32> to vector<1x96xf32>
    %231 = vector.broadcast %230 : vector<1x96xf32> to vector<2x96xf32>
    %232 = arith.addf %228, %231 : vector<2x96xf32>
    %c1_124 = arith.constant 1 : index
    %c0_125 = arith.constant 0 : index
    %c0_126 = arith.constant 0 : index
    %233 = vector.load %arg2[%c1_124, %c0_125, %c0_126] : memref<2x32x96xf32, #tpu.memory_space<vmem>>, vector<1x32x96xf32>
    %234 = vector.shape_cast %233 : vector<1x32x96xf32> to vector<32x96xf32>
    %cst_127 = arith.constant dense<0.000000e+00> : vector<2x96xf32>
    %235 = tpu.matmul %175, %234, %cst_127 {dimension_numbers = #tpu.dot_dimension_numbers<[1], [0], [0], [1], [0, 0, 1, 1], [], []>} : vector<2x32xf32>, vector<32x96xf32>, vector<2x96xf32> -> vector<2x96xf32>
    %c1_128 = arith.constant 1 : index
    %c0_129 = arith.constant 0 : index
    %c0_130 = arith.constant 0 : index
    %236 = vector.load %arg4[%c1_128, %c0_129, %c0_130] : memref<2x1x96xf32, #tpu.memory_space<vmem>>, vector<1x1x96xf32>
    %237 = vector.shape_cast %236 : vector<1x1x96xf32> to vector<1x96xf32>
    %238 = vector.broadcast %237 : vector<1x96xf32> to vector<2x96xf32>
    %239 = arith.addf %235, %238 : vector<2x96xf32>
    %240 = vector.extract_strided_slice %232 {offsets = [0, 0], sizes = [2, 32], strides = [1, 1]} : vector<2x96xf32> to vector<2x32xf32>
    %241 = vector.extract_strided_slice %239 {offsets = [0, 0], sizes = [2, 32], strides = [1, 1]} : vector<2x96xf32> to vector<2x32xf32>
    %242 = arith.addf %240, %241 : vector<2x32xf32>
    %243 = arith.negf %242 : vector<2x32xf32>
    %244 = math.exp %243 : vector<2x32xf32>
    %cst_131 = arith.constant 1.000000e+00 : f32
    %245 = vector.broadcast %cst_131 : f32 to vector<2x32xf32>
    %246 = arith.addf %245, %244 : vector<2x32xf32>
    %247 = arith.divf %245, %246 : vector<2x32xf32>
    %248 = vector.extract_strided_slice %232 {offsets = [0, 32], sizes = [2, 32], strides = [1, 1]} : vector<2x96xf32> to vector<2x32xf32>
    %249 = vector.extract_strided_slice %239 {offsets = [0, 32], sizes = [2, 32], strides = [1, 1]} : vector<2x96xf32> to vector<2x32xf32>
    %250 = arith.addf %248, %249 : vector<2x32xf32>
    %251 = arith.negf %250 : vector<2x32xf32>
    %252 = math.exp %251 : vector<2x32xf32>
    %cst_132 = arith.constant 1.000000e+00 : f32
    %253 = vector.broadcast %cst_132 : f32 to vector<2x32xf32>
    %254 = arith.addf %253, %252 : vector<2x32xf32>
    %255 = arith.divf %253, %254 : vector<2x32xf32>
    %256 = vector.extract_strided_slice %232 {offsets = [0, 64], sizes = [2, 32], strides = [1, 1]} : vector<2x96xf32> to vector<2x32xf32>
    %257 = vector.extract_strided_slice %239 {offsets = [0, 64], sizes = [2, 32], strides = [1, 1]} : vector<2x96xf32> to vector<2x32xf32>
    %258 = arith.mulf %247, %257 : vector<2x32xf32>
    %259 = arith.addf %256, %258 : vector<2x32xf32>
    %260 = math.tanh %259 : vector<2x32xf32>
    %cst_133 = arith.constant 1.000000e+00 : f32
    %261 = vector.broadcast %cst_133 : f32 to vector<2x32xf32>
    %262 = arith.subf %261, %255 : vector<2x32xf32>
    %263 = arith.mulf %262, %260 : vector<2x32xf32>
    %264 = arith.mulf %255, %175 : vector<2x32xf32>
    %265 = arith.addf %263, %264 : vector<2x32xf32>
    %c2_134 = arith.constant 2 : index
    %c0_135 = arith.constant 0 : index
    %c0_136 = arith.constant 0 : index
    %266 = vector.load %arg9[%c2_134, %c0_135, %c0_136] : memref<8x2x32xf32, #tpu.memory_space<vmem>>, vector<1x2x32xf32>
    %267 = vector.shape_cast %266 : vector<1x2x32xf32> to vector<2x32xf32>
    %268 = vector.shape_cast %223 : vector<2x32xf32> to vector<1x2x32xf32>
    tpu.vector_store %arg9[%c2_134, %c0_135, %c0_136], %268 {strides = array<i32>} : memref<8x2x32xf32, #tpu.memory_space<vmem>>, vector<1x2x32xf32>,
    %c5 = arith.constant 5 : index
    %c0_137 = arith.constant 0 : index
    %c0_138 = arith.constant 0 : index
    %269 = vector.load %arg10[%c5, %c0_137, %c0_138] : memref<8x2x32xf32, #tpu.memory_space<vmem>>, vector<1x2x32xf32>
    %270 = vector.shape_cast %269 : vector<1x2x32xf32> to vector<2x32xf32>
    %271 = vector.shape_cast %265 : vector<2x32xf32> to vector<1x2x32xf32>
    tpu.vector_store %arg10[%c5, %c0_137, %c0_138], %271 {strides = array<i32>} : memref<8x2x32xf32, #tpu.memory_space<vmem>>, vector<1x2x32xf32>,
    %c0_139 = arith.constant 0 : index
    %c3 = arith.constant 3 : index
    %c0_140 = arith.constant 0 : index
    %c0_141 = arith.constant 0 : index
    %272 = vector.load %arg0[%c0_139, %c3, %c0_140, %c0_141] : memref<2x8x2x16xf32, #tpu.memory_space<vmem>>, vector<1x1x2x16xf32>
    %273 = vector.shape_cast %272 : vector<1x1x2x16xf32> to vector<2x16xf32>
    %c0_142 = arith.constant 0 : index
    %c0_143 = arith.constant 0 : index
    %c0_144 = arith.constant 0 : index
    %274 = vector.load %arg1[%c0_142, %c0_143, %c0_144] : memref<2x16x96xf32, #tpu.memory_space<vmem>>, vector<1x16x96xf32>
    %275 = vector.shape_cast %274 : vector<1x16x96xf32> to vector<16x96xf32>
    %cst_145 = arith.constant dense<0.000000e+00> : vector<2x96xf32>
    %276 = tpu.matmul %273, %275, %cst_145 {dimension_numbers = #tpu.dot_dimension_numbers<[1], [0], [0], [1], [0, 0, 1, 1], [], []>} : vector<2x16xf32>, vector<16x96xf32>, vector<2x96xf32> -> vector<2x96xf32>
    %c0_146 = arith.constant 0 : index
    %c0_147 = arith.constant 0 : index
    %c0_148 = arith.constant 0 : index
    %277 = vector.load %arg3[%c0_146, %c0_147, %c0_148] : memref<2x1x96xf32, #tpu.memory_space<vmem>>, vector<1x1x96xf32>
    %278 = vector.shape_cast %277 : vector<1x1x96xf32> to vector<1x96xf32>
    %279 = vector.broadcast %278 : vector<1x96xf32> to vector<2x96xf32>
    %280 = arith.addf %276, %279 : vector<2x96xf32>
    %c0_149 = arith.constant 0 : index
    %c0_150 = arith.constant 0 : index
    %c0_151 = arith.constant 0 : index
    %281 = vector.load %arg2[%c0_149, %c0_150, %c0_151] : memref<2x32x96xf32, #tpu.memory_space<vmem>>, vector<1x32x96xf32>
    %282 = vector.shape_cast %281 : vector<1x32x96xf32> to vector<32x96xf32>
    %cst_152 = arith.constant dense<0.000000e+00> : vector<2x96xf32>
    %283 = tpu.matmul %223, %282, %cst_152 {dimension_numbers = #tpu.dot_dimension_numbers<[1], [0], [0], [1], [0, 0, 1, 1], [], []>} : vector<2x32xf32>, vector<32x96xf32>, vector<2x96xf32> -> vector<2x96xf32>
    %c0_153 = arith.constant 0 : index
    %c0_154 = arith.constant 0 : index
    %c0_155 = arith.constant 0 : index
    %284 = vector.load %arg4[%c0_153, %c0_154, %c0_155] : memref<2x1x96xf32, #tpu.memory_space<vmem>>, vector<1x1x96xf32>
    %285 = vector.shape_cast %284 : vector<1x1x96xf32> to vector<1x96xf32>
    %286 = vector.broadcast %285 : vector<1x96xf32> to vector<2x96xf32>
    %287 = arith.addf %283, %286 : vector<2x96xf32>
    %288 = vector.extract_strided_slice %280 {offsets = [0, 0], sizes = [2, 32], strides = [1, 1]} : vector<2x96xf32> to vector<2x32xf32>
    %289 = vector.extract_strided_slice %287 {offsets = [0, 0], sizes = [2, 32], strides = [1, 1]} : vector<2x96xf32> to vector<2x32xf32>
    %290 = arith.addf %288, %289 : vector<2x32xf32>
    %291 = arith.negf %290 : vector<2x32xf32>
    %292 = math.exp %291 : vector<2x32xf32>
    %cst_156 = arith.constant 1.000000e+00 : f32
    %293 = vector.broadcast %cst_156 : f32 to vector<2x32xf32>
    %294 = arith.addf %293, %292 : vector<2x32xf32>
    %295 = arith.divf %293, %294 : vector<2x32xf32>
    %296 = vector.extract_strided_slice %280 {offsets = [0, 32], sizes = [2, 32], strides = [1, 1]} : vector<2x96xf32> to vector<2x32xf32>
    %297 = vector.extract_strided_slice %287 {offsets = [0, 32], sizes = [2, 32], strides = [1, 1]} : vector<2x96xf32> to vector<2x32xf32>
    %298 = arith.addf %296, %297 : vector<2x32xf32>
    %299 = arith.negf %298 : vector<2x32xf32>
    %300 = math.exp %299 : vector<2x32xf32>
    %cst_157 = arith.constant 1.000000e+00 : f32
    %301 = vector.broadcast %cst_157 : f32 to vector<2x32xf32>
    %302 = arith.addf %301, %300 : vector<2x32xf32>
    %303 = arith.divf %301, %302 : vector<2x32xf32>
    %304 = vector.extract_strided_slice %280 {offsets = [0, 64], sizes = [2, 32], strides = [1, 1]} : vector<2x96xf32> to vector<2x32xf32>
    %305 = vector.extract_strided_slice %287 {offsets = [0, 64], sizes = [2, 32], strides = [1, 1]} : vector<2x96xf32> to vector<2x32xf32>
    %306 = arith.mulf %295, %305 : vector<2x32xf32>
    %307 = arith.addf %304, %306 : vector<2x32xf32>
    %308 = math.tanh %307 : vector<2x32xf32>
    %cst_158 = arith.constant 1.000000e+00 : f32
    %309 = vector.broadcast %cst_158 : f32 to vector<2x32xf32>
    %310 = arith.subf %309, %303 : vector<2x32xf32>
    %311 = arith.mulf %310, %308 : vector<2x32xf32>
    %312 = arith.mulf %303, %223 : vector<2x32xf32>
    %313 = arith.addf %311, %312 : vector<2x32xf32>
    %c1_159 = arith.constant 1 : index
    %c3_160 = arith.constant 3 : index
    %c0_161 = arith.constant 0 : index
    %c0_162 = arith.constant 0 : index
    %314 = vector.load %arg0[%c1_159, %c3_160, %c0_161, %c0_162] : memref<2x8x2x16xf32, #tpu.memory_space<vmem>>, vector<1x1x2x16xf32>
    %315 = vector.shape_cast %314 : vector<1x1x2x16xf32> to vector<2x16xf32>
    %c1_163 = arith.constant 1 : index
    %c0_164 = arith.constant 0 : index
    %c0_165 = arith.constant 0 : index
    %316 = vector.load %arg1[%c1_163, %c0_164, %c0_165] : memref<2x16x96xf32, #tpu.memory_space<vmem>>, vector<1x16x96xf32>
    %317 = vector.shape_cast %316 : vector<1x16x96xf32> to vector<16x96xf32>
    %cst_166 = arith.constant dense<0.000000e+00> : vector<2x96xf32>
    %318 = tpu.matmul %315, %317, %cst_166 {dimension_numbers = #tpu.dot_dimension_numbers<[1], [0], [0], [1], [0, 0, 1, 1], [], []>} : vector<2x16xf32>, vector<16x96xf32>, vector<2x96xf32> -> vector<2x96xf32>
    %c1_167 = arith.constant 1 : index
    %c0_168 = arith.constant 0 : index
    %c0_169 = arith.constant 0 : index
    %319 = vector.load %arg3[%c1_167, %c0_168, %c0_169] : memref<2x1x96xf32, #tpu.memory_space<vmem>>, vector<1x1x96xf32>
    %320 = vector.shape_cast %319 : vector<1x1x96xf32> to vector<1x96xf32>
    %321 = vector.broadcast %320 : vector<1x96xf32> to vector<2x96xf32>
    %322 = arith.addf %318, %321 : vector<2x96xf32>
    %c1_170 = arith.constant 1 : index
    %c0_171 = arith.constant 0 : index
    %c0_172 = arith.constant 0 : index
    %323 = vector.load %arg2[%c1_170, %c0_171, %c0_172] : memref<2x32x96xf32, #tpu.memory_space<vmem>>, vector<1x32x96xf32>
    %324 = vector.shape_cast %323 : vector<1x32x96xf32> to vector<32x96xf32>
    %cst_173 = arith.constant dense<0.000000e+00> : vector<2x96xf32>
    %325 = tpu.matmul %265, %324, %cst_173 {dimension_numbers = #tpu.dot_dimension_numbers<[1], [0], [0], [1], [0, 0, 1, 1], [], []>} : vector<2x32xf32>, vector<32x96xf32>, vector<2x96xf32> -> vector<2x96xf32>
    %c1_174 = arith.constant 1 : index
    %c0_175 = arith.constant 0 : index
    %c0_176 = arith.constant 0 : index
    %326 = vector.load %arg4[%c1_174, %c0_175, %c0_176] : memref<2x1x96xf32, #tpu.memory_space<vmem>>, vector<1x1x96xf32>
    %327 = vector.shape_cast %326 : vector<1x1x96xf32> to vector<1x96xf32>
    %328 = vector.broadcast %327 : vector<1x96xf32> to vector<2x96xf32>
    %329 = arith.addf %325, %328 : vector<2x96xf32>
    %330 = vector.extract_strided_slice %322 {offsets = [0, 0], sizes = [2, 32], strides = [1, 1]} : vector<2x96xf32> to vector<2x32xf32>
    %331 = vector.extract_strided_slice %329 {offsets = [0, 0], sizes = [2, 32], strides = [1, 1]} : vector<2x96xf32> to vector<2x32xf32>
    %332 = arith.addf %330, %331 : vector<2x32xf32>
    %333 = arith.negf %332 : vector<2x32xf32>
    %334 = math.exp %333 : vector<2x32xf32>
    %cst_177 = arith.constant 1.000000e+00 : f32
    %335 = vector.broadcast %cst_177 : f32 to vector<2x32xf32>
    %336 = arith.addf %335, %334 : vector<2x32xf32>
    %337 = arith.divf %335, %336 : vector<2x32xf32>
    %338 = vector.extract_strided_slice %322 {offsets = [0, 32], sizes = [2, 32], strides = [1, 1]} : vector<2x96xf32> to vector<2x32xf32>
    %339 = vector.extract_strided_slice %329 {offsets = [0, 32], sizes = [2, 32], strides = [1, 1]} : vector<2x96xf32> to vector<2x32xf32>
    %340 = arith.addf %338, %339 : vector<2x32xf32>
    %341 = arith.negf %340 : vector<2x32xf32>
    %342 = math.exp %341 : vector<2x32xf32>
    %cst_178 = arith.constant 1.000000e+00 : f32
    %343 = vector.broadcast %cst_178 : f32 to vector<2x32xf32>
    %344 = arith.addf %343, %342 : vector<2x32xf32>
    %345 = arith.divf %343, %344 : vector<2x32xf32>
    %346 = vector.extract_strided_slice %322 {offsets = [0, 64], sizes = [2, 32], strides = [1, 1]} : vector<2x96xf32> to vector<2x32xf32>
    %347 = vector.extract_strided_slice %329 {offsets = [0, 64], sizes = [2, 32], strides = [1, 1]} : vector<2x96xf32> to vector<2x32xf32>
    %348 = arith.mulf %337, %347 : vector<2x32xf32>
    %349 = arith.addf %346, %348 : vector<2x32xf32>
    %350 = math.tanh %349 : vector<2x32xf32>
    %cst_179 = arith.constant 1.000000e+00 : f32
    %351 = vector.broadcast %cst_179 : f32 to vector<2x32xf32>
    %352 = arith.subf %351, %345 : vector<2x32xf32>
    %353 = arith.mulf %352, %350 : vector<2x32xf32>
    %354 = arith.mulf %345, %265 : vector<2x32xf32>
    %355 = arith.addf %353, %354 : vector<2x32xf32>
    %c3_180 = arith.constant 3 : index
    %c0_181 = arith.constant 0 : index
    %c0_182 = arith.constant 0 : index
    %356 = vector.load %arg9[%c3_180, %c0_181, %c0_182] : memref<8x2x32xf32, #tpu.memory_space<vmem>>, vector<1x2x32xf32>
    %357 = vector.shape_cast %356 : vector<1x2x32xf32> to vector<2x32xf32>
    %358 = vector.shape_cast %313 : vector<2x32xf32> to vector<1x2x32xf32>
    tpu.vector_store %arg9[%c3_180, %c0_181, %c0_182], %358 {strides = array<i32>} : memref<8x2x32xf32, #tpu.memory_space<vmem>>, vector<1x2x32xf32>,
    %c4 = arith.constant 4 : index
    %c0_183 = arith.constant 0 : index
    %c0_184 = arith.constant 0 : index
    %359 = vector.load %arg10[%c4, %c0_183, %c0_184] : memref<8x2x32xf32, #tpu.memory_space<vmem>>, vector<1x2x32xf32>
    %360 = vector.shape_cast %359 : vector<1x2x32xf32> to vector<2x32xf32>
    %361 = vector.shape_cast %355 : vector<2x32xf32> to vector<1x2x32xf32>
    tpu.vector_store %arg10[%c4, %c0_183, %c0_184], %361 {strides = array<i32>} : memref<8x2x32xf32, #tpu.memory_space<vmem>>, vector<1x2x32xf32>,
    %c0_185 = arith.constant 0 : index
    %c4_186 = arith.constant 4 : index
    %c0_187 = arith.constant 0 : index
    %c0_188 = arith.constant 0 : index
    %362 = vector.load %arg0[%c0_185, %c4_186, %c0_187, %c0_188] : memref<2x8x2x16xf32, #tpu.memory_space<vmem>>, vector<1x1x2x16xf32>
    %363 = vector.shape_cast %362 : vector<1x1x2x16xf32> to vector<2x16xf32>
    %c0_189 = arith.constant 0 : index
    %c0_190 = arith.constant 0 : index
    %c0_191 = arith.constant 0 : index
    %364 = vector.load %arg1[%c0_189, %c0_190, %c0_191] : memref<2x16x96xf32, #tpu.memory_space<vmem>>, vector<1x16x96xf32>
    %365 = vector.shape_cast %364 : vector<1x16x96xf32> to vector<16x96xf32>
    %cst_192 = arith.constant dense<0.000000e+00> : vector<2x96xf32>
    %366 = tpu.matmul %363, %365, %cst_192 {dimension_numbers = #tpu.dot_dimension_numbers<[1], [0], [0], [1], [0, 0, 1, 1], [], []>} : vector<2x16xf32>, vector<16x96xf32>, vector<2x96xf32> -> vector<2x96xf32>
    %c0_193 = arith.constant 0 : index
    %c0_194 = arith.constant 0 : index
    %c0_195 = arith.constant 0 : index
    %367 = vector.load %arg3[%c0_193, %c0_194, %c0_195] : memref<2x1x96xf32, #tpu.memory_space<vmem>>, vector<1x1x96xf32>
    %368 = vector.shape_cast %367 : vector<1x1x96xf32> to vector<1x96xf32>
    %369 = vector.broadcast %368 : vector<1x96xf32> to vector<2x96xf32>
    %370 = arith.addf %366, %369 : vector<2x96xf32>
    %c0_196 = arith.constant 0 : index
    %c0_197 = arith.constant 0 : index
    %c0_198 = arith.constant 0 : index
    %371 = vector.load %arg2[%c0_196, %c0_197, %c0_198] : memref<2x32x96xf32, #tpu.memory_space<vmem>>, vector<1x32x96xf32>
    %372 = vector.shape_cast %371 : vector<1x32x96xf32> to vector<32x96xf32>
    %cst_199 = arith.constant dense<0.000000e+00> : vector<2x96xf32>
    %373 = tpu.matmul %313, %372, %cst_199 {dimension_numbers = #tpu.dot_dimension_numbers<[1], [0], [0], [1], [0, 0, 1, 1], [], []>} : vector<2x32xf32>, vector<32x96xf32>, vector<2x96xf32> -> vector<2x96xf32>
    %c0_200 = arith.constant 0 : index
    %c0_201 = arith.constant 0 : index
    %c0_202 = arith.constant 0 : index
    %374 = vector.load %arg4[%c0_200, %c0_201, %c0_202] : memref<2x1x96xf32, #tpu.memory_space<vmem>>, vector<1x1x96xf32>
    %375 = vector.shape_cast %374 : vector<1x1x96xf32> to vector<1x96xf32>
    %376 = vector.broadcast %375 : vector<1x96xf32> to vector<2x96xf32>
    %377 = arith.addf %373, %376 : vector<2x96xf32>
    %378 = vector.extract_strided_slice %370 {offsets = [0, 0], sizes = [2, 32], strides = [1, 1]} : vector<2x96xf32> to vector<2x32xf32>
    %379 = vector.extract_strided_slice %377 {offsets = [0, 0], sizes = [2, 32], strides = [1, 1]} : vector<2x96xf32> to vector<2x32xf32>
    %380 = arith.addf %378, %379 : vector<2x32xf32>
    %381 = arith.negf %380 : vector<2x32xf32>
    %382 = math.exp %381 : vector<2x32xf32>
    %cst_203 = arith.constant 1.000000e+00 : f32
    %383 = vector.broadcast %cst_203 : f32 to vector<2x32xf32>
    %384 = arith.addf %383, %382 : vector<2x32xf32>
    %385 = arith.divf %383, %384 : vector<2x32xf32>
    %386 = vector.extract_strided_slice %370 {offsets = [0, 32], sizes = [2, 32], strides = [1, 1]} : vector<2x96xf32> to vector<2x32xf32>
    %387 = vector.extract_strided_slice %377 {offsets = [0, 32], sizes = [2, 32], strides = [1, 1]} : vector<2x96xf32> to vector<2x32xf32>
    %388 = arith.addf %386, %387 : vector<2x32xf32>
    %389 = arith.negf %388 : vector<2x32xf32>
    %390 = math.exp %389 : vector<2x32xf32>
    %cst_204 = arith.constant 1.000000e+00 : f32
    %391 = vector.broadcast %cst_204 : f32 to vector<2x32xf32>
    %392 = arith.addf %391, %390 : vector<2x32xf32>
    %393 = arith.divf %391, %392 : vector<2x32xf32>
    %394 = vector.extract_strided_slice %370 {offsets = [0, 64], sizes = [2, 32], strides = [1, 1]} : vector<2x96xf32> to vector<2x32xf32>
    %395 = vector.extract_strided_slice %377 {offsets = [0, 64], sizes = [2, 32], strides = [1, 1]} : vector<2x96xf32> to vector<2x32xf32>
    %396 = arith.mulf %385, %395 : vector<2x32xf32>
    %397 = arith.addf %394, %396 : vector<2x32xf32>
    %398 = math.tanh %397 : vector<2x32xf32>
    %cst_205 = arith.constant 1.000000e+00 : f32
    %399 = vector.broadcast %cst_205 : f32 to vector<2x32xf32>
    %400 = arith.subf %399, %393 : vector<2x32xf32>
    %401 = arith.mulf %400, %398 : vector<2x32xf32>
    %402 = arith.mulf %393, %313 : vector<2x32xf32>
    %403 = arith.addf %401, %402 : vector<2x32xf32>
    %c1_206 = arith.constant 1 : index
    %c4_207 = arith.constant 4 : index
    %c0_208 = arith.constant 0 : index
    %c0_209 = arith.constant 0 : index
    %404 = vector.load %arg0[%c1_206, %c4_207, %c0_208, %c0_209] : memref<2x8x2x16xf32, #tpu.memory_space<vmem>>, vector<1x1x2x16xf32>
    %405 = vector.shape_cast %404 : vector<1x1x2x16xf32> to vector<2x16xf32>
    %c1_210 = arith.constant 1 : index
    %c0_211 = arith.constant 0 : index
    %c0_212 = arith.constant 0 : index
    %406 = vector.load %arg1[%c1_210, %c0_211, %c0_212] : memref<2x16x96xf32, #tpu.memory_space<vmem>>, vector<1x16x96xf32>
    %407 = vector.shape_cast %406 : vector<1x16x96xf32> to vector<16x96xf32>
    %cst_213 = arith.constant dense<0.000000e+00> : vector<2x96xf32>
    %408 = tpu.matmul %405, %407, %cst_213 {dimension_numbers = #tpu.dot_dimension_numbers<[1], [0], [0], [1], [0, 0, 1, 1], [], []>} : vector<2x16xf32>, vector<16x96xf32>, vector<2x96xf32> -> vector<2x96xf32>
    %c1_214 = arith.constant 1 : index
    %c0_215 = arith.constant 0 : index
    %c0_216 = arith.constant 0 : index
    %409 = vector.load %arg3[%c1_214, %c0_215, %c0_216] : memref<2x1x96xf32, #tpu.memory_space<vmem>>, vector<1x1x96xf32>
    %410 = vector.shape_cast %409 : vector<1x1x96xf32> to vector<1x96xf32>
    %411 = vector.broadcast %410 : vector<1x96xf32> to vector<2x96xf32>
    %412 = arith.addf %408, %411 : vector<2x96xf32>
    %c1_217 = arith.constant 1 : index
    %c0_218 = arith.constant 0 : index
    %c0_219 = arith.constant 0 : index
    %413 = vector.load %arg2[%c1_217, %c0_218, %c0_219] : memref<2x32x96xf32, #tpu.memory_space<vmem>>, vector<1x32x96xf32>
    %414 = vector.shape_cast %413 : vector<1x32x96xf32> to vector<32x96xf32>
    %cst_220 = arith.constant dense<0.000000e+00> : vector<2x96xf32>
    %415 = tpu.matmul %355, %414, %cst_220 {dimension_numbers = #tpu.dot_dimension_numbers<[1], [0], [0], [1], [0, 0, 1, 1], [], []>} : vector<2x32xf32>, vector<32x96xf32>, vector<2x96xf32> -> vector<2x96xf32>
    %c1_221 = arith.constant 1 : index
    %c0_222 = arith.constant 0 : index
    %c0_223 = arith.constant 0 : index
    %416 = vector.load %arg4[%c1_221, %c0_222, %c0_223] : memref<2x1x96xf32, #tpu.memory_space<vmem>>, vector<1x1x96xf32>
    %417 = vector.shape_cast %416 : vector<1x1x96xf32> to vector<1x96xf32>
    %418 = vector.broadcast %417 : vector<1x96xf32> to vector<2x96xf32>
    %419 = arith.addf %415, %418 : vector<2x96xf32>
    %420 = vector.extract_strided_slice %412 {offsets = [0, 0], sizes = [2, 32], strides = [1, 1]} : vector<2x96xf32> to vector<2x32xf32>
    %421 = vector.extract_strided_slice %419 {offsets = [0, 0], sizes = [2, 32], strides = [1, 1]} : vector<2x96xf32> to vector<2x32xf32>
    %422 = arith.addf %420, %421 : vector<2x32xf32>
    %423 = arith.negf %422 : vector<2x32xf32>
    %424 = math.exp %423 : vector<2x32xf32>
    %cst_224 = arith.constant 1.000000e+00 : f32
    %425 = vector.broadcast %cst_224 : f32 to vector<2x32xf32>
    %426 = arith.addf %425, %424 : vector<2x32xf32>
    %427 = arith.divf %425, %426 : vector<2x32xf32>
    %428 = vector.extract_strided_slice %412 {offsets = [0, 32], sizes = [2, 32], strides = [1, 1]} : vector<2x96xf32> to vector<2x32xf32>
    %429 = vector.extract_strided_slice %419 {offsets = [0, 32], sizes = [2, 32], strides = [1, 1]} : vector<2x96xf32> to vector<2x32xf32>
    %430 = arith.addf %428, %429 : vector<2x32xf32>
    %431 = arith.negf %430 : vector<2x32xf32>
    %432 = math.exp %431 : vector<2x32xf32>
    %cst_225 = arith.constant 1.000000e+00 : f32
    %433 = vector.broadcast %cst_225 : f32 to vector<2x32xf32>
    %434 = arith.addf %433, %432 : vector<2x32xf32>
    %435 = arith.divf %433, %434 : vector<2x32xf32>
    %436 = vector.extract_strided_slice %412 {offsets = [0, 64], sizes = [2, 32], strides = [1, 1]} : vector<2x96xf32> to vector<2x32xf32>
    %437 = vector.extract_strided_slice %419 {offsets = [0, 64], sizes = [2, 32], strides = [1, 1]} : vector<2x96xf32> to vector<2x32xf32>
    %438 = arith.mulf %427, %437 : vector<2x32xf32>
    %439 = arith.addf %436, %438 : vector<2x32xf32>
    %440 = math.tanh %439 : vector<2x32xf32>
    %cst_226 = arith.constant 1.000000e+00 : f32
    %441 = vector.broadcast %cst_226 : f32 to vector<2x32xf32>
    %442 = arith.subf %441, %435 : vector<2x32xf32>
    %443 = arith.mulf %442, %440 : vector<2x32xf32>
    %444 = arith.mulf %435, %355 : vector<2x32xf32>
    %445 = arith.addf %443, %444 : vector<2x32xf32>
    %c4_227 = arith.constant 4 : index
    %c0_228 = arith.constant 0 : index
    %c0_229 = arith.constant 0 : index
    %446 = vector.load %arg9[%c4_227, %c0_228, %c0_229] : memref<8x2x32xf32, #tpu.memory_space<vmem>>, vector<1x2x32xf32>
    %447 = vector.shape_cast %446 : vector<1x2x32xf32> to vector<2x32xf32>
    %448 = vector.shape_cast %403 : vector<2x32xf32> to vector<1x2x32xf32>
    tpu.vector_store %arg9[%c4_227, %c0_228, %c0_229], %448 {strides = array<i32>} : memref<8x2x32xf32, #tpu.memory_space<vmem>>, vector<1x2x32xf32>,
    %c3_230 = arith.constant 3 : index
    %c0_231 = arith.constant 0 : index
    %c0_232 = arith.constant 0 : index
    %449 = vector.load %arg10[%c3_230, %c0_231, %c0_232] : memref<8x2x32xf32, #tpu.memory_space<vmem>>, vector<1x2x32xf32>
    %450 = vector.shape_cast %449 : vector<1x2x32xf32> to vector<2x32xf32>
    %451 = vector.shape_cast %445 : vector<2x32xf32> to vector<1x2x32xf32>
    tpu.vector_store %arg10[%c3_230, %c0_231, %c0_232], %451 {strides = array<i32>} : memref<8x2x32xf32, #tpu.memory_space<vmem>>, vector<1x2x32xf32>,
    %c0_233 = arith.constant 0 : index
    %c5_234 = arith.constant 5 : index
    %c0_235 = arith.constant 0 : index
    %c0_236 = arith.constant 0 : index
    %452 = vector.load %arg0[%c0_233, %c5_234, %c0_235, %c0_236] : memref<2x8x2x16xf32, #tpu.memory_space<vmem>>, vector<1x1x2x16xf32>
    %453 = vector.shape_cast %452 : vector<1x1x2x16xf32> to vector<2x16xf32>
    %c0_237 = arith.constant 0 : index
    %c0_238 = arith.constant 0 : index
    %c0_239 = arith.constant 0 : index
    %454 = vector.load %arg1[%c0_237, %c0_238, %c0_239] : memref<2x16x96xf32, #tpu.memory_space<vmem>>, vector<1x16x96xf32>
    %455 = vector.shape_cast %454 : vector<1x16x96xf32> to vector<16x96xf32>
    %cst_240 = arith.constant dense<0.000000e+00> : vector<2x96xf32>
    %456 = tpu.matmul %453, %455, %cst_240 {dimension_numbers = #tpu.dot_dimension_numbers<[1], [0], [0], [1], [0, 0, 1, 1], [], []>} : vector<2x16xf32>, vector<16x96xf32>, vector<2x96xf32> -> vector<2x96xf32>
    %c0_241 = arith.constant 0 : index
    %c0_242 = arith.constant 0 : index
    %c0_243 = arith.constant 0 : index
    %457 = vector.load %arg3[%c0_241, %c0_242, %c0_243] : memref<2x1x96xf32, #tpu.memory_space<vmem>>, vector<1x1x96xf32>
    %458 = vector.shape_cast %457 : vector<1x1x96xf32> to vector<1x96xf32>
    %459 = vector.broadcast %458 : vector<1x96xf32> to vector<2x96xf32>
    %460 = arith.addf %456, %459 : vector<2x96xf32>
    %c0_244 = arith.constant 0 : index
    %c0_245 = arith.constant 0 : index
    %c0_246 = arith.constant 0 : index
    %461 = vector.load %arg2[%c0_244, %c0_245, %c0_246] : memref<2x32x96xf32, #tpu.memory_space<vmem>>, vector<1x32x96xf32>
    %462 = vector.shape_cast %461 : vector<1x32x96xf32> to vector<32x96xf32>
    %cst_247 = arith.constant dense<0.000000e+00> : vector<2x96xf32>
    %463 = tpu.matmul %403, %462, %cst_247 {dimension_numbers = #tpu.dot_dimension_numbers<[1], [0], [0], [1], [0, 0, 1, 1], [], []>} : vector<2x32xf32>, vector<32x96xf32>, vector<2x96xf32> -> vector<2x96xf32>
    %c0_248 = arith.constant 0 : index
    %c0_249 = arith.constant 0 : index
    %c0_250 = arith.constant 0 : index
    %464 = vector.load %arg4[%c0_248, %c0_249, %c0_250] : memref<2x1x96xf32, #tpu.memory_space<vmem>>, vector<1x1x96xf32>
    %465 = vector.shape_cast %464 : vector<1x1x96xf32> to vector<1x96xf32>
    %466 = vector.broadcast %465 : vector<1x96xf32> to vector<2x96xf32>
    %467 = arith.addf %463, %466 : vector<2x96xf32>
    %468 = vector.extract_strided_slice %460 {offsets = [0, 0], sizes = [2, 32], strides = [1, 1]} : vector<2x96xf32> to vector<2x32xf32>
    %469 = vector.extract_strided_slice %467 {offsets = [0, 0], sizes = [2, 32], strides = [1, 1]} : vector<2x96xf32> to vector<2x32xf32>
    %470 = arith.addf %468, %469 : vector<2x32xf32>
    %471 = arith.negf %470 : vector<2x32xf32>
    %472 = math.exp %471 : vector<2x32xf32>
    %cst_251 = arith.constant 1.000000e+00 : f32
    %473 = vector.broadcast %cst_251 : f32 to vector<2x32xf32>
    %474 = arith.addf %473, %472 : vector<2x32xf32>
    %475 = arith.divf %473, %474 : vector<2x32xf32>
    %476 = vector.extract_strided_slice %460 {offsets = [0, 32], sizes = [2, 32], strides = [1, 1]} : vector<2x96xf32> to vector<2x32xf32>
    %477 = vector.extract_strided_slice %467 {offsets = [0, 32], sizes = [2, 32], strides = [1, 1]} : vector<2x96xf32> to vector<2x32xf32>
    %478 = arith.addf %476, %477 : vector<2x32xf32>
    %479 = arith.negf %478 : vector<2x32xf32>
    %480 = math.exp %479 : vector<2x32xf32>
    %cst_252 = arith.constant 1.000000e+00 : f32
    %481 = vector.broadcast %cst_252 : f32 to vector<2x32xf32>
    %482 = arith.addf %481, %480 : vector<2x32xf32>
    %483 = arith.divf %481, %482 : vector<2x32xf32>
    %484 = vector.extract_strided_slice %460 {offsets = [0, 64], sizes = [2, 32], strides = [1, 1]} : vector<2x96xf32> to vector<2x32xf32>
    %485 = vector.extract_strided_slice %467 {offsets = [0, 64], sizes = [2, 32], strides = [1, 1]} : vector<2x96xf32> to vector<2x32xf32>
    %486 = arith.mulf %475, %485 : vector<2x32xf32>
    %487 = arith.addf %484, %486 : vector<2x32xf32>
    %488 = math.tanh %487 : vector<2x32xf32>
    %cst_253 = arith.constant 1.000000e+00 : f32
    %489 = vector.broadcast %cst_253 : f32 to vector<2x32xf32>
    %490 = arith.subf %489, %483 : vector<2x32xf32>
    %491 = arith.mulf %490, %488 : vector<2x32xf32>
    %492 = arith.mulf %483, %403 : vector<2x32xf32>
    %493 = arith.addf %491, %492 : vector<2x32xf32>
    %c1_254 = arith.constant 1 : index
    %c5_255 = arith.constant 5 : index
    %c0_256 = arith.constant 0 : index
    %c0_257 = arith.constant 0 : index
    %494 = vector.load %arg0[%c1_254, %c5_255, %c0_256, %c0_257] : memref<2x8x2x16xf32, #tpu.memory_space<vmem>>, vector<1x1x2x16xf32>
    %495 = vector.shape_cast %494 : vector<1x1x2x16xf32> to vector<2x16xf32>
    %c1_258 = arith.constant 1 : index
    %c0_259 = arith.constant 0 : index
    %c0_260 = arith.constant 0 : index
    %496 = vector.load %arg1[%c1_258, %c0_259, %c0_260] : memref<2x16x96xf32, #tpu.memory_space<vmem>>, vector<1x16x96xf32>
    %497 = vector.shape_cast %496 : vector<1x16x96xf32> to vector<16x96xf32>
    %cst_261 = arith.constant dense<0.000000e+00> : vector<2x96xf32>
    %498 = tpu.matmul %495, %497, %cst_261 {dimension_numbers = #tpu.dot_dimension_numbers<[1], [0], [0], [1], [0, 0, 1, 1], [], []>} : vector<2x16xf32>, vector<16x96xf32>, vector<2x96xf32> -> vector<2x96xf32>
    %c1_262 = arith.constant 1 : index
    %c0_263 = arith.constant 0 : index
    %c0_264 = arith.constant 0 : index
    %499 = vector.load %arg3[%c1_262, %c0_263, %c0_264] : memref<2x1x96xf32, #tpu.memory_space<vmem>>, vector<1x1x96xf32>
    %500 = vector.shape_cast %499 : vector<1x1x96xf32> to vector<1x96xf32>
    %501 = vector.broadcast %500 : vector<1x96xf32> to vector<2x96xf32>
    %502 = arith.addf %498, %501 : vector<2x96xf32>
    %c1_265 = arith.constant 1 : index
    %c0_266 = arith.constant 0 : index
    %c0_267 = arith.constant 0 : index
    %503 = vector.load %arg2[%c1_265, %c0_266, %c0_267] : memref<2x32x96xf32, #tpu.memory_space<vmem>>, vector<1x32x96xf32>
    %504 = vector.shape_cast %503 : vector<1x32x96xf32> to vector<32x96xf32>
    %cst_268 = arith.constant dense<0.000000e+00> : vector<2x96xf32>
    %505 = tpu.matmul %445, %504, %cst_268 {dimension_numbers = #tpu.dot_dimension_numbers<[1], [0], [0], [1], [0, 0, 1, 1], [], []>} : vector<2x32xf32>, vector<32x96xf32>, vector<2x96xf32> -> vector<2x96xf32>
    %c1_269 = arith.constant 1 : index
    %c0_270 = arith.constant 0 : index
    %c0_271 = arith.constant 0 : index
    %506 = vector.load %arg4[%c1_269, %c0_270, %c0_271] : memref<2x1x96xf32, #tpu.memory_space<vmem>>, vector<1x1x96xf32>
    %507 = vector.shape_cast %506 : vector<1x1x96xf32> to vector<1x96xf32>
    %508 = vector.broadcast %507 : vector<1x96xf32> to vector<2x96xf32>
    %509 = arith.addf %505, %508 : vector<2x96xf32>
    %510 = vector.extract_strided_slice %502 {offsets = [0, 0], sizes = [2, 32], strides = [1, 1]} : vector<2x96xf32> to vector<2x32xf32>
    %511 = vector.extract_strided_slice %509 {offsets = [0, 0], sizes = [2, 32], strides = [1, 1]} : vector<2x96xf32> to vector<2x32xf32>
    %512 = arith.addf %510, %511 : vector<2x32xf32>
    %513 = arith.negf %512 : vector<2x32xf32>
    %514 = math.exp %513 : vector<2x32xf32>
    %cst_272 = arith.constant 1.000000e+00 : f32
    %515 = vector.broadcast %cst_272 : f32 to vector<2x32xf32>
    %516 = arith.addf %515, %514 : vector<2x32xf32>
    %517 = arith.divf %515, %516 : vector<2x32xf32>
    %518 = vector.extract_strided_slice %502 {offsets = [0, 32], sizes = [2, 32], strides = [1, 1]} : vector<2x96xf32> to vector<2x32xf32>
    %519 = vector.extract_strided_slice %509 {offsets = [0, 32], sizes = [2, 32], strides = [1, 1]} : vector<2x96xf32> to vector<2x32xf32>
    %520 = arith.addf %518, %519 : vector<2x32xf32>
    %521 = arith.negf %520 : vector<2x32xf32>
    %522 = math.exp %521 : vector<2x32xf32>
    %cst_273 = arith.constant 1.000000e+00 : f32
    %523 = vector.broadcast %cst_273 : f32 to vector<2x32xf32>
    %524 = arith.addf %523, %522 : vector<2x32xf32>
    %525 = arith.divf %523, %524 : vector<2x32xf32>
    %526 = vector.extract_strided_slice %502 {offsets = [0, 64], sizes = [2, 32], strides = [1, 1]} : vector<2x96xf32> to vector<2x32xf32>
    %527 = vector.extract_strided_slice %509 {offsets = [0, 64], sizes = [2, 32], strides = [1, 1]} : vector<2x96xf32> to vector<2x32xf32>
    %528 = arith.mulf %517, %527 : vector<2x32xf32>
    %529 = arith.addf %526, %528 : vector<2x32xf32>
    %530 = math.tanh %529 : vector<2x32xf32>
    %cst_274 = arith.constant 1.000000e+00 : f32
    %531 = vector.broadcast %cst_274 : f32 to vector<2x32xf32>
    %532 = arith.subf %531, %525 : vector<2x32xf32>
    %533 = arith.mulf %532, %530 : vector<2x32xf32>
    %534 = arith.mulf %525, %445 : vector<2x32xf32>
    %535 = arith.addf %533, %534 : vector<2x32xf32>
    %c5_275 = arith.constant 5 : index
    %c0_276 = arith.constant 0 : index
    %c0_277 = arith.constant 0 : index
    %536 = vector.load %arg9[%c5_275, %c0_276, %c0_277] : memref<8x2x32xf32, #tpu.memory_space<vmem>>, vector<1x2x32xf32>
    %537 = vector.shape_cast %536 : vector<1x2x32xf32> to vector<2x32xf32>
    %538 = vector.shape_cast %493 : vector<2x32xf32> to vector<1x2x32xf32>
    tpu.vector_store %arg9[%c5_275, %c0_276, %c0_277], %538 {strides = array<i32>} : memref<8x2x32xf32, #tpu.memory_space<vmem>>, vector<1x2x32xf32>,
    %c2_278 = arith.constant 2 : index
    %c0_279 = arith.constant 0 : index
    %c0_280 = arith.constant 0 : index
    %539 = vector.load %arg10[%c2_278, %c0_279, %c0_280] : memref<8x2x32xf32, #tpu.memory_space<vmem>>, vector<1x2x32xf32>
    %540 = vector.shape_cast %539 : vector<1x2x32xf32> to vector<2x32xf32>
    %541 = vector.shape_cast %535 : vector<2x32xf32> to vector<1x2x32xf32>
    tpu.vector_store %arg10[%c2_278, %c0_279, %c0_280], %541 {strides = array<i32>} : memref<8x2x32xf32, #tpu.memory_space<vmem>>, vector<1x2x32xf32>,
    %c0_281 = arith.constant 0 : index
    %c6_282 = arith.constant 6 : index
    %c0_283 = arith.constant 0 : index
    %c0_284 = arith.constant 0 : index
    %542 = vector.load %arg0[%c0_281, %c6_282, %c0_283, %c0_284] : memref<2x8x2x16xf32, #tpu.memory_space<vmem>>, vector<1x1x2x16xf32>
    %543 = vector.shape_cast %542 : vector<1x1x2x16xf32> to vector<2x16xf32>
    %c0_285 = arith.constant 0 : index
    %c0_286 = arith.constant 0 : index
    %c0_287 = arith.constant 0 : index
    %544 = vector.load %arg1[%c0_285, %c0_286, %c0_287] : memref<2x16x96xf32, #tpu.memory_space<vmem>>, vector<1x16x96xf32>
    %545 = vector.shape_cast %544 : vector<1x16x96xf32> to vector<16x96xf32>
    %cst_288 = arith.constant dense<0.000000e+00> : vector<2x96xf32>
    %546 = tpu.matmul %543, %545, %cst_288 {dimension_numbers = #tpu.dot_dimension_numbers<[1], [0], [0], [1], [0, 0, 1, 1], [], []>} : vector<2x16xf32>, vector<16x96xf32>, vector<2x96xf32> -> vector<2x96xf32>
    %c0_289 = arith.constant 0 : index
    %c0_290 = arith.constant 0 : index
    %c0_291 = arith.constant 0 : index
    %547 = vector.load %arg3[%c0_289, %c0_290, %c0_291] : memref<2x1x96xf32, #tpu.memory_space<vmem>>, vector<1x1x96xf32>
    %548 = vector.shape_cast %547 : vector<1x1x96xf32> to vector<1x96xf32>
    %549 = vector.broadcast %548 : vector<1x96xf32> to vector<2x96xf32>
    %550 = arith.addf %546, %549 : vector<2x96xf32>
    %c0_292 = arith.constant 0 : index
    %c0_293 = arith.constant 0 : index
    %c0_294 = arith.constant 0 : index
    %551 = vector.load %arg2[%c0_292, %c0_293, %c0_294] : memref<2x32x96xf32, #tpu.memory_space<vmem>>, vector<1x32x96xf32>
    %552 = vector.shape_cast %551 : vector<1x32x96xf32> to vector<32x96xf32>
    %cst_295 = arith.constant dense<0.000000e+00> : vector<2x96xf32>
    %553 = tpu.matmul %493, %552, %cst_295 {dimension_numbers = #tpu.dot_dimension_numbers<[1], [0], [0], [1], [0, 0, 1, 1], [], []>} : vector<2x32xf32>, vector<32x96xf32>, vector<2x96xf32> -> vector<2x96xf32>
    %c0_296 = arith.constant 0 : index
    %c0_297 = arith.constant 0 : index
    %c0_298 = arith.constant 0 : index
    %554 = vector.load %arg4[%c0_296, %c0_297, %c0_298] : memref<2x1x96xf32, #tpu.memory_space<vmem>>, vector<1x1x96xf32>
    %555 = vector.shape_cast %554 : vector<1x1x96xf32> to vector<1x96xf32>
    %556 = vector.broadcast %555 : vector<1x96xf32> to vector<2x96xf32>
    %557 = arith.addf %553, %556 : vector<2x96xf32>
    %558 = vector.extract_strided_slice %550 {offsets = [0, 0], sizes = [2, 32], strides = [1, 1]} : vector<2x96xf32> to vector<2x32xf32>
    %559 = vector.extract_strided_slice %557 {offsets = [0, 0], sizes = [2, 32], strides = [1, 1]} : vector<2x96xf32> to vector<2x32xf32>
    %560 = arith.addf %558, %559 : vector<2x32xf32>
    %561 = arith.negf %560 : vector<2x32xf32>
    %562 = math.exp %561 : vector<2x32xf32>
    %cst_299 = arith.constant 1.000000e+00 : f32
    %563 = vector.broadcast %cst_299 : f32 to vector<2x32xf32>
    %564 = arith.addf %563, %562 : vector<2x32xf32>
    %565 = arith.divf %563, %564 : vector<2x32xf32>
    %566 = vector.extract_strided_slice %550 {offsets = [0, 32], sizes = [2, 32], strides = [1, 1]} : vector<2x96xf32> to vector<2x32xf32>
    %567 = vector.extract_strided_slice %557 {offsets = [0, 32], sizes = [2, 32], strides = [1, 1]} : vector<2x96xf32> to vector<2x32xf32>
    %568 = arith.addf %566, %567 : vector<2x32xf32>
    %569 = arith.negf %568 : vector<2x32xf32>
    %570 = math.exp %569 : vector<2x32xf32>
    %cst_300 = arith.constant 1.000000e+00 : f32
    %571 = vector.broadcast %cst_300 : f32 to vector<2x32xf32>
    %572 = arith.addf %571, %570 : vector<2x32xf32>
    %573 = arith.divf %571, %572 : vector<2x32xf32>
    %574 = vector.extract_strided_slice %550 {offsets = [0, 64], sizes = [2, 32], strides = [1, 1]} : vector<2x96xf32> to vector<2x32xf32>
    %575 = vector.extract_strided_slice %557 {offsets = [0, 64], sizes = [2, 32], strides = [1, 1]} : vector<2x96xf32> to vector<2x32xf32>
    %576 = arith.mulf %565, %575 : vector<2x32xf32>
    %577 = arith.addf %574, %576 : vector<2x32xf32>
    %578 = math.tanh %577 : vector<2x32xf32>
    %cst_301 = arith.constant 1.000000e+00 : f32
    %579 = vector.broadcast %cst_301 : f32 to vector<2x32xf32>
    %580 = arith.subf %579, %573 : vector<2x32xf32>
    %581 = arith.mulf %580, %578 : vector<2x32xf32>
    %582 = arith.mulf %573, %493 : vector<2x32xf32>
    %583 = arith.addf %581, %582 : vector<2x32xf32>
    %c1_302 = arith.constant 1 : index
    %c6_303 = arith.constant 6 : index
    %c0_304 = arith.constant 0 : index
    %c0_305 = arith.constant 0 : index
    %584 = vector.load %arg0[%c1_302, %c6_303, %c0_304, %c0_305] : memref<2x8x2x16xf32, #tpu.memory_space<vmem>>, vector<1x1x2x16xf32>
    %585 = vector.shape_cast %584 : vector<1x1x2x16xf32> to vector<2x16xf32>
    %c1_306 = arith.constant 1 : index
    %c0_307 = arith.constant 0 : index
    %c0_308 = arith.constant 0 : index
    %586 = vector.load %arg1[%c1_306, %c0_307, %c0_308] : memref<2x16x96xf32, #tpu.memory_space<vmem>>, vector<1x16x96xf32>
    %587 = vector.shape_cast %586 : vector<1x16x96xf32> to vector<16x96xf32>
    %cst_309 = arith.constant dense<0.000000e+00> : vector<2x96xf32>
    %588 = tpu.matmul %585, %587, %cst_309 {dimension_numbers = #tpu.dot_dimension_numbers<[1], [0], [0], [1], [0, 0, 1, 1], [], []>} : vector<2x16xf32>, vector<16x96xf32>, vector<2x96xf32> -> vector<2x96xf32>
    %c1_310 = arith.constant 1 : index
    %c0_311 = arith.constant 0 : index
    %c0_312 = arith.constant 0 : index
    %589 = vector.load %arg3[%c1_310, %c0_311, %c0_312] : memref<2x1x96xf32, #tpu.memory_space<vmem>>, vector<1x1x96xf32>
    %590 = vector.shape_cast %589 : vector<1x1x96xf32> to vector<1x96xf32>
    %591 = vector.broadcast %590 : vector<1x96xf32> to vector<2x96xf32>
    %592 = arith.addf %588, %591 : vector<2x96xf32>
    %c1_313 = arith.constant 1 : index
    %c0_314 = arith.constant 0 : index
    %c0_315 = arith.constant 0 : index
    %593 = vector.load %arg2[%c1_313, %c0_314, %c0_315] : memref<2x32x96xf32, #tpu.memory_space<vmem>>, vector<1x32x96xf32>
    %594 = vector.shape_cast %593 : vector<1x32x96xf32> to vector<32x96xf32>
    %cst_316 = arith.constant dense<0.000000e+00> : vector<2x96xf32>
    %595 = tpu.matmul %535, %594, %cst_316 {dimension_numbers = #tpu.dot_dimension_numbers<[1], [0], [0], [1], [0, 0, 1, 1], [], []>} : vector<2x32xf32>, vector<32x96xf32>, vector<2x96xf32> -> vector<2x96xf32>
    %c1_317 = arith.constant 1 : index
    %c0_318 = arith.constant 0 : index
    %c0_319 = arith.constant 0 : index
    %596 = vector.load %arg4[%c1_317, %c0_318, %c0_319] : memref<2x1x96xf32, #tpu.memory_space<vmem>>, vector<1x1x96xf32>
    %597 = vector.shape_cast %596 : vector<1x1x96xf32> to vector<1x96xf32>
    %598 = vector.broadcast %597 : vector<1x96xf32> to vector<2x96xf32>
    %599 = arith.addf %595, %598 : vector<2x96xf32>
    %600 = vector.extract_strided_slice %592 {offsets = [0, 0], sizes = [2, 32], strides = [1, 1]} : vector<2x96xf32> to vector<2x32xf32>
    %601 = vector.extract_strided_slice %599 {offsets = [0, 0], sizes = [2, 32], strides = [1, 1]} : vector<2x96xf32> to vector<2x32xf32>
    %602 = arith.addf %600, %601 : vector<2x32xf32>
    %603 = arith.negf %602 : vector<2x32xf32>
    %604 = math.exp %603 : vector<2x32xf32>
    %cst_320 = arith.constant 1.000000e+00 : f32
    %605 = vector.broadcast %cst_320 : f32 to vector<2x32xf32>
    %606 = arith.addf %605, %604 : vector<2x32xf32>
    %607 = arith.divf %605, %606 : vector<2x32xf32>
    %608 = vector.extract_strided_slice %592 {offsets = [0, 32], sizes = [2, 32], strides = [1, 1]} : vector<2x96xf32> to vector<2x32xf32>
    %609 = vector.extract_strided_slice %599 {offsets = [0, 32], sizes = [2, 32], strides = [1, 1]} : vector<2x96xf32> to vector<2x32xf32>
    %610 = arith.addf %608, %609 : vector<2x32xf32>
    %611 = arith.negf %610 : vector<2x32xf32>
    %612 = math.exp %611 : vector<2x32xf32>
    %cst_321 = arith.constant 1.000000e+00 : f32
    %613 = vector.broadcast %cst_321 : f32 to vector<2x32xf32>
    %614 = arith.addf %613, %612 : vector<2x32xf32>
    %615 = arith.divf %613, %614 : vector<2x32xf32>
    %616 = vector.extract_strided_slice %592 {offsets = [0, 64], sizes = [2, 32], strides = [1, 1]} : vector<2x96xf32> to vector<2x32xf32>
    %617 = vector.extract_strided_slice %599 {offsets = [0, 64], sizes = [2, 32], strides = [1, 1]} : vector<2x96xf32> to vector<2x32xf32>
    %618 = arith.mulf %607, %617 : vector<2x32xf32>
    %619 = arith.addf %616, %618 : vector<2x32xf32>
    %620 = math.tanh %619 : vector<2x32xf32>
    %cst_322 = arith.constant 1.000000e+00 : f32
    %621 = vector.broadcast %cst_322 : f32 to vector<2x32xf32>
    %622 = arith.subf %621, %615 : vector<2x32xf32>
    %623 = arith.mulf %622, %620 : vector<2x32xf32>
    %624 = arith.mulf %615, %535 : vector<2x32xf32>
    %625 = arith.addf %623, %624 : vector<2x32xf32>
    %c6_323 = arith.constant 6 : index
    %c0_324 = arith.constant 0 : index
    %c0_325 = arith.constant 0 : index
    %626 = vector.load %arg9[%c6_323, %c0_324, %c0_325] : memref<8x2x32xf32, #tpu.memory_space<vmem>>, vector<1x2x32xf32>
    %627 = vector.shape_cast %626 : vector<1x2x32xf32> to vector<2x32xf32>
    %628 = vector.shape_cast %583 : vector<2x32xf32> to vector<1x2x32xf32>
    tpu.vector_store %arg9[%c6_323, %c0_324, %c0_325], %628 {strides = array<i32>} : memref<8x2x32xf32, #tpu.memory_space<vmem>>, vector<1x2x32xf32>,
    %c1_326 = arith.constant 1 : index
    %c0_327 = arith.constant 0 : index
    %c0_328 = arith.constant 0 : index
    %629 = vector.load %arg10[%c1_326, %c0_327, %c0_328] : memref<8x2x32xf32, #tpu.memory_space<vmem>>, vector<1x2x32xf32>
    %630 = vector.shape_cast %629 : vector<1x2x32xf32> to vector<2x32xf32>
    %631 = vector.shape_cast %625 : vector<2x32xf32> to vector<1x2x32xf32>
    tpu.vector_store %arg10[%c1_326, %c0_327, %c0_328], %631 {strides = array<i32>} : memref<8x2x32xf32, #tpu.memory_space<vmem>>, vector<1x2x32xf32>,
    %c0_329 = arith.constant 0 : index
    %c7_330 = arith.constant 7 : index
    %c0_331 = arith.constant 0 : index
    %c0_332 = arith.constant 0 : index
    %632 = vector.load %arg0[%c0_329, %c7_330, %c0_331, %c0_332] : memref<2x8x2x16xf32, #tpu.memory_space<vmem>>, vector<1x1x2x16xf32>
    %633 = vector.shape_cast %632 : vector<1x1x2x16xf32> to vector<2x16xf32>
    %c0_333 = arith.constant 0 : index
    %c0_334 = arith.constant 0 : index
    %c0_335 = arith.constant 0 : index
    %634 = vector.load %arg1[%c0_333, %c0_334, %c0_335] : memref<2x16x96xf32, #tpu.memory_space<vmem>>, vector<1x16x96xf32>
    %635 = vector.shape_cast %634 : vector<1x16x96xf32> to vector<16x96xf32>
    %cst_336 = arith.constant dense<0.000000e+00> : vector<2x96xf32>
    %636 = tpu.matmul %633, %635, %cst_336 {dimension_numbers = #tpu.dot_dimension_numbers<[1], [0], [0], [1], [0, 0, 1, 1], [], []>} : vector<2x16xf32>, vector<16x96xf32>, vector<2x96xf32> -> vector<2x96xf32>
    %c0_337 = arith.constant 0 : index
    %c0_338 = arith.constant 0 : index
    %c0_339 = arith.constant 0 : index
    %637 = vector.load %arg3[%c0_337, %c0_338, %c0_339] : memref<2x1x96xf32, #tpu.memory_space<vmem>>, vector<1x1x96xf32>
    %638 = vector.shape_cast %637 : vector<1x1x96xf32> to vector<1x96xf32>
    %639 = vector.broadcast %638 : vector<1x96xf32> to vector<2x96xf32>
    %640 = arith.addf %636, %639 : vector<2x96xf32>
    %c0_340 = arith.constant 0 : index
    %c0_341 = arith.constant 0 : index
    %c0_342 = arith.constant 0 : index
    %641 = vector.load %arg2[%c0_340, %c0_341, %c0_342] : memref<2x32x96xf32, #tpu.memory_space<vmem>>, vector<1x32x96xf32>
    %642 = vector.shape_cast %641 : vector<1x32x96xf32> to vector<32x96xf32>
    %cst_343 = arith.constant dense<0.000000e+00> : vector<2x96xf32>
    %643 = tpu.matmul %583, %642, %cst_343 {dimension_numbers = #tpu.dot_dimension_numbers<[1], [0], [0], [1], [0, 0, 1, 1], [], []>} : vector<2x32xf32>, vector<32x96xf32>, vector<2x96xf32> -> vector<2x96xf32>
    %c0_344 = arith.constant 0 : index
    %c0_345 = arith.constant 0 : index
    %c0_346 = arith.constant 0 : index
    %644 = vector.load %arg4[%c0_344, %c0_345, %c0_346] : memref<2x1x96xf32, #tpu.memory_space<vmem>>, vector<1x1x96xf32>
    %645 = vector.shape_cast %644 : vector<1x1x96xf32> to vector<1x96xf32>
    %646 = vector.broadcast %645 : vector<1x96xf32> to vector<2x96xf32>
    %647 = arith.addf %643, %646 : vector<2x96xf32>
    %648 = vector.extract_strided_slice %640 {offsets = [0, 0], sizes = [2, 32], strides = [1, 1]} : vector<2x96xf32> to vector<2x32xf32>
    %649 = vector.extract_strided_slice %647 {offsets = [0, 0], sizes = [2, 32], strides = [1, 1]} : vector<2x96xf32> to vector<2x32xf32>
    %650 = arith.addf %648, %649 : vector<2x32xf32>
    %651 = arith.negf %650 : vector<2x32xf32>
    %652 = math.exp %651 : vector<2x32xf32>
    %cst_347 = arith.constant 1.000000e+00 : f32
    %653 = vector.broadcast %cst_347 : f32 to vector<2x32xf32>
    %654 = arith.addf %653, %652 : vector<2x32xf32>
    %655 = arith.divf %653, %654 : vector<2x32xf32>
    %656 = vector.extract_strided_slice %640 {offsets = [0, 32], sizes = [2, 32], strides = [1, 1]} : vector<2x96xf32> to vector<2x32xf32>
    %657 = vector.extract_strided_slice %647 {offsets = [0, 32], sizes = [2, 32], strides = [1, 1]} : vector<2x96xf32> to vector<2x32xf32>
    %658 = arith.addf %656, %657 : vector<2x32xf32>
    %659 = arith.negf %658 : vector<2x32xf32>
    %660 = math.exp %659 : vector<2x32xf32>
    %cst_348 = arith.constant 1.000000e+00 : f32
    %661 = vector.broadcast %cst_348 : f32 to vector<2x32xf32>
    %662 = arith.addf %661, %660 : vector<2x32xf32>
    %663 = arith.divf %661, %662 : vector<2x32xf32>
    %664 = vector.extract_strided_slice %640 {offsets = [0, 64], sizes = [2, 32], strides = [1, 1]} : vector<2x96xf32> to vector<2x32xf32>
    %665 = vector.extract_strided_slice %647 {offsets = [0, 64], sizes = [2, 32], strides = [1, 1]} : vector<2x96xf32> to vector<2x32xf32>
    %666 = arith.mulf %655, %665 : vector<2x32xf32>
    %667 = arith.addf %664, %666 : vector<2x32xf32>
    %668 = math.tanh %667 : vector<2x32xf32>
    %cst_349 = arith.constant 1.000000e+00 : f32
    %669 = vector.broadcast %cst_349 : f32 to vector<2x32xf32>
    %670 = arith.subf %669, %663 : vector<2x32xf32>
    %671 = arith.mulf %670, %668 : vector<2x32xf32>
    %672 = arith.mulf %663, %583 : vector<2x32xf32>
    %673 = arith.addf %671, %672 : vector<2x32xf32>
    %c1_350 = arith.constant 1 : index
    %c7_351 = arith.constant 7 : index
    %c0_352 = arith.constant 0 : index
    %c0_353 = arith.constant 0 : index
    %674 = vector.load %arg0[%c1_350, %c7_351, %c0_352, %c0_353] : memref<2x8x2x16xf32, #tpu.memory_space<vmem>>, vector<1x1x2x16xf32>
    %675 = vector.shape_cast %674 : vector<1x1x2x16xf32> to vector<2x16xf32>
    %c1_354 = arith.constant 1 : index
    %c0_355 = arith.constant 0 : index
    %c0_356 = arith.constant 0 : index
    %676 = vector.load %arg1[%c1_354, %c0_355, %c0_356] : memref<2x16x96xf32, #tpu.memory_space<vmem>>, vector<1x16x96xf32>
    %677 = vector.shape_cast %676 : vector<1x16x96xf32> to vector<16x96xf32>
    %cst_357 = arith.constant dense<0.000000e+00> : vector<2x96xf32>
    %678 = tpu.matmul %675, %677, %cst_357 {dimension_numbers = #tpu.dot_dimension_numbers<[1], [0], [0], [1], [0, 0, 1, 1], [], []>} : vector<2x16xf32>, vector<16x96xf32>, vector<2x96xf32> -> vector<2x96xf32>
    %c1_358 = arith.constant 1 : index
    %c0_359 = arith.constant 0 : index
    %c0_360 = arith.constant 0 : index
    %679 = vector.load %arg3[%c1_358, %c0_359, %c0_360] : memref<2x1x96xf32, #tpu.memory_space<vmem>>, vector<1x1x96xf32>
    %680 = vector.shape_cast %679 : vector<1x1x96xf32> to vector<1x96xf32>
    %681 = vector.broadcast %680 : vector<1x96xf32> to vector<2x96xf32>
    %682 = arith.addf %678, %681 : vector<2x96xf32>
    %c1_361 = arith.constant 1 : index
    %c0_362 = arith.constant 0 : index
    %c0_363 = arith.constant 0 : index
    %683 = vector.load %arg2[%c1_361, %c0_362, %c0_363] : memref<2x32x96xf32, #tpu.memory_space<vmem>>, vector<1x32x96xf32>
    %684 = vector.shape_cast %683 : vector<1x32x96xf32> to vector<32x96xf32>
    %cst_364 = arith.constant dense<0.000000e+00> : vector<2x96xf32>
    %685 = tpu.matmul %625, %684, %cst_364 {dimension_numbers = #tpu.dot_dimension_numbers<[1], [0], [0], [1], [0, 0, 1, 1], [], []>} : vector<2x32xf32>, vector<32x96xf32>, vector<2x96xf32> -> vector<2x96xf32>
    %c1_365 = arith.constant 1 : index
    %c0_366 = arith.constant 0 : index
    %c0_367 = arith.constant 0 : index
    %686 = vector.load %arg4[%c1_365, %c0_366, %c0_367] : memref<2x1x96xf32, #tpu.memory_space<vmem>>, vector<1x1x96xf32>
    %687 = vector.shape_cast %686 : vector<1x1x96xf32> to vector<1x96xf32>
    %688 = vector.broadcast %687 : vector<1x96xf32> to vector<2x96xf32>
    %689 = arith.addf %685, %688 : vector<2x96xf32>
    %690 = vector.extract_strided_slice %682 {offsets = [0, 0], sizes = [2, 32], strides = [1, 1]} : vector<2x96xf32> to vector<2x32xf32>
    %691 = vector.extract_strided_slice %689 {offsets = [0, 0], sizes = [2, 32], strides = [1, 1]} : vector<2x96xf32> to vector<2x32xf32>
    %692 = arith.addf %690, %691 : vector<2x32xf32>
    %693 = arith.negf %692 : vector<2x32xf32>
    %694 = math.exp %693 : vector<2x32xf32>
    %cst_368 = arith.constant 1.000000e+00 : f32
    %695 = vector.broadcast %cst_368 : f32 to vector<2x32xf32>
    %696 = arith.addf %695, %694 : vector<2x32xf32>
    %697 = arith.divf %695, %696 : vector<2x32xf32>
    %698 = vector.extract_strided_slice %682 {offsets = [0, 32], sizes = [2, 32], strides = [1, 1]} : vector<2x96xf32> to vector<2x32xf32>
    %699 = vector.extract_strided_slice %689 {offsets = [0, 32], sizes = [2, 32], strides = [1, 1]} : vector<2x96xf32> to vector<2x32xf32>
    %700 = arith.addf %698, %699 : vector<2x32xf32>
    %701 = arith.negf %700 : vector<2x32xf32>
    %702 = math.exp %701 : vector<2x32xf32>
    %cst_369 = arith.constant 1.000000e+00 : f32
    %703 = vector.broadcast %cst_369 : f32 to vector<2x32xf32>
    %704 = arith.addf %703, %702 : vector<2x32xf32>
    %705 = arith.divf %703, %704 : vector<2x32xf32>
    %706 = vector.extract_strided_slice %682 {offsets = [0, 64], sizes = [2, 32], strides = [1, 1]} : vector<2x96xf32> to vector<2x32xf32>
    %707 = vector.extract_strided_slice %689 {offsets = [0, 64], sizes = [2, 32], strides = [1, 1]} : vector<2x96xf32> to vector<2x32xf32>
    %708 = arith.mulf %697, %707 : vector<2x32xf32>
    %709 = arith.addf %706, %708 : vector<2x32xf32>
    %710 = math.tanh %709 : vector<2x32xf32>
    %cst_370 = arith.constant 1.000000e+00 : f32
    %711 = vector.broadcast %cst_370 : f32 to vector<2x32xf32>
    %712 = arith.subf %711, %705 : vector<2x32xf32>
    %713 = arith.mulf %712, %710 : vector<2x32xf32>
    %714 = arith.mulf %705, %625 : vector<2x32xf32>
    %715 = arith.addf %713, %714 : vector<2x32xf32>
    %c7_371 = arith.constant 7 : index
    %c0_372 = arith.constant 0 : index
    %c0_373 = arith.constant 0 : index
    %716 = vector.load %arg9[%c7_371, %c0_372, %c0_373] : memref<8x2x32xf32, #tpu.memory_space<vmem>>, vector<1x2x32xf32>
    %717 = vector.shape_cast %716 : vector<1x2x32xf32> to vector<2x32xf32>
    %718 = vector.shape_cast %673 : vector<2x32xf32> to vector<1x2x32xf32>
    tpu.vector_store %arg9[%c7_371, %c0_372, %c0_373], %718 {strides = array<i32>} : memref<8x2x32xf32, #tpu.memory_space<vmem>>, vector<1x2x32xf32>,
    %c0_374 = arith.constant 0 : index
    %c0_375 = arith.constant 0 : index
    %c0_376 = arith.constant 0 : index
    %719 = vector.load %arg10[%c0_374, %c0_375, %c0_376] : memref<8x2x32xf32, #tpu.memory_space<vmem>>, vector<1x2x32xf32>
    %720 = vector.shape_cast %719 : vector<1x2x32xf32> to vector<2x32xf32>
    %721 = vector.shape_cast %715 : vector<2x32xf32> to vector<1x2x32xf32>
    tpu.vector_store %arg10[%c0_374, %c0_375, %c0_376], %721 {strides = array<i32>} : memref<8x2x32xf32, #tpu.memory_space<vmem>>, vector<1x2x32xf32>,
    %c0_377 = arith.constant 0 : index
    %c0_378 = arith.constant 0 : index
    %c0_379 = arith.constant 0 : index
    %722 = vector.load %arg9[%c0_377, %c0_378, %c0_379] : memref<8x2x32xf32, #tpu.memory_space<vmem>>, vector<8x2x32xf32>
    %c0_380 = arith.constant 0 : index
    %c0_381 = arith.constant 0 : index
    %c0_382 = arith.constant 0 : index
    %723 = vector.load %arg10[%c0_380, %c0_381, %c0_382] : memref<8x2x32xf32, #tpu.memory_space<vmem>>, vector<8x2x32xf32>
    %724 = tpu.concatenate %722, %723 in 2 : vector<8x2x32xf32>, vector<8x2x32xf32> -> vector<8x2x64xf32>
    %c0_383 = arith.constant 0 : index
    %c0_384 = arith.constant 0 : index
    %c0_385 = arith.constant 0 : index
    %725 = vector.load %arg7[%c0_383, %c0_384, %c0_385] : memref<8x2x64xf32, #tpu.memory_space<vmem>>, vector<8x2x64xf32>
    tpu.vector_store %arg7[%c0_383, %c0_384, %c0_385], %724 {strides = array<i32>} : memref<8x2x64xf32, #tpu.memory_space<vmem>>, vector<8x2x64xf32>,
    %726 = tpu.concatenate %673, %715 in 1 : vector<2x32xf32>, vector<2x32xf32> -> vector<2x64xf32>
    %c0_386 = arith.constant 0 : index
    %c0_387 = arith.constant 0 : index
    %727 = vector.load %arg5[%c0_386, %c0_387] : memref<64x32xf32, #tpu.memory_space<vmem>>, vector<64x32xf32>
    %cst_388 = arith.constant dense<0.000000e+00> : vector<2x32xf32>
    %728 = tpu.matmul %726, %727, %cst_388 {dimension_numbers = #tpu.dot_dimension_numbers<[1], [0], [0], [1], [0, 0, 1, 1], [], []>} : vector<2x64xf32>, vector<64x32xf32>, vector<2x32xf32> -> vector<2x32xf32>
    %c0_389 = arith.constant 0 : index
    %c0_390 = arith.constant 0 : index
    %729 = vector.load %arg6[%c0_389, %c0_390] : memref<1x32xf32, #tpu.memory_space<vmem>>, vector<1x32xf32>
    %730 = vector.broadcast %729 : vector<1x32xf32> to vector<2x32xf32>
    %731 = arith.addf %728, %730 : vector<2x32xf32>
    %732 = math.tanh %731 : vector<2x32xf32>
    %c0_391 = arith.constant 0 : index
    %c0_392 = arith.constant 0 : index
    %733 = vector.load %arg8[%c0_391, %c0_392] : memref<2x32xf32, #tpu.memory_space<vmem>>, vector<2x32xf32>
    tpu.vector_store %arg8[%c0_391, %c0_392], %732 {strides = array<i32>} : memref<2x32xf32, #tpu.memory_space<vmem>>, vector<2x32xf32>,
    return
  }
}

</mosaic_0001>

<llo_original>
// kernel: run_encoder.1
$region0: #{run_encoder.1}
  #allocation0 [shape = 'u32[]', space=smem, size = 0x4, offset = 0x4, fixed_abs, tag = 'smem constant byte address 0x4 - core index']
  #allocation1 [shape = 'u32[144,128]{1,0:T(1,128)}', space=vmem, size = 0x12000, scoped, tag = 'internal scratch']
  #allocation2 [shape = 'f32[8,2,32]{2,1,0:T(2,128)}', space=vmem, size = 0x2000, scoped, tag = 'scratch operand']
  #allocation3 [shape = 'f32[8,2,32]{2,1,0:T(2,128)}', space=vmem, size = 0x2000, scoped, tag = 'scratch operand']
  %s0 = inlined_call_operand.vmem [shape: f32[2,8,2,16], index: 0, kind: input, shape index: {}]
  %s1 = inlined_call_operand.vmem [shape: f32[2,16,96], index: 1, kind: input, shape index: {}]
  %s2 = inlined_call_operand.vmem [shape: f32[2,32,96], index: 2, kind: input, shape index: {}]
  %s3 = inlined_call_operand.vmem [shape: f32[2,1,96], index: 3, kind: input, shape index: {}]
  %s4 = inlined_call_operand.vmem [shape: f32[2,1,96], index: 4, kind: input, shape index: {}]
  %s5 = inlined_call_operand.vmem [shape: f32[64,32], index: 5, kind: input, shape index: {}]
  %s6 = inlined_call_operand.vmem [shape: f32[1,32], index: 6, kind: input, shape index: {}]
  %s7 = inlined_call_operand.vmem [shape: f32[8,2,64], index: 7, kind: output, shape index: {0}]
  %s8 = inlined_call_operand.hbm [shape: f32[2,32], index: 8, kind: output, shape index: {1}]
  %9 = xla_tuple %s7, %s8
  %s10 = sld [smem:[#allocation0]]
  $region46: #{run_encoder.1} parent=0
    _
  %s12 = ssub.s32 1, %s10
  %s13 = scalar_select 0, %s12, %s10
  $region1: #{run_encoder.1} parent=0
    #allocation4 [shape = 'u8[1024]{0}', space=vmem, size = 0x400, scoped, tag = 'output window, operand 1, single buffered']
    #allocation5 [shape = 's32[1]{0}', space=sflag, size = 0x4, scoped, tag = 'scoped memory for run_encoder.1']
    %14 = vsyncpa [#allocation5], 0
    // Predicated region
    $region2: #{run_encoder.1} parent=1 // pred_check
      _
    $region3: #{run_encoder.1} parent=1 // pred_check_branch
      %16 = sbr.rel (0) target = $region5
    $region4: #{run_encoder.1} parent=1 // pred_region
      _
    $region5: #{run_encoder.1} parent=1 // pred_fallthru
      _
    // Predicated region
    $region6: #{run_encoder.1} parent=1 // pred_check
      _
    $region7: #{run_encoder.1} parent=1 // pred_check_branch
      %18 = sbr.rel (0) target = $region9
    $region8: #{run_encoder.1} parent=1 // pred_region
      _
    $region9: #{run_encoder.1} parent=1 // pred_fallthru
      _
    // Predicated region
    $region10: #{run_encoder.1} parent=1 // pred_check
      _
    $region11: #{run_encoder.1} parent=1 // pred_check_branch
      %20 = sbr.rel (0) target = $region13
    $region12: #{run_encoder.1} parent=1 // pred_region
      _
    $region13: #{run_encoder.1} parent=1 // pred_fallthru
      _
    // Predicated region
    $region14: #{run_encoder.1} parent=1 // pred_check
      _
    $region15: #{run_encoder.1} parent=1 // pred_check_branch
      %22 = sbr.rel (0) target = $region17
    $region16: #{run_encoder.1} parent=1 // pred_region
      _
    $region17: #{run_encoder.1} parent=1 // pred_fallthru
      _
    // Predicated region
    $region18: #{run_encoder.1} parent=1 // pred_check
      _
    $region19: #{run_encoder.1} parent=1 // pred_check_branch
      %24 = sbr.rel (0) target = $region21
    $region20: #{run_encoder.1} parent=1 // pred_region
      _
    $region21: #{run_encoder.1} parent=1 // pred_fallthru
      _
    // Predicated region
    $region22: #{run_encoder.1} parent=1 // pred_check
      _
    $region23: #{run_encoder.1} parent=1 // pred_check_branch
      %26 = sbr.rel (0) target = $region25
    $region24: #{run_encoder.1} parent=1 // pred_region
      _
    $region25: #{run_encoder.1} parent=1 // pred_fallthru
      _
    // Predicated region
    $region26: #{run_encoder.1} parent=1 // pred_check
      _
    $region27: #{run_encoder.1} parent=1 // pred_check_branch
      %28 = sbr.rel (0) target = $region29
    $region28: #{run_encoder.1} parent=1 // pred_region
      _
    $region29: #{run_encoder.1} parent=1 // pred_fallthru
      _
    %v29 = vld [vmem:[%s0] sm:$0x3]
    %v30 = vld [vmem:[%s1] sm:$0xff]
    %v31 = vld [vmem:[%s1 + $0x8] sm:$0xff]
    %v32 = vld [vmem:[%s3] sm:$0x1]
    %v34 = vlaneseq
    %v35 = vshrl.u32 %v34, 7
    %v36 = vsub.s32 0, %v35
    %v37 = vrot.slane %v32, %v36
    %vm39 = vcmask 130048
    %v41 = vsel %vm39, %v29, 0
    %43 = vmatprep.subr.mxu0 0.0
    %44 = vmatpush1.msra.mxu0 %v30
    %45 = vmatprep.subr.mxu0 0.0
    %46 = vmatpush1.msra.mxu0 %v31
    %47 = vmatprep.subr.mxu0 0.0
    %48 = vmatpush1.msra.mxu0 0.0
    %49 = vmatprep.subr.mxu0 0.0
    %50 = vmatpush1.msra.mxu0 0.0
    %51 = vmatprep.subr.mxu0 0.0
    %52 = vmatpush1.msra.mxu0 0.0
    %53 = vmatprep.subr.mxu0 0.0
    %54 = vmatpush1.msra.mxu0 0.0
    %55 = vmatprep.subr.mxu0 0.0
    %56 = vmatpush1.msra.mxu0 0.0
    %57 = vmatprep.subr.mxu0 0.0
    %58 = vmatpush1.msra.mxu0 0.0
    %59 = vmatprep.subr.mxu0 0.0
    %60 = vmatpush1.msra.mxu0 0.0
    %61 = vmatprep.subr.mxu0 0.0
    %62 = vmatpush1.msra.mxu0 0.0
    %63 = vmatprep.subr.mxu0 0.0
    %64 = vmatpush1.msra.mxu0 0.0
    %65 = vmatprep.subr.mxu0 0.0
    %66 = vmatpush1.msra.mxu0 0.0
    %67 = vmatprep.subr.mxu0 0.0
    %68 = vmatpush1.msra.mxu0 0.0
    %69 = vmatprep.subr.mxu0 0.0
    %70 = vmatpush1.msra.mxu0 0.0
    %71 = vmatprep.subr.mxu0 0.0
    %72 = vmatpush1.msra.mxu0 0.0
    %73 = vmatprep.subr.mxu0 0.0
    %74 = vmatpush1.msra.mxu0 0.0
    %75 = vmatprep.subr.mxu0 0.0
    %76 = vmatpush1.msra.mxu0 0.0
    %77 = vmatprep.subr.mxu0 0.0
    %78 = vmatpush1.msra.mxu0 0.0
    %79 = vmatprep.subr.mxu0 0.0
    %80 = vmatpush1.msra.mxu0 0.0
    %81 = vmatprep.subr.mxu0 0.0
    %82 = vmatpush1.msra.mxu0 0.0
    %83 = vmatprep.subr.mxu0 0.0
    %84 = vmatpush1.msra.mxu0 0.0
    %85 = vmatprep.subr.mxu0 0.0
    %86 = vmatpush1.msra.mxu0 0.0
    %87 = vmatprep.subr.mxu0 0.0
    %88 = vmatpush1.msra.mxu0 0.0
    %89 = vmatprep.subr.mxu0 0.0
    %90 = vmatpush1.msra.mxu0 0.0
    %91 = vmatprep.subr.mxu0 0.0
    %92 = vmatpush1.msra.mxu0 0.0
    %93 = vmatprep.subr.mxu0 0.0
    %94 = vmatpush1.msra.mxu0 0.0
    %95 = vmatprep.subr.mxu0 0.0
    %96 = vmatpush1.msra.mxu0 0.0
    %97 = vmatprep.subr.mxu0 0.0
    %98 = vmatpush1.msra.mxu0 0.0
    %99 = vmatprep.subr.mxu0 0.0
    %100 = vmatpush1.msra.mxu0 0.0
    %101 = vmatprep.subr.mxu0 0.0
    %102 = vmatpush1.msra.mxu0 0.0
    %103 = vmatprep.subr.mxu0 0.0
    %104 = vmatpush1.msra.mxu0 0.0
    %105 = vmatprep.subr.mxu0 0.0
    %106 = vmatpush1.msra.mxu0 0.0
    %107 = vmatprep.mubr.f32.mxu0 0.0
    %108 = vmatmul.mubr.f32.gmra.mrb[0].mxu0 %v41
    %v109 = vpop.f32.mrb[0].mxu0
    %v110 = vadd.f32 %v37, %v109
    %v111 = vpop.f32.mrb[0].mxu0
    %112 = vdwg.mxu0
    %v113 = vld [vmem:[%s2] sm:$0xff]
    %v114 = vld [vmem:[%s2 + $0x8] sm:$0xff]
    %v115 = vld [vmem:[%s2 + $0x10] sm:$0xff]
    %v116 = vld [vmem:[%s2 + $0x18] sm:$0xff]
    %v117 = vld [vmem:[%s4] sm:$0x1]
    %v119 = vlaneseq
    %v120 = vshrl.u32 %v119, 7
    %v121 = vsub.s32 0, %v120
    %v122 = vrot.slane %v117, %v121
    %vm124 = vcmask 261120
    %v126 = vsel %vm124, 0.0, 0
    %128 = vmatprep.subr.mxu0 0.0
    %129 = vmatpush1.msra.mxu0 %v113
    %130 = vmatprep.subr.mxu0 0.0
    %131 = vmatpush1.msra.mxu0 %v114
    %132 = vmatprep.subr.mxu0 0.0
    %133 = vmatpush1.msra.mxu0 %v115
    %134 = vmatprep.subr.mxu0 0.0
    %135 = vmatpush1.msra.mxu0 %v116
    %136 = vmatprep.subr.mxu0 0.0
    %137 = vmatpush1.msra.mxu0 0.0
    %138 = vmatprep.subr.mxu0 0.0
    %139 = vmatpush1.msra.mxu0 0.0
    %140 = vmatprep.subr.mxu0 0.0
    %141 = vmatpush1.msra.mxu0 0.0
    %142 = vmatprep.subr.mxu0 0.0
    %143 = vmatpush1.msra.mxu0 0.0
    %144 = vmatprep.subr.mxu0 0.0
    %145 = vmatpush1.msra.mxu0 0.0
    %146 = vmatprep.subr.mxu0 0.0
    %147 = vmatpush1.msra.mxu0 0.0
    %148 = vmatprep.subr.mxu0 0.0
    %149 = vmatpush1.msra.mxu0 0.0
    %150 = vmatprep.subr.mxu0 0.0
    %151 = vmatpush1.msra.mxu0 0.0
    %152 = vmatprep.subr.mxu0 0.0
    %153 = vmatpush1.msra.mxu0 0.0
    %154 = vmatprep.subr.mxu0 0.0
    %155 = vmatpush1.msra.mxu0 0.0
    %156 = vmatprep.subr.mxu0 0.0
    %157 = vmatpush1.msra.mxu0 0.0
    %158 = vmatprep.subr.mxu0 0.0
    %159 = vmatpush1.msra.mxu0 0.0
    %160 = vmatprep.subr.mxu0 0.0
    %161 = vmatpush1.msra.mxu0 0.0
    %162 = vmatprep.subr.mxu0 0.0
    %163 = vmatpush1.msra.mxu0 0.0
    %164 = vmatprep.subr.mxu0 0.0
    %165 = vmatpush1.msra.mxu0 0.0
    %166 = vmatprep.subr.mxu0 0.0
    %167 = vmatpush1.msra.mxu0 0.0
    %168 = vmatprep.subr.mxu0 0.0
    %169 = vmatpush1.msra.mxu0 0.0
    %170 = vmatprep.subr.mxu0 0.0
    %171 = vmatpush1.msra.mxu0 0.0
    %172 = vmatprep.subr.mxu0 0.0
    %173 = vmatpush1.msra.mxu0 0.0
    %174 = vmatprep.subr.mxu0 0.0
    %175 = vmatpush1.msra.mxu0 0.0
    %176 = vmatprep.subr.mxu0 0.0
    %177 = vmatpush1.msra.mxu0 0.0
    %178 = vmatprep.subr.mxu0 0.0
    %179 = vmatpush1.msra.mxu0 0.0
    %180 = vmatprep.subr.mxu0 0.0
    %181 = vmatpush1.msra.mxu0 0.0
    %182 = vmatprep.subr.mxu0 0.0
    %183 = vmatpush1.msra.mxu0 0.0
    %184 = vmatprep.subr.mxu0 0.0
    %185 = vmatpush1.msra.mxu0 0.0
    %186 = vmatprep.subr.mxu0 0.0
    %187 = vmatpush1.msra.mxu0 0.0
    %188 = vmatprep.subr.mxu0 0.0
    %189 = vmatpush1.msra.mxu0 0.0
    %190 = vmatprep.subr.mxu0 0.0
    %191 = vmatpush1.msra.mxu0 0.0
    %192 = vmatprep.mubr.f32.mxu0 0.0
    %193 = vmatmul.mubr.f32.gmra.mrb[0].mxu0 %v126
    %v194 = vpop.f32.mrb[0].mxu0
    %v195 = vadd.f32 %v122, %v194
    %v196 = vpop.f32.mrb[0].mxu0
    %197 = vdwg.mxu0
    %v198 = vadd.f32 %v110, %v195
    %v199 = vxor.u32 %v198, 2147483648
    %v200 = vmul.f32 %v199, 1.442695
    %v201 = vpow.pop %v200
    %v202 = vadd.f32 %v201, 1.0
    %v203 = vrcp.pop %v202
    %v204 = vmul.f32 1.0, %v203
    %206 = vrot.lane.b32.xlu0 %v195, 64
    %v207 = vpop.permute.xlu0 %206
    %v209 = vmul.f32 %v204, %v207
    %211 = vrot.lane.b32.xlu0 %v209, 64
    %v212 = vpop.permute.xlu0 %211
    %v214 = vadd.f32 %v110, %v212
    %v215 = vtanh.pop %v214
    %v216 = vsub.f32 1.0, %v204
    %218 = vrot.lane.b32.xlu0 %v215, 96
    %v219 = vpop.permute.xlu0 %218
    %v221 = vmul.f32 %v216, %v219
    %v222 = vmul.f32 %v204, 0.0
    %v223 = vadd.f32 %v221, %v222
    %s224 = scalar_lea.vmem %s0, 16
    %v225 = vld [vmem:[%s224] sm:$0x3]
    %s226 = scalar_lea.vmem %s1, 16
    %v227 = vld [vmem:[%s226] sm:$0xff]
    %v228 = vld [vmem:[%s226 + $0x8] sm:$0xff]
    %s229 = scalar_lea.vmem %s3, 1
    %v230 = vld [vmem:[%s229] sm:$0x1]
    %v232 = vlaneseq
    %v233 = vshrl.u32 %v232, 7
    %v234 = vsub.s32 0, %v233
    %v235 = vrot.slane %v230, %v234
    %v238 = vsel %vm39, %v225, 0
    %240 = vmatprep.subr.mxu0 0.0
    %241 = vmatpush1.msra.mxu0 %v227
    %242 = vmatprep.subr.mxu0 0.0
    %243 = vmatpush1.msra.mxu0 %v228
    %244 = vmatprep.subr.mxu0 0.0
    %245 = vmatpush1.msra.mxu0 0.0
    %246 = vmatprep.subr.mxu0 0.0
    %247 = vmatpush1.msra.mxu0 0.0
    %248 = vmatprep.subr.mxu0 0.0
    %249 = vmatpush1.msra.mxu0 0.0
    %250 = vmatprep.subr.mxu0 0.0
    %251 = vmatpush1.msra.mxu0 0.0
    %252 = vmatprep.subr.mxu0 0.0
    %253 = vmatpush1.msra.mxu0 0.0
    %254 = vmatprep.subr.mxu0 0.0
    %255 = vmatpush1.msra.mxu0 0.0
    %256 = vmatprep.subr.mxu0 0.0
    %257 = vmatpush1.msra.mxu0 0.0
    %258 = vmatprep.subr.mxu0 0.0
    %259 = vmatpush1.msra.mxu0 0.0
    %260 = vmatprep.subr.mxu0 0.0
    %261 = vmatpush1.msra.mxu0 0.0
    %262 = vmatprep.subr.mxu0 0.0
    %263 = vmatpush1.msra.mxu0 0.0
    %264 = vmatprep.subr.mxu0 0.0
    %265 = vmatpush1.msra.mxu0 0.0
    %266 = vmatprep.subr.mxu0 0.0
    %267 = vmatpush1.msra.mxu0 0.0
    %268 = vmatprep.subr.mxu0 0.0
    %269 = vmatpush1.msra.mxu0 0.0
    %270 = vmatprep.subr.mxu0 0.0
    %271 = vmatpush1.msra.mxu0 0.0
    %272 = vmatprep.subr.mxu0 0.0
    %273 = vmatpush1.msra.mxu0 0.0
    %274 = vmatprep.subr.mxu0 0.0
    %275 = vmatpush1.msra.mxu0 0.0
    %276 = vmatprep.subr.mxu0 0.0
    %277 = vmatpush1.msra.mxu0 0.0
    %278 = vmatprep.subr.mxu0 0.0
    %279 = vmatpush1.msra.mxu0 0.0
    %280 = vmatprep.subr.mxu0 0.0
    %281 = vmatpush1.msra.mxu0 0.0
    %282 = vmatprep.subr.mxu0 0.0
    %283 = vmatpush1.msra.mxu0 0.0
    %284 = vmatprep.subr.mxu0 0.0
    %285 = vmatpush1.msra.mxu0 0.0
    %286 = vmatprep.subr.mxu0 0.0
    %287 = vmatpush1.msra.mxu0 0.0
    %288 = vmatprep.subr.mxu0 0.0
    %289 = vmatpush1.msra.mxu0 0.0
    %290 = vmatprep.subr.mxu0 0.0
    %291 = vmatpush1.msra.mxu0 0.0
    %292 = vmatprep.subr.mxu0 0.0
    %293 = vmatpush1.msra.mxu0 0.0
    %294 = vmatprep.subr.mxu0 0.0
    %295 = vmatpush1.msra.mxu0 0.0
    %296 = vmatprep.subr.mxu0 0.0
    %297 = vmatpush1.msra.mxu0 0.0
    %298 = vmatprep.subr.mxu0 0.0
    %299 = vmatpush1.msra.mxu0 0.0
    %300 = vmatprep.subr.mxu0 0.0
    %301 = vmatpush1.msra.mxu0 0.0
    %302 = vmatprep.subr.mxu0 0.0
    %303 = vmatpush1.msra.mxu0 0.0
    %304 = vmatprep.mubr.f32.mxu0 0.0
    %305 = vmatmul.mubr.f32.gmra.mrb[0].mxu0 %v238
    %v306 = vpop.f32.mrb[0].mxu0
    %v307 = vadd.f32 %v235, %v306
    %v308 = vpop.f32.mrb[0].mxu0
    %309 = vdwg.mxu0
    %s310 = scalar_lea.vmem %s2, 32
    %v311 = vld [vmem:[%s310] sm:$0xff]
    %v312 = vld [vmem:[%s310 + $0x8] sm:$0xff]
    %v313 = vld [vmem:[%s310 + $0x10] sm:$0xff]
    %v314 = vld [vmem:[%s310 + $0x18] sm:$0xff]
    %s315 = scalar_lea.vmem %s4, 1
    %v316 = vld [vmem:[%s315] sm:$0x1]
    %v318 = vlaneseq
    %v319 = vshrl.u32 %v318, 7
    %v320 = vsub.s32 0, %v319
    %v321 = vrot.slane %v316, %v320
    %323 = vmatprep.subr.mxu0 0.0
    %324 = vmatpush1.msra.mxu0 %v311
    %325 = vmatprep.subr.mxu0 0.0
    %326 = vmatpush1.msra.mxu0 %v312
    %327 = vmatprep.subr.mxu0 0.0
    %328 = vmatpush1.msra.mxu0 %v313
    %329 = vmatprep.subr.mxu0 0.0
    %330 = vmatpush1.msra.mxu0 %v314
    %331 = vmatprep.subr.mxu0 0.0
    %332 = vmatpush1.msra.mxu0 0.0
    %333 = vmatprep.subr.mxu0 0.0
    %334 = vmatpush1.msra.mxu0 0.0
    %335 = vmatprep.subr.mxu0 0.0
    %336 = vmatpush1.msra.mxu0 0.0
    %337 = vmatprep.subr.mxu0 0.0
    %338 = vmatpush1.msra.mxu0 0.0
    %339 = vmatprep.subr.mxu0 0.0
    %340 = vmatpush1.msra.mxu0 0.0
    %341 = vmatprep.subr.mxu0 0.0
    %342 = vmatpush1.msra.mxu0 0.0
    %343 = vmatprep.subr.mxu0 0.0
    %344 = vmatpush1.msra.mxu0 0.0
    %345 = vmatprep.subr.mxu0 0.0
    %346 = vmatpush1.msra.mxu0 0.0
    %347 = vmatprep.subr.mxu0 0.0
    %348 = vmatpush1.msra.mxu0 0.0
    %349 = vmatprep.subr.mxu0 0.0
    %350 = vmatpush1.msra.mxu0 0.0
    %351 = vmatprep.subr.mxu0 0.0
    %352 = vmatpush1.msra.mxu0 0.0
    %353 = vmatprep.subr.mxu0 0.0
    %354 = vmatpush1.msra.mxu0 0.0
    %355 = vmatprep.subr.mxu0 0.0
    %356 = vmatpush1.msra.mxu0 0.0
    %357 = vmatprep.subr.mxu0 0.0
    %358 = vmatpush1.msra.mxu0 0.0
    %359 = vmatprep.subr.mxu0 0.0
    %360 = vmatpush1.msra.mxu0 0.0
    %361 = vmatprep.subr.mxu0 0.0
    %362 = vmatpush1.msra.mxu0 0.0
    %363 = vmatprep.subr.mxu0 0.0
    %364 = vmatpush1.msra.mxu0 0.0
    %365 = vmatprep.subr.mxu0 0.0
    %366 = vmatpush1.msra.mxu0 0.0
    %367 = vmatprep.subr.mxu0 0.0
    %368 = vmatpush1.msra.mxu0 0.0
    %369 = vmatprep.subr.mxu0 0.0
    %370 = vmatpush1.msra.mxu0 0.0
    %371 = vmatprep.subr.mxu0 0.0
    %372 = vmatpush1.msra.mxu0 0.0
    %373 = vmatprep.subr.mxu0 0.0
    %374 = vmatpush1.msra.mxu0 0.0
    %375 = vmatprep.subr.mxu0 0.0
    %376 = vmatpush1.msra.mxu0 0.0
    %377 = vmatprep.subr.mxu0 0.0
    %378 = vmatpush1.msra.mxu0 0.0
    %379 = vmatprep.subr.mxu0 0.0
    %380 = vmatpush1.msra.mxu0 0.0
    %381 = vmatprep.subr.mxu0 0.0
    %382 = vmatpush1.msra.mxu0 0.0
    %383 = vmatprep.subr.mxu0 0.0
    %384 = vmatpush1.msra.mxu0 0.0
    %385 = vmatprep.subr.mxu0 0.0
    %386 = vmatpush1.msra.mxu0 0.0
    %387 = vmatprep.mubr.f32.mxu0 0.0
    %388 = vmatmul.mubr.f32.gmra.mrb[0].mxu0 %v126
    %v389 = vpop.f32.mrb[0].mxu0
    %v390 = vadd.f32 %v321, %v389
    %v391 = vpop.f32.mrb[0].mxu0
    %392 = vdwg.mxu0
    %v393 = vadd.f32 %v307, %v390
    %v394 = vxor.u32 %v393, 2147483648
    %v395 = vmul.f32 %v394, 1.442695
    %v396 = vpow.pop %v395
    %v397 = vadd.f32 %v396, 1.0
    %v398 = vrcp.pop %v397
    %v399 = vmul.f32 1.0, %v398
    %401 = vrot.lane.b32.xlu0 %v390, 64
    %v402 = vpop.permute.xlu0 %401
    %v404 = vmul.f32 %v399, %v402
    %406 = vrot.lane.b32.xlu0 %v404, 64
    %v407 = vpop.permute.xlu0 %406
    %v409 = vadd.f32 %v307, %v407
    %v410 = vtanh.pop %v409
    %v411 = vsub.f32 1.0, %v399
    %413 = vrot.lane.b32.xlu0 %v410, 96
    %v414 = vpop.permute.xlu0 %413
    %v416 = vmul.f32 %v411, %v414
    %v417 = vmul.f32 %v399, 0.0
    %v418 = vadd.f32 %v416, %v417
    %420 = vrot.lane.b32.xlu0 %v223, 96
    %v421 = vpop.permute.xlu0 %420
    %vm423 = vcmask 254976
    %424 = vst.msk [vmem:[#allocation2] sm:$0x3] %vm423, %v421
    %426 = vrot.lane.b32.xlu0 %v418, 96
    %v427 = vpop.permute.xlu0 %426
    %s429 = scalar_lea.vmem [#allocation3], 14
    %430 = vst.msk [vmem:[%s429] sm:$0x3] %vm423, %v427
    %s431 = scalar_lea.vmem %s0, 2
    %v432 = vld [vmem:[%s431] sm:$0x3]
    %v433 = vld [vmem:[%s1] sm:$0xff]
    %v434 = vld [vmem:[%s1 + $0x8] sm:$0xff]
    %v435 = vld [vmem:[%s3] sm:$0x1]
    %v437 = vlaneseq
    %v438 = vshrl.u32 %v437, 7
    %v439 = vsub.s32 0, %v438
    %v440 = vrot.slane %v435, %v439
    %v443 = vsel %vm39, %v432, 0
    %445 = vmatprep.subr.mxu0 0.0
    %446 = vmatpush1.msra.mxu0 %v433
    %447 = vmatprep.subr.mxu0 0.0
    %448 = vmatpush1.msra.mxu0 %v434
    %449 = vmatprep.subr.mxu0 0.0
    %450 = vmatpush1.msra.mxu0 0.0
    %451 = vmatprep.subr.mxu0 0.0
    %452 = vmatpush1.msra.mxu0 0.0
    %453 = vmatprep.subr.mxu0 0.0
    %454 = vmatpush1.msra.mxu0 0.0
    %455 = vmatprep.subr.mxu0 0.0
    %456 = vmatpush1.msra.mxu0 0.0
    %457 = vmatprep.subr.mxu0 0.0
    %458 = vmatpush1.msra.mxu0 0.0
    %459 = vmatprep.subr.mxu0 0.0
    %460 = vmatpush1.msra.mxu0 0.0
    %461 = vmatprep.subr.mxu0 0.0
    %462 = vmatpush1.msra.mxu0 0.0
    %463 = vmatprep.subr.mxu0 0.0
    %464 = vmatpush1.msra.mxu0 0.0
    %465 = vmatprep.subr.mxu0 0.0
    %466 = vmatpush1.msra.mxu0 0.0
    %467 = vmatprep.subr.mxu0 0.0
    %468 = vmatpush1.msra.mxu0 0.0
    %469 = vmatprep.subr.mxu0 0.0
    %470 = vmatpush1.msra.mxu0 0.0
    %471 = vmatprep.subr.mxu0 0.0
    %472 = vmatpush1.msra.mxu0 0.0
    %473 = vmatprep.subr.mxu0 0.0
    %474 = vmatpush1.msra.mxu0 0.0
    %475 = vmatprep.subr.mxu0 0.0
    %476 = vmatpush1.msra.mxu0 0.0
    %477 = vmatprep.subr.mxu0 0.0
    %478 = vmatpush1.msra.mxu0 0.0
    %479 = vmatprep.subr.mxu0 0.0
    %480 = vmatpush1.msra.mxu0 0.0
    %481 = vmatprep.subr.mxu0 0.0
    %482 = vmatpush1.msra.mxu0 0.0
    %483 = vmatprep.subr.mxu0 0.0
    %484 = vmatpush1.msra.mxu0 0.0
    %485 = vmatprep.subr.mxu0 0.0
    %486 = vmatpush1.msra.mxu0 0.0
    %487 = vmatprep.subr.mxu0 0.0
    %488 = vmatpush1.msra.mxu0 0.0
    %489 = vmatprep.subr.mxu0 0.0
    %490 = vmatpush1.msra.mxu0 0.0
    %491 = vmatprep.subr.mxu0 0.0
    %492 = vmatpush1.msra.mxu0 0.0
    %493 = vmatprep.subr.mxu0 0.0
    %494 = vmatpush1.msra.mxu0 0.0
    %495 = vmatprep.subr.mxu0 0.0
    %496 = vmatpush1.msra.mxu0 0.0
    %497 = vmatprep.subr.mxu0 0.0
    %498 = vmatpush1.msra.mxu0 0.0
    %499 = vmatprep.subr.mxu0 0.0
    %500 = vmatpush1.msra.mxu0 0.0
    %501 = vmatprep.subr.mxu0 0.0
    %502 = vmatpush1.msra.mxu0 0.0
    %503 = vmatprep.subr.mxu0 0.0
    %504 = vmatpush1.msra.mxu0 0.0
    %505 = vmatprep.subr.mxu0 0.0
    %506 = vmatpush1.msra.mxu0 0.0
    %507 = vmatprep.subr.mxu0 0.0
    %508 = vmatpush1.msra.mxu0 0.0
    %509 = vmatprep.mubr.f32.mxu0 0.0
    %510 = vmatmul.mubr.f32.gmra.mrb[0].mxu0 %v443
    %v511 = vpop.f32.mrb[0].mxu0
    %v512 = vadd.f32 %v440, %v511
    %v513 = vpop.f32.mrb[0].mxu0
    %514 = vdwg.mxu0
    %v515 = vld [vmem:[%s2] sm:$0xff]
    %v516 = vld [vmem:[%s2 + $0x8] sm:$0xff]
    %v517 = vld [vmem:[%s2 + $0x10] sm:$0xff]
    %v518 = vld [vmem:[%s2 + $0x18] sm:$0xff]
    %v519 = vld [vmem:[%s4] sm:$0x1]
    %v521 = vlaneseq
    %v522 = vshrl.u32 %v521, 7
    %v523 = vsub.s32 0, %v522
    %v524 = vrot.slane %v519, %v523
    %v526 = vsel %vm124, %v421, 0
    %528 = vmatprep.subr.mxu0 0.0
    %529 = vmatpush1.msra.mxu0 %v515
    %530 = vmatprep.subr.mxu0 0.0
    %531 = vmatpush1.msra.mxu0 %v516
    %532 = vmatprep.subr.mxu0 0.0
    %533 = vmatpush1.msra.mxu0 %v517
    %534 = vmatprep.subr.mxu0 0.0
    %535 = vmatpush1.msra.mxu0 %v518
    %536 = vmatprep.subr.mxu0 0.0
    %537 = vmatpush1.msra.mxu0 0.0
    %538 = vmatprep.subr.mxu0 0.0
    %539 = vmatpush1.msra.mxu0 0.0
    %540 = vmatprep.subr.mxu0 0.0
    %541 = vmatpush1.msra.mxu0 0.0
    %542 = vmatprep.subr.mxu0 0.0
    %543 = vmatpush1.msra.mxu0 0.0
    %544 = vmatprep.subr.mxu0 0.0
    %545 = vmatpush1.msra.mxu0 0.0
    %546 = vmatprep.subr.mxu0 0.0
    %547 = vmatpush1.msra.mxu0 0.0
    %548 = vmatprep.subr.mxu0 0.0
    %549 = vmatpush1.msra.mxu0 0.0
    %550 = vmatprep.subr.mxu0 0.0
    %551 = vmatpush1.msra.mxu0 0.0
    %552 = vmatprep.subr.mxu0 0.0
    %553 = vmatpush1.msra.mxu0 0.0
    %554 = vmatprep.subr.mxu0 0.0
    %555 = vmatpush1.msra.mxu0 0.0
    %556 = vmatprep.subr.mxu0 0.0
    %557 = vmatpush1.msra.mxu0 0.0
    %558 = vmatprep.subr.mxu0 0.0
    %559 = vmatpush1.msra.mxu0 0.0
    %560 = vmatprep.subr.mxu0 0.0
    %561 = vmatpush1.msra.mxu0 0.0
    %562 = vmatprep.subr.mxu0 0.0
    %563 = vmatpush1.msra.mxu0 0.0
    %564 = vmatprep.subr.mxu0 0.0
    %565 = vmatpush1.msra.mxu0 0.0
    %566 = vmatprep.subr.mxu0 0.0
    %567 = vmatpush1.msra.mxu0 0.0
    %568 = vmatprep.subr.mxu0 0.0
    %569 = vmatpush1.msra.mxu0 0.0
    %570 = vmatprep.subr.mxu0 0.0
    %571 = vmatpush1.msra.mxu0 0.0
    %572 = vmatprep.subr.mxu0 0.0
    %573 = vmatpush1.msra.mxu0 0.0
    %574 = vmatprep.subr.mxu0 0.0
    %575 = vmatpush1.msra.mxu0 0.0
    %576 = vmatprep.subr.mxu0 0.0
    %577 = vmatpush1.msra.mxu0 0.0
    %578 = vmatprep.subr.mxu0 0.0
    %579 = vmatpush1.msra.mxu0 0.0
    %580 = vmatprep.subr.mxu0 0.0
    %581 = vmatpush1.msra.mxu0 0.0
    %582 = vmatprep.subr.mxu0 0.0
    %583 = vmatpush1.msra.mxu0 0.0
    %584 = vmatprep.subr.mxu0 0.0
    %585 = vmatpush1.msra.mxu0 0.0
    %586 = vmatprep.subr.mxu0 0.0
    %587 = vmatpush1.msra.mxu0 0.0
    %588 = vmatprep.subr.mxu0 0.0
    %589 = vmatpush1.msra.mxu0 0.0
    %590 = vmatprep.subr.mxu0 0.0
    %591 = vmatpush1.msra.mxu0 0.0
    %592 = vmatprep.mubr.f32.mxu0 0.0
    %593 = vmatmul.mubr.f32.gmra.mrb[0].mxu0 %v526
    %v594 = vpop.f32.mrb[0].mxu0
    %v595 = vadd.f32 %v524, %v594
    %v596 = vpop.f32.mrb[0].mxu0
    %597 = vdwg.mxu0
    %v598 = vadd.f32 %v512, %v595
    %v599 = vxor.u32 %v598, 2147483648
    %v600 = vmul.f32 %v599, 1.442695
    %v601 = vpow.pop %v600
    %v602 = vadd.f32 %v601, 1.0
    %v603 = vrcp.pop %v602
    %v604 = vmul.f32 1.0, %v603
    %606 = vrot.lane.b32.xlu0 %v595, 64
    %v607 = vpop.permute.xlu0 %606
    %v609 = vmul.f32 %v604, %v607
    %611 = vrot.lane.b32.xlu0 %v609, 64
    %v612 = vpop.permute.xlu0 %611
    %v614 = vadd.f32 %v512, %v612
    %v615 = vtanh.pop %v614
    %v616 = vsub.f32 1.0, %v604
    %618 = vrot.lane.b32.xlu0 %v615, 96
    %v619 = vpop.permute.xlu0 %618
    %v621 = vmul.f32 %v616, %v619
    %v622 = vmul.f32 %v604, %v223
    %v623 = vadd.f32 %v621, %v622
    %s624 = scalar_lea.vmem %s0, 18
    %v625 = vld [vmem:[%s624] sm:$0x3]
    %v626 = vld [vmem:[%s226] sm:$0xff]
    %v627 = vld [vmem:[%s226 + $0x8] sm:$0xff]
    %v628 = vld [vmem:[%s229] sm:$0x1]
    %v630 = vlaneseq
    %v631 = vshrl.u32 %v630, 7
    %v632 = vsub.s32 0, %v631
    %v633 = vrot.slane %v628, %v632
    %v636 = vsel %vm39, %v625, 0
    %638 = vmatprep.subr.mxu0 0.0
    %639 = vmatpush1.msra.mxu0 %v626
    %640 = vmatprep.subr.mxu0 0.0
    %641 = vmatpush1.msra.mxu0 %v627
    %642 = vmatprep.subr.mxu0 0.0
    %643 = vmatpush1.msra.mxu0 0.0
    %644 = vmatprep.subr.mxu0 0.0
    %645 = vmatpush1.msra.mxu0 0.0
    %646 = vmatprep.subr.mxu0 0.0
    %647 = vmatpush1.msra.mxu0 0.0
    %648 = vmatprep.subr.mxu0 0.0
    %649 = vmatpush1.msra.mxu0 0.0
    %650 = vmatprep.subr.mxu0 0.0
    %651 = vmatpush1.msra.mxu0 0.0
    %652 = vmatprep.subr.mxu0 0.0
    %653 = vmatpush1.msra.mxu0 0.0
    %654 = vmatprep.subr.mxu0 0.0
    %655 = vmatpush1.msra.mxu0 0.0
    %656 = vmatprep.subr.mxu0 0.0
    %657 = vmatpush1.msra.mxu0 0.0
    %658 = vmatprep.subr.mxu0 0.0
    %659 = vmatpush1.msra.mxu0 0.0
    %660 = vmatprep.subr.mxu0 0.0
    %661 = vmatpush1.msra.mxu0 0.0
    %662 = vmatprep.subr.mxu0 0.0
    %663 = vmatpush1.msra.mxu0 0.0
    %664 = vmatprep.subr.mxu0 0.0
    %665 = vmatpush1.msra.mxu0 0.0
    %666 = vmatprep.subr.mxu0 0.0
    %667 = vmatpush1.msra.mxu0 0.0
    %668 = vmatprep.subr.mxu0 0.0
    %669 = vmatpush1.msra.mxu0 0.0
    %670 = vmatprep.subr.mxu0 0.0
    %671 = vmatpush1.msra.mxu0 0.0
    %672 = vmatprep.subr.mxu0 0.0
    %673 = vmatpush1.msra.mxu0 0.0
    %674 = vmatprep.subr.mxu0 0.0
    %675 = vmatpush1.msra.mxu0 0.0
    %676 = vmatprep.subr.mxu0 0.0
    %677 = vmatpush1.msra.mxu0 0.0
    %678 = vmatprep.subr.mxu0 0.0
    %679 = vmatpush1.msra.mxu0 0.0
    %680 = vmatprep.subr.mxu0 0.0
    %681 = vmatpush1.msra.mxu0 0.0
    %682 = vmatprep.subr.mxu0 0.0
    %683 = vmatpush1.msra.mxu0 0.0
    %684 = vmatprep.subr.mxu0 0.0
    %685 = vmatpush1.msra.mxu0 0.0
    %686 = vmatprep.subr.mxu0 0.0
    %687 = vmatpush1.msra.mxu0 0.0
    %688 = vmatprep.subr.mxu0 0.0
    %689 = vmatpush1.msra.mxu0 0.0
    %690 = vmatprep.subr.mxu0 0.0
    %691 = vmatpush1.msra.mxu0 0.0
    %692 = vmatprep.subr.mxu0 0.0
    %693 = vmatpush1.msra.mxu0 0.0
    %694 = vmatprep.subr.mxu0 0.0
    %695 = vmatpush1.msra.mxu0 0.0
    %696 = vmatprep.subr.mxu0 0.0
    %697 = vmatpush1.msra.mxu0 0.0
    %698 = vmatprep.subr.mxu0 0.0
    %699 = vmatpush1.msra.mxu0 0.0
    %700 = vmatprep.subr.mxu0 0.0
    %701 = vmatpush1.msra.mxu0 0.0
    %702 = vmatprep.mubr.f32.mxu0 0.0
    %703 = vmatmul.mubr.f32.gmra.mrb[0].mxu0 %v636
    %v704 = vpop.f32.mrb[0].mxu0
    %v705 = vadd.f32 %v633, %v704
    %v706 = vpop.f32.mrb[0].mxu0
    %707 = vdwg.mxu0
    %v708 = vld [vmem:[%s310] sm:$0xff]
    %v709 = vld [vmem:[%s310 + $0x8] sm:$0xff]
    %v710 = vld [vmem:[%s310 + $0x10] sm:$0xff]
    %v711 = vld [vmem:[%s310 + $0x18] sm:$0xff]
    %v712 = vld [vmem:[%s315] sm:$0x1]
    %v714 = vlaneseq
    %v715 = vshrl.u32 %v714, 7
    %v716 = vsub.s32 0, %v715
    %v717 = vrot.slane %v712, %v716
    %v719 = vsel %vm124, %v427, 0
    %721 = vmatprep.subr.mxu0 0.0
    %722 = vmatpush1.msra.mxu0 %v708
    %723 = vmatprep.subr.mxu0 0.0
    %724 = vmatpush1.msra.mxu0 %v709
    %725 = vmatprep.subr.mxu0 0.0
    %726 = vmatpush1.msra.mxu0 %v710
    %727 = vmatprep.subr.mxu0 0.0
    %728 = vmatpush1.msra.mxu0 %v711
    %729 = vmatprep.subr.mxu0 0.0
    %730 = vmatpush1.msra.mxu0 0.0
    %731 = vmatprep.subr.mxu0 0.0
    %732 = vmatpush1.msra.mxu0 0.0
    %733 = vmatprep.subr.mxu0 0.0
    %734 = vmatpush1.msra.mxu0 0.0
    %735 = vmatprep.subr.mxu0 0.0
    %736 = vmatpush1.msra.mxu0 0.0
    %737 = vmatprep.subr.mxu0 0.0
    %738 = vmatpush1.msra.mxu0 0.0
    %739 = vmatprep.subr.mxu0 0.0
    %740 = vmatpush1.msra.mxu0 0.0
    %741 = vmatprep.subr.mxu0 0.0
    %742 = vmatpush1.msra.mxu0 0.0
    %743 = vmatprep.subr.mxu0 0.0
    %744 = vmatpush1.msra.mxu0 0.0
    %745 = vmatprep.subr.mxu0 0.0
    %746 = vmatpush1.msra.mxu0 0.0
    %747 = vmatprep.subr.mxu0 0.0
    %748 = vmatpush1.msra.mxu0 0.0
    %749 = vmatprep.subr.mxu0 0.0
    %750 = vmatpush1.msra.mxu0 0.0
    %751 = vmatprep.subr.mxu0 0.0
    %752 = vmatpush1.msra.mxu0 0.0
    %753 = vmatprep.subr.mxu0 0.0
    %754 = vmatpush1.msra.mxu0 0.0
    %755 = vmatprep.subr.mxu0 0.0
    %756 = vmatpush1.msra.mxu0 0.0
    %757 = vmatprep.subr.mxu0 0.0
    %758 = vmatpush1.msra.mxu0 0.0
    %759 = vmatprep.subr.mxu0 0.0
    %760 = vmatpush1.msra.mxu0 0.0
    %761 = vmatprep.subr.mxu0 0.0
    %762 = vmatpush1.msra.mxu0 0.0
    %763 = vmatprep.subr.mxu0 0.0
    %764 = vmatpush1.msra.mxu0 0.0
    %765 = vmatprep.subr.mxu0 0.0
    %766 = vmatpush1.msra.mxu0 0.0
    %767 = vmatprep.subr.mxu0 0.0
    %768 = vmatpush1.msra.mxu0 0.0
    %769 = vmatprep.subr.mxu0 0.0
    %770 = vmatpush1.msra.mxu0 0.0
    %771 = vmatprep.subr.mxu0 0.0
    %772 = vmatpush1.msra.mxu0 0.0
    %773 = vmatprep.subr.mxu0 0.0
    %774 = vmatpush1.msra.mxu0 0.0
    %775 = vmatprep.subr.mxu0 0.0
    %776 = vmatpush1.msra.mxu0 0.0
    %777 = vmatprep.subr.mxu0 0.0
    %778 = vmatpush1.msra.mxu0 0.0
    %779 = vmatprep.subr.mxu0 0.0
    %780 = vmatpush1.msra.mxu0 0.0
    %781 = vmatprep.subr.mxu0 0.0
    %782 = vmatpush1.msra.mxu0 0.0
    %783 = vmatprep.subr.mxu0 0.0
    %784 = vmatpush1.msra.mxu0 0.0
    %785 = vmatprep.mubr.f32.mxu0 0.0
    %786 = vmatmul.mubr.f32.gmra.mrb[0].mxu0 %v719
    %v787 = vpop.f32.mrb[0].mxu0
    %v788 = vadd.f32 %v717, %v787
    %v789 = vpop.f32.mrb[0].mxu0
    %790 = vdwg.mxu0
    %v791 = vadd.f32 %v705, %v788
    %v792 = vxor.u32 %v791, 2147483648
    %v793 = vmul.f32 %v792, 1.442695
    %v794 = vpow.pop %v793
    %v795 = vadd.f32 %v794, 1.0
    %v796 = vrcp.pop %v795
    %v797 = vmul.f32 1.0, %v796
    %799 = vrot.lane.b32.xlu0 %v788, 64
    %v800 = vpop.permute.xlu0 %799
    %v802 = vmul.f32 %v797, %v800
    %804 = vrot.lane.b32.xlu0 %v802, 64
    %v805 = vpop.permute.xlu0 %804
    %v807 = vadd.f32 %v705, %v805
    %v808 = vtanh.pop %v807
    %v809 = vsub.f32 1.0, %v797
    %811 = vrot.lane.b32.xlu0 %v808, 96
    %v812 = vpop.permute.xlu0 %811
    %v814 = vmul.f32 %v809, %v812
    %v815 = vmul.f32 %v797, %v418
    %v816 = vadd.f32 %v814, %v815
    %818 = vrot.lane.b32.xlu0 %v623, 96
    %v819 = vpop.permute.xlu0 %818
    %s821 = scalar_lea.vmem [#allocation2], 2
    %822 = vst.msk [vmem:[%s821] sm:$0x3] %vm423, %v819
    %824 = vrot.lane.b32.xlu0 %v816, 96
    %v825 = vpop.permute.xlu0 %824
    %s827 = scalar_lea.vmem [#allocation3], 12
    %828 = vst.msk [vmem:[%s827] sm:$0x3] %vm423, %v825
    %s829 = scalar_lea.vmem %s0, 4
    %v830 = vld [vmem:[%s829] sm:$0x3]
    %v831 = vld [vmem:[%s1] sm:$0xff]
    %v832 = vld [vmem:[%s1 + $0x8] sm:$0xff]
    %v833 = vld [vmem:[%s3] sm:$0x1]
    %v835 = vlaneseq
    %v836 = vshrl.u32 %v835, 7
    %v837 = vsub.s32 0, %v836
    %v838 = vrot.slane %v833, %v837
    %v841 = vsel %vm39, %v830, 0
    %843 = vmatprep.subr.mxu0 0.0
    %844 = vmatpush1.msra.mxu0 %v831
    %845 = vmatprep.subr.mxu0 0.0
    %846 = vmatpush1.msra.mxu0 %v832
    %847 = vmatprep.subr.mxu0 0.0
    %848 = vmatpush1.msra.mxu0 0.0
    %849 = vmatprep.subr.mxu0 0.0
    %850 = vmatpush1.msra.mxu0 0.0
    %851 = vmatprep.subr.mxu0 0.0
    %852 = vmatpush1.msra.mxu0 0.0
    %853 = vmatprep.subr.mxu0 0.0
    %854 = vmatpush1.msra.mxu0 0.0
    %855 = vmatprep.subr.mxu0 0.0
    %856 = vmatpush1.msra.mxu0 0.0
    %857 = vmatprep.subr.mxu0 0.0
    %858 = vmatpush1.msra.mxu0 0.0
    %859 = vmatprep.subr.mxu0 0.0
    %860 = vmatpush1.msra.mxu0 0.0
    %861 = vmatprep.subr.mxu0 0.0
    %862 = vmatpush1.msra.mxu0 0.0
    %863 = vmatprep.subr.mxu0 0.0
    %864 = vmatpush1.msra.mxu0 0.0
    %865 = vmatprep.subr.mxu0 0.0
    %866 = vmatpush1.msra.mxu0 0.0
    %867 = vmatprep.subr.mxu0 0.0
    %868 = vmatpush1.msra.mxu0 0.0
    %869 = vmatprep.subr.mxu0 0.0
    %870 = vmatpush1.msra.mxu0 0.0
    %871 = vmatprep.subr.mxu0 0.0
    %872 = vmatpush1.msra.mxu0 0.0
    %873 = vmatprep.subr.mxu0 0.0
    %874 = vmatpush1.msra.mxu0 0.0
    %875 = vmatprep.subr.mxu0 0.0
    %876 = vmatpush1.msra.mxu0 0.0
    %877 = vmatprep.subr.mxu0 0.0
    %878 = vmatpush1.msra.mxu0 0.0
    %879 = vmatprep.subr.mxu0 0.0
    %880 = vmatpush1.msra.mxu0 0.0
    %881 = vmatprep.subr.mxu0 0.0
    %882 = vmatpush1.msra.mxu0 0.0
    %883 = vmatprep.subr.mxu0 0.0
    %884 = vmatpush1.msra.mxu0 0.0
    %885 = vmatprep.subr.mxu0 0.0
    %886 = vmatpush1.msra.mxu0 0.0
    %887 = vmatprep.subr.mxu0 0.0
    %888 = vmatpush1.msra.mxu0 0.0
    %889 = vmatprep.subr.mxu0 0.0
    %890 = vmatpush1.msra.mxu0 0.0
    %891 = vmatprep.subr.mxu0 0.0
    %892 = vmatpush1.msra.mxu0 0.0
    %893 = vmatprep.subr.mxu0 0.0
    %894 = vmatpush1.msra.mxu0 0.0
    %895 = vmatprep.subr.mxu0 0.0
    %896 = vmatpush1.msra.mxu0 0.0
    %897 = vmatprep.subr.mxu0 0.0
    %898 = vmatpush1.msra.mxu0 0.0
    %899 = vmatprep.subr.mxu0 0.0
    %900 = vmatpush1.msra.mxu0 0.0
    %901 = vmatprep.subr.mxu0 0.0
    %902 = vmatpush1.msra.mxu0 0.0
    %903 = vmatprep.subr.mxu0 0.0
    %904 = vmatpush1.msra.mxu0 0.0
    %905 = vmatprep.subr.mxu0 0.0
    %906 = vmatpush1.msra.mxu0 0.0
    %907 = vmatprep.mubr.f32.mxu0 0.0
    %908 = vmatmul.mubr.f32.gmra.mrb[0].mxu0 %v841
    %v909 = vpop.f32.mrb[0].mxu0
    %v910 = vadd.f32 %v838, %v909
    %v911 = vpop.f32.mrb[0].mxu0
    %912 = vdwg.mxu0
    %v913 = vld [vmem:[%s2] sm:$0xff]
    %v914 = vld [vmem:[%s2 + $0x8] sm:$0xff]
    %v915 = vld [vmem:[%s2 + $0x10] sm:$0xff]
    %v916 = vld [vmem:[%s2 + $0x18] sm:$0xff]
    %v917 = vld [vmem:[%s4] sm:$0x1]
    %v919 = vlaneseq
    %v920 = vshrl.u32 %v919, 7
    %v921 = vsub.s32 0, %v920
    %v922 = vrot.slane %v917, %v921
    %v924 = vsel %vm124, %v819, 0
    %926 = vmatprep.subr.mxu0 0.0
    %927 = vmatpush1.msra.mxu0 %v913
    %928 = vmatprep.subr.mxu0 0.0
    %929 = vmatpush1.msra.mxu0 %v914
    %930 = vmatprep.subr.mxu0 0.0
    %931 = vmatpush1.msra.mxu0 %v915
    %932 = vmatprep.subr.mxu0 0.0
    %933 = vmatpush1.msra.mxu0 %v916
    %934 = vmatprep.subr.mxu0 0.0
    %935 = vmatpush1.msra.mxu0 0.0
    %936 = vmatprep.subr.mxu0 0.0
    %937 = vmatpush1.msra.mxu0 0.0
    %938 = vmatprep.subr.mxu0 0.0
    %939 = vmatpush1.msra.mxu0 0.0
    %940 = vmatprep.subr.mxu0 0.0
    %941 = vmatpush1.msra.mxu0 0.0
    %942 = vmatprep.subr.mxu0 0.0
    %943 = vmatpush1.msra.mxu0 0.0
    %944 = vmatprep.subr.mxu0 0.0
    %945 = vmatpush1.msra.mxu0 0.0
    %946 = vmatprep.subr.mxu0 0.0
    %947 = vmatpush1.msra.mxu0 0.0
    %948 = vmatprep.subr.mxu0 0.0
    %949 = vmatpush1.msra.mxu0 0.0
    %950 = vmatprep.subr.mxu0 0.0
    %951 = vmatpush1.msra.mxu0 0.0
    %952 = vmatprep.subr.mxu0 0.0
    %953 = vmatpush1.msra.mxu0 0.0
    %954 = vmatprep.subr.mxu0 0.0
    %955 = vmatpush1.msra.mxu0 0.0
    %956 = vmatprep.subr.mxu0 0.0
    %957 = vmatpush1.msra.mxu0 0.0
    %958 = vmatprep.subr.mxu0 0.0
    %959 = vmatpush1.msra.mxu0 0.0
    %960 = vmatprep.subr.mxu0 0.0
    %961 = vmatpush1.msra.mxu0 0.0
    %962 = vmatprep.subr.mxu0 0.0
    %963 = vmatpush1.msra.mxu0 0.0
    %964 = vmatprep.subr.mxu0 0.0
    %965 = vmatpush1.msra.mxu0 0.0
    %966 = vmatprep.subr.mxu0 0.0
    %967 = vmatpush1.msra.mxu0 0.0
    %968 = vmatprep.subr.mxu0 0.0
    %969 = vmatpush1.msra.mxu0 0.0
    %970 = vmatprep.subr.mxu0 0.0
    %971 = vmatpush1.msra.mxu0 0.0
    %972 = vmatprep.subr.mxu0 0.0
    %973 = vmatpush1.msra.mxu0 0.0
    %974 = vmatprep.subr.mxu0 0.0
    %975 = vmatpush1.msra.mxu0 0.0
    %976 = vmatprep.subr.mxu0 0.0
    %977 = vmatpush1.msra.mxu0 0.0
    %978 = vmatprep.subr.mxu0 0.0
    %979 = vmatpush1.msra.mxu0 0.0
    %980 = vmatprep.subr.mxu0 0.0
    %981 = vmatpush1.msra.mxu0 0.0
    %982 = vmatprep.subr.mxu0 0.0
    %983 = vmatpush1.msra.mxu0 0.0
    %984 = vmatprep.subr.mxu0 0.0
    %985 = vmatpush1.msra.mxu0 0.0
    %986 = vmatprep.subr.mxu0 0.0
    %987 = vmatpush1.msra.mxu0 0.0
    %988 = vmatprep.subr.mxu0 0.0
    %989 = vmatpush1.msra.mxu0 0.0
    %990 = vmatprep.mubr.f32.mxu0 0.0
    %991 = vmatmul.mubr.f32.gmra.mrb[0].mxu0 %v924
    %v992 = vpop.f32.mrb[0].mxu0
    %v993 = vadd.f32 %v922, %v992
    %v994 = vpop.f32.mrb[0].mxu0
    %995 = vdwg.mxu0
    %v996 = vadd.f32 %v910, %v993
    %v997 = vxor.u32 %v996, 2147483648
    %v998 = vmul.f32 %v997, 1.442695
    %v999 = vpow.pop %v998
    %v1000 = vadd.f32 %v999, 1.0
    %v1001 = vrcp.pop %v1000
    %v1002 = vmul.f32 1.0, %v1001
    %1004 = vrot.lane.b32.xlu0 %v993, 64
    %v1005 = vpop.permute.xlu0 %1004
    %v1007 = vmul.f32 %v1002, %v1005
    %1009 = vrot.lane.b32.xlu0 %v1007, 64
    %v1010 = vpop.permute.xlu0 %1009
    %v1012 = vadd.f32 %v910, %v1010
    %v1013 = vtanh.pop %v1012
    %v1014 = vsub.f32 1.0, %v1002
    %1016 = vrot.lane.b32.xlu0 %v1013, 96
    %v1017 = vpop.permute.xlu0 %1016
    %v1019 = vmul.f32 %v1014, %v1017
    %v1020 = vmul.f32 %v1002, %v623
    %v1021 = vadd.f32 %v1019, %v1020
    %s1022 = scalar_lea.vmem %s0, 20
    %v1023 = vld [vmem:[%s1022] sm:$0x3]
    %v1024 = vld [vmem:[%s226] sm:$0xff]
    %v1025 = vld [vmem:[%s226 + $0x8] sm:$0xff]
    %v1026 = vld [vmem:[%s229] sm:$0x1]
    %v1028 = vlaneseq
    %v1029 = vshrl.u32 %v1028, 7
    %v1030 = vsub.s32 0, %v1029
    %v1031 = vrot.slane %v1026, %v1030
    %v1034 = vsel %vm39, %v1023, 0
    %1036 = vmatprep.subr.mxu0 0.0
    %1037 = vmatpush1.msra.mxu0 %v1024
    %1038 = vmatprep.subr.mxu0 0.0
    %1039 = vmatpush1.msra.mxu0 %v1025
    %1040 = vmatprep.subr.mxu0 0.0
    %1041 = vmatpush1.msra.mxu0 0.0
    %1042 = vmatprep.subr.mxu0 0.0
    %1043 = vmatpush1.msra.mxu0 0.0
    %1044 = vmatprep.subr.mxu0 0.0
    %1045 = vmatpush1.msra.mxu0 0.0
    %1046 = vmatprep.subr.mxu0 0.0
    %1047 = vmatpush1.msra.mxu0 0.0
    %1048 = vmatprep.subr.mxu0 0.0
    %1049 = vmatpush1.msra.mxu0 0.0
    %1050 = vmatprep.subr.mxu0 0.0
    %1051 = vmatpush1.msra.mxu0 0.0
    %1052 = vmatprep.subr.mxu0 0.0
    %1053 = vmatpush1.msra.mxu0 0.0
    %1054 = vmatprep.subr.mxu0 0.0
    %1055 = vmatpush1.msra.mxu0 0.0
    %1056 = vmatprep.subr.mxu0 0.0
    %1057 = vmatpush1.msra.mxu0 0.0
    %1058 = vmatprep.subr.mxu0 0.0
    %1059 = vmatpush1.msra.mxu0 0.0
    %1060 = vmatprep.subr.mxu0 0.0
    %1061 = vmatpush1.msra.mxu0 0.0
    %1062 = vmatprep.subr.mxu0 0.0
    %1063 = vmatpush1.msra.mxu0 0.0
    %1064 = vmatprep.subr.mxu0 0.0
    %1065 = vmatpush1.msra.mxu0 0.0
    %1066 = vmatprep.subr.mxu0 0.0
    %1067 = vmatpush1.msra.mxu0 0.0
    %1068 = vmatprep.subr.mxu0 0.0
    %1069 = vmatpush1.msra.mxu0 0.0
    %1070 = vmatprep.subr.mxu0 0.0
    %1071 = vmatpush1.msra.mxu0 0.0
    %1072 = vmatprep.subr.mxu0 0.0
    %1073 = vmatpush1.msra.mxu0 0.0
    %1074 = vmatprep.subr.mxu0 0.0
    %1075 = vmatpush1.msra.mxu0 0.0
    %1076 = vmatprep.subr.mxu0 0.0
    %1077 = vmatpush1.msra.mxu0 0.0
    %1078 = vmatprep.subr.mxu0 0.0
    %1079 = vmatpush1.msra.mxu0 0.0
    %1080 = vmatprep.subr.mxu0 0.0
    %1081 = vmatpush1.msra.mxu0 0.0
    %1082 = vmatprep.subr.mxu0 0.0
    %1083 = vmatpush1.msra.mxu0 0.0
    %1084 = vmatprep.subr.mxu0 0.0
    %1085 = vmatpush1.msra.mxu0 0.0
    %1086 = vmatprep.subr.mxu0 0.0
    %1087 = vmatpush1.msra.mxu0 0.0
    %1088 = vmatprep.subr.mxu0 0.0
    %1089 = vmatpush1.msra.mxu0 0.0
    %1090 = vmatprep.subr.mxu0 0.0
    %1091 = vmatpush1.msra.mxu0 0.0
    %1092 = vmatprep.subr.mxu0 0.0
    %1093 = vmatpush1.msra.mxu0 0.0
    %1094 = vmatprep.subr.mxu0 0.0
    %1095 = vmatpush1.msra.mxu0 0.0
    %1096 = vmatprep.subr.mxu0 0.0
    %1097 = vmatpush1.msra.mxu0 0.0
    %1098 = vmatprep.subr.mxu0 0.0
    %1099 = vmatpush1.msra.mxu0 0.0
    %1100 = vmatprep.mubr.f32.mxu0 0.0
    %1101 = vmatmul.mubr.f32.gmra.mrb[0].mxu0 %v1034
    %v1102 = vpop.f32.mrb[0].mxu0
    %v1103 = vadd.f32 %v1031, %v1102
    %v1104 = vpop.f32.mrb[0].mxu0
    %1105 = vdwg.mxu0
    %v1106 = vld [vmem:[%s310] sm:$0xff]
    %v1107 = vld [vmem:[%s310 + $0x8] sm:$0xff]
    %v1108 = vld [vmem:[%s310 + $0x10] sm:$0xff]
    %v1109 = vld [vmem:[%s310 + $0x18] sm:$0xff]
    %v1110 = vld [vmem:[%s315] sm:$0x1]
    %v1112 = vlaneseq
    %v1113 = vshrl.u32 %v1112, 7
    %v1114 = vsub.s32 0, %v1113
    %v1115 = vrot.slane %v1110, %v1114
    %v1117 = vsel %vm124, %v825, 0
    %1119 = vmatprep.subr.mxu0 0.0
    %1120 = vmatpush1.msra.mxu0 %v1106
    %1121 = vmatprep.subr.mxu0 0.0
    %1122 = vmatpush1.msra.mxu0 %v1107
    %1123 = vmatprep.subr.mxu0 0.0
    %1124 = vmatpush1.msra.mxu0 %v1108
    %1125 = vmatprep.subr.mxu0 0.0
    %1126 = vmatpush1.msra.mxu0 %v1109
    %1127 = vmatprep.subr.mxu0 0.0
    %1128 = vmatpush1.msra.mxu0 0.0
    %1129 = vmatprep.subr.mxu0 0.0
    %1130 = vmatpush1.msra.mxu0 0.0
    %1131 = vmatprep.subr.mxu0 0.0
    %1132 = vmatpush1.msra.mxu0 0.0
    %1133 = vmatprep.subr.mxu0 0.0
    %1134 = vmatpush1.msra.mxu0 0.0
    %1135 = vmatprep.subr.mxu0 0.0
    %1136 = vmatpush1.msra.mxu0 0.0
    %1137 = vmatprep.subr.mxu0 0.0
    %1138 = vmatpush1.msra.mxu0 0.0
    %1139 = vmatprep.subr.mxu0 0.0
    %1140 = vmatpush1.msra.mxu0 0.0
    %1141 = vmatprep.subr.mxu0 0.0
    %1142 = vmatpush1.msra.mxu0 0.0
    %1143 = vmatprep.subr.mxu0 0.0
    %1144 = vmatpush1.msra.mxu0 0.0
    %1145 = vmatprep.subr.mxu0 0.0
    %1146 = vmatpush1.msra.mxu0 0.0
    %1147 = vmatprep.subr.mxu0 0.0
    %1148 = vmatpush1.msra.mxu0 0.0
    %1149 = vmatprep.subr.mxu0 0.0
    %1150 = vmatpush1.msra.mxu0 0.0
    %1151 = vmatprep.subr.mxu0 0.0
    %1152 = vmatpush1.msra.mxu0 0.0
    %1153 = vmatprep.subr.mxu0 0.0
    %1154 = vmatpush1.msra.mxu0 0.0
    %1155 = vmatprep.subr.mxu0 0.0
    %1156 = vmatpush1.msra.mxu0 0.0
    %1157 = vmatprep.subr.mxu0 0.0
    %1158 = vmatpush1.msra.mxu0 0.0
    %1159 = vmatprep.subr.mxu0 0.0
    %1160 = vmatpush1.msra.mxu0 0.0
    %1161 = vmatprep.subr.mxu0 0.0
    %1162 = vmatpush1.msra.mxu0 0.0
    %1163 = vmatprep.subr.mxu0 0.0
    %1164 = vmatpush1.msra.mxu0 0.0
    %1165 = vmatprep.subr.mxu0 0.0
    %1166 = vmatpush1.msra.mxu0 0.0
    %1167 = vmatprep.subr.mxu0 0.0
    %1168 = vmatpush1.msra.mxu0 0.0
    %1169 = vmatprep.subr.mxu0 0.0
    %1170 = vmatpush1.msra.mxu0 0.0
    %1171 = vmatprep.subr.mxu0 0.0
    %1172 = vmatpush1.msra.mxu0 0.0
    %1173 = vmatprep.subr.mxu0 0.0
    %1174 = vmatpush1.msra.mxu0 0.0
    %1175 = vmatprep.subr.mxu0 0.0
    %1176 = vmatpush1.msra.mxu0 0.0
    %1177 = vmatprep.subr.mxu0 0.0
    %1178 = vmatpush1.msra.mxu0 0.0
    %1179 = vmatprep.subr.mxu0 0.0
    %1180 = vmatpush1.msra.mxu0 0.0
    %1181 = vmatprep.subr.mxu0 0.0
    %1182 = vmatpush1.msra.mxu0 0.0
    %1183 = vmatprep.mubr.f32.mxu0 0.0
    %1184 = vmatmul.mubr.f32.gmra.mrb[0].mxu0 %v1117
    %v1185 = vpop.f32.mrb[0].mxu0
    %v1186 = vadd.f32 %v1115, %v1185
    %v1187 = vpop.f32.mrb[0].mxu0
    %1188 = vdwg.mxu0
    %v1189 = vadd.f32 %v1103, %v1186
    %v1190 = vxor.u32 %v1189, 2147483648
    %v1191 = vmul.f32 %v1190, 1.442695
    %v1192 = vpow.pop %v1191
    %v1193 = vadd.f32 %v1192, 1.0
    %v1194 = vrcp.pop %v1193
    %v1195 = vmul.f32 1.0, %v1194
    %1197 = vrot.lane.b32.xlu0 %v1186, 64
    %v1198 = vpop.permute.xlu0 %1197
    %v1200 = vmul.f32 %v1195, %v1198
    %1202 = vrot.lane.b32.xlu0 %v1200, 64
    %v1203 = vpop.permute.xlu0 %1202
    %v1205 = vadd.f32 %v1103, %v1203
    %v1206 = vtanh.pop %v1205
    %v1207 = vsub.f32 1.0, %v1195
    %1209 = vrot.lane.b32.xlu0 %v1206, 96
    %v1210 = vpop.permute.xlu0 %1209
    %v1212 = vmul.f32 %v1207, %v1210
    %v1213 = vmul.f32 %v1195, %v816
    %v1214 = vadd.f32 %v1212, %v1213
    %1216 = vrot.lane.b32.xlu0 %v1021, 96
    %v1217 = vpop.permute.xlu0 %1216
    %s1219 = scalar_lea.vmem [#allocation2], 4
    %1220 = vst.msk [vmem:[%s1219] sm:$0x3] %vm423, %v1217
    %1222 = vrot.lane.b32.xlu0 %v1214, 96
    %v1223 = vpop.permute.xlu0 %1222
    %s1225 = scalar_lea.vmem [#allocation3], 10
    %1226 = vst.msk [vmem:[%s1225] sm:$0x3] %vm423, %v1223
    %s1227 = scalar_lea.vmem %s0, 6
    %v1228 = vld [vmem:[%s1227] sm:$0x3]
    %v1229 = vld [vmem:[%s1] sm:$0xff]
    %v1230 = vld [vmem:[%s1 + $0x8] sm:$0xff]
    %v1231 = vld [vmem:[%s3] sm:$0x1]
    %v1233 = vlaneseq
    %v1234 = vshrl.u32 %v1233, 7
    %v1235 = vsub.s32 0, %v1234
    %v1236 = vrot.slane %v1231, %v1235
    %v1239 = vsel %vm39, %v1228, 0
    %1241 = vmatprep.subr.mxu0 0.0
    %1242 = vmatpush1.msra.mxu0 %v1229
    %1243 = vmatprep.subr.mxu0 0.0
    %1244 = vmatpush1.msra.mxu0 %v1230
    %1245 = vmatprep.subr.mxu0 0.0
    %1246 = vmatpush1.msra.mxu0 0.0
    %1247 = vmatprep.subr.mxu0 0.0
    %1248 = vmatpush1.msra.mxu0 0.0
    %1249 = vmatprep.subr.mxu0 0.0
    %1250 = vmatpush1.msra.mxu0 0.0
    %1251 = vmatprep.subr.mxu0 0.0
    %1252 = vmatpush1.msra.mxu0 0.0
    %1253 = vmatprep.subr.mxu0 0.0
    %1254 = vmatpush1.msra.mxu0 0.0
    %1255 = vmatprep.subr.mxu0 0.0
    %1256 = vmatpush1.msra.mxu0 0.0
    %1257 = vmatprep.subr.mxu0 0.0
    %1258 = vmatpush1.msra.mxu0 0.0
    %1259 = vmatprep.subr.mxu0 0.0
    %1260 = vmatpush1.msra.mxu0 0.0
    %1261 = vmatprep.subr.mxu0 0.0
    %1262 = vmatpush1.msra.mxu0 0.0
    %1263 = vmatprep.subr.mxu0 0.0
    %1264 = vmatpush1.msra.mxu0 0.0
    %1265 = vmatprep.subr.mxu0 0.0
    %1266 = vmatpush1.msra.mxu0 0.0
    %1267 = vmatprep.subr.mxu0 0.0
    %1268 = vmatpush1.msra.mxu0 0.0
    %1269 = vmatprep.subr.mxu0 0.0
    %1270 = vmatpush1.msra.mxu0 0.0
    %1271 = vmatprep.subr.mxu0 0.0
    %1272 = vmatpush1.msra.mxu0 0.0
    %1273 = vmatprep.subr.mxu0 0.0
    %1274 = vmatpush1.msra.mxu0 0.0
    %1275 = vmatprep.subr.mxu0 0.0
    %1276 = vmatpush1.msra.mxu0 0.0
    %1277 = vmatprep.subr.mxu0 0.0
    %1278 = vmatpush1.msra.mxu0 0.0
    %1279 = vmatprep.subr.mxu0 0.0
    %1280 = vmatpush1.msra.mxu0 0.0
    %1281 = vmatprep.subr.mxu0 0.0
    %1282 = vmatpush1.msra.mxu0 0.0
    %1283 = vmatprep.subr.mxu0 0.0
    %1284 = vmatpush1.msra.mxu0 0.0
    %1285 = vmatprep.subr.mxu0 0.0
    %1286 = vmatpush1.msra.mxu0 0.0
    %1287 = vmatprep.subr.mxu0 0.0
    %1288 = vmatpush1.msra.mxu0 0.0
    %1289 = vmatprep.subr.mxu0 0.0
    %1290 = vmatpush1.msra.mxu0 0.0
    %1291 = vmatprep.subr.mxu0 0.0
    %1292 = vmatpush1.msra.mxu0 0.0
    %1293 = vmatprep.subr.mxu0 0.0
    %1294 = vmatpush1.msra.mxu0 0.0
    %1295 = vmatprep.subr.mxu0 0.0
    %1296 = vmatpush1.msra.mxu0 0.0
    %1297 = vmatprep.subr.mxu0 0.0
    %1298 = vmatpush1.msra.mxu0 0.0
    %1299 = vmatprep.subr.mxu0 0.0
    %1300 = vmatpush1.msra.mxu0 0.0
    %1301 = vmatprep.subr.mxu0 0.0
    %1302 = vmatpush1.msra.mxu0 0.0
    %1303 = vmatprep.subr.mxu0 0.0
    %1304 = vmatpush1.msra.mxu0 0.0
    %1305 = vmatprep.mubr.f32.mxu0 0.0
    %1306 = vmatmul.mubr.f32.gmra.mrb[0].mxu0 %v1239
    %v1307 = vpop.f32.mrb[0].mxu0
    %v1308 = vadd.f32 %v1236, %v1307
    %v1309 = vpop.f32.mrb[0].mxu0
    %1310 = vdwg.mxu0
    %v1311 = vld [vmem:[%s2] sm:$0xff]
    %v1312 = vld [vmem:[%s2 + $0x8] sm:$0xff]
    %v1313 = vld [vmem:[%s2 + $0x10] sm:$0xff]
    %v1314 = vld [vmem:[%s2 + $0x18] sm:$0xff]
    %v1315 = vld [vmem:[%s4] sm:$0x1]
    %v1317 = vlaneseq
    %v1318 = vshrl.u32 %v1317, 7
    %v1319 = vsub.s32 0, %v1318
    %v1320 = vrot.slane %v1315, %v1319
    %v1322 = vsel %vm124, %v1217, 0
    %1324 = vmatprep.subr.mxu0 0.0
    %1325 = vmatpush1.msra.mxu0 %v1311
    %1326 = vmatprep.subr.mxu0 0.0
    %1327 = vmatpush1.msra.mxu0 %v1312
    %1328 = vmatprep.subr.mxu0 0.0
    %1329 = vmatpush1.msra.mxu0 %v1313
    %1330 = vmatprep.subr.mxu0 0.0
    %1331 = vmatpush1.msra.mxu0 %v1314
    %1332 = vmatprep.subr.mxu0 0.0
    %1333 = vmatpush1.msra.mxu0 0.0
    %1334 = vmatprep.subr.mxu0 0.0
    %1335 = vmatpush1.msra.mxu0 0.0
    %1336 = vmatprep.subr.mxu0 0.0
    %1337 = vmatpush1.msra.mxu0 0.0
    %1338 = vmatprep.subr.mxu0 0.0
    %1339 = vmatpush1.msra.mxu0 0.0
    %1340 = vmatprep.subr.mxu0 0.0
    %1341 = vmatpush1.msra.mxu0 0.0
    %1342 = vmatprep.subr.mxu0 0.0
    %1343 = vmatpush1.msra.mxu0 0.0
    %1344 = vmatprep.subr.mxu0 0.0
    %1345 = vmatpush1.msra.mxu0 0.0
    %1346 = vmatprep.subr.mxu0 0.0
    %1347 = vmatpush1.msra.mxu0 0.0
    %1348 = vmatprep.subr.mxu0 0.0
    %1349 = vmatpush1.msra.mxu0 0.0
    %1350 = vmatprep.subr.mxu0 0.0
    %1351 = vmatpush1.msra.mxu0 0.0
    %1352 = vmatprep.subr.mxu0 0.0
    %1353 = vmatpush1.msra.mxu0 0.0
    %1354 = vmatprep.subr.mxu0 0.0
    %1355 = vmatpush1.msra.mxu0 0.0
    %1356 = vmatprep.subr.mxu0 0.0
    %1357 = vmatpush1.msra.mxu0 0.0
    %1358 = vmatprep.subr.mxu0 0.0
    %1359 = vmatpush1.msra.mxu0 0.0
    %1360 = vmatprep.subr.mxu0 0.0
    %1361 = vmatpush1.msra.mxu0 0.0
    %1362 = vmatprep.subr.mxu0 0.0
    %1363 = vmatpush1.msra.mxu0 0.0
    %1364 = vmatprep.subr.mxu0 0.0
    %1365 = vmatpush1.msra.mxu0 0.0
    %1366 = vmatprep.subr.mxu0 0.0
    %1367 = vmatpush1.msra.mxu0 0.0
    %1368 = vmatprep.subr.mxu0 0.0
    %1369 = vmatpush1.msra.mxu0 0.0
    %1370 = vmatprep.subr.mxu0 0.0
    %1371 = vmatpush1.msra.mxu0 0.0
    %1372 = vmatprep.subr.mxu0 0.0
    %1373 = vmatpush1.msra.mxu0 0.0
    %1374 = vmatprep.subr.mxu0 0.0
    %1375 = vmatpush1.msra.mxu0 0.0
    %1376 = vmatprep.subr.mxu0 0.0
    %1377 = vmatpush1.msra.mxu0 0.0
    %1378 = vmatprep.subr.mxu0 0.0
    %1379 = vmatpush1.msra.mxu0 0.0
    %1380 = vmatprep.subr.mxu0 0.0
    %1381 = vmatpush1.msra.mxu0 0.0
    %1382 = vmatprep.subr.mxu0 0.0
    %1383 = vmatpush1.msra.mxu0 0.0
    %1384 = vmatprep.subr.mxu0 0.0
    %1385 = vmatpush1.msra.mxu0 0.0
    %1386 = vmatprep.subr.mxu0 0.0
    %1387 = vmatpush1.msra.mxu0 0.0
    %1388 = vmatprep.mubr.f32.mxu0 0.0
    %1389 = vmatmul.mubr.f32.gmra.mrb[0].mxu0 %v1322
    %v1390 = vpop.f32.mrb[0].mxu0
    %v1391 = vadd.f32 %v1320, %v1390
    %v1392 = vpop.f32.mrb[0].mxu0
    %1393 = vdwg.mxu0
    %v1394 = vadd.f32 %v1308, %v1391
    %v1395 = vxor.u32 %v1394, 2147483648
    %v1396 = vmul.f32 %v1395, 1.442695
    %v1397 = vpow.pop %v1396
    %v1398 = vadd.f32 %v1397, 1.0
    %v1399 = vrcp.pop %v1398
    %v1400 = vmul.f32 1.0, %v1399
    %1402 = vrot.lane.b32.xlu0 %v1391, 64
    %v1403 = vpop.permute.xlu0 %1402
    %v1405 = vmul.f32 %v1400, %v1403
    %1407 = vrot.lane.b32.xlu0 %v1405, 64
    %v1408 = vpop.permute.xlu0 %1407
    %v1410 = vadd.f32 %v1308, %v1408
    %v1411 = vtanh.pop %v1410
    %v1412 = vsub.f32 1.0, %v1400
    %1414 = vrot.lane.b32.xlu0 %v1411, 96
    %v1415 = vpop.permute.xlu0 %1414
    %v1417 = vmul.f32 %v1412, %v1415
    %v1418 = vmul.f32 %v1400, %v1021
    %v1419 = vadd.f32 %v1417, %v1418
    %s1420 = scalar_lea.vmem %s0, 22
    %v1421 = vld [vmem:[%s1420] sm:$0x3]
    %v1422 = vld [vmem:[%s226] sm:$0xff]
    %v1423 = vld [vmem:[%s226 + $0x8] sm:$0xff]
    %v1424 = vld [vmem:[%s229] sm:$0x1]
    %v1426 = vlaneseq
    %v1427 = vshrl.u32 %v1426, 7
    %v1428 = vsub.s32 0, %v1427
    %v1429 = vrot.slane %v1424, %v1428
    %v1432 = vsel %vm39, %v1421, 0
    %1434 = vmatprep.subr.mxu0 0.0
    %1435 = vmatpush1.msra.mxu0 %v1422
    %1436 = vmatprep.subr.mxu0 0.0
    %1437 = vmatpush1.msra.mxu0 %v1423
    %1438 = vmatprep.subr.mxu0 0.0
    %1439 = vmatpush1.msra.mxu0 0.0
    %1440 = vmatprep.subr.mxu0 0.0
    %1441 = vmatpush1.msra.mxu0 0.0
    %1442 = vmatprep.subr.mxu0 0.0
    %1443 = vmatpush1.msra.mxu0 0.0
    %1444 = vmatprep.subr.mxu0 0.0
    %1445 = vmatpush1.msra.mxu0 0.0
    %1446 = vmatprep.subr.mxu0 0.0
    %1447 = vmatpush1.msra.mxu0 0.0
    %1448 = vmatprep.subr.mxu0 0.0
    %1449 = vmatpush1.msra.mxu0 0.0
    %1450 = vmatprep.subr.mxu0 0.0
    %1451 = vmatpush1.msra.mxu0 0.0
    %1452 = vmatprep.subr.mxu0 0.0
    %1453 = vmatpush1.msra.mxu0 0.0
    %1454 = vmatprep.subr.mxu0 0.0
    %1455 = vmatpush1.msra.mxu0 0.0
    %1456 = vmatprep.subr.mxu0 0.0
    %1457 = vmatpush1.msra.mxu0 0.0
    %1458 = vmatprep.subr.mxu0 0.0
    %1459 = vmatpush1.msra.mxu0 0.0
    %1460 = vmatprep.subr.mxu0 0.0
    %1461 = vmatpush1.msra.mxu0 0.0
    %1462 = vmatprep.subr.mxu0 0.0
    %1463 = vmatpush1.msra.mxu0 0.0
    %1464 = vmatprep.subr.mxu0 0.0
    %1465 = vmatpush1.msra.mxu0 0.0
    %1466 = vmatprep.subr.mxu0 0.0
    %1467 = vmatpush1.msra.mxu0 0.0
    %1468 = vmatprep.subr.mxu0 0.0
    %1469 = vmatpush1.msra.mxu0 0.0
    %1470 = vmatprep.subr.mxu0 0.0
    %1471 = vmatpush1.msra.mxu0 0.0
    %1472 = vmatprep.subr.mxu0 0.0
    %1473 = vmatpush1.msra.mxu0 0.0
    %1474 = vmatprep.subr.mxu0 0.0
    %1475 = vmatpush1.msra.mxu0 0.0
    %1476 = vmatprep.subr.mxu0 0.0
    %1477 = vmatpush1.msra.mxu0 0.0
    %1478 = vmatprep.subr.mxu0 0.0
    %1479 = vmatpush1.msra.mxu0 0.0
    %1480 = vmatprep.subr.mxu0 0.0
    %1481 = vmatpush1.msra.mxu0 0.0
    %1482 = vmatprep.subr.mxu0 0.0
    %1483 = vmatpush1.msra.mxu0 0.0
    %1484 = vmatprep.subr.mxu0 0.0
    %1485 = vmatpush1.msra.mxu0 0.0
    %1486 = vmatprep.subr.mxu0 0.0
    %1487 = vmatpush1.msra.mxu0 0.0
    %1488 = vmatprep.subr.mxu0 0.0
    %1489 = vmatpush1.msra.mxu0 0.0
    %1490 = vmatprep.subr.mxu0 0.0
    %1491 = vmatpush1.msra.mxu0 0.0
    %1492 = vmatprep.subr.mxu0 0.0
    %1493 = vmatpush1.msra.mxu0 0.0
    %1494 = vmatprep.subr.mxu0 0.0
    %1495 = vmatpush1.msra.mxu0 0.0
    %1496 = vmatprep.subr.mxu0 0.0
    %1497 = vmatpush1.msra.mxu0 0.0
    %1498 = vmatprep.mubr.f32.mxu0 0.0
    %1499 = vmatmul.mubr.f32.gmra.mrb[0].mxu0 %v1432
    %v1500 = vpop.f32.mrb[0].mxu0
    %v1501 = vadd.f32 %v1429, %v1500
    %v1502 = vpop.f32.mrb[0].mxu0
    %1503 = vdwg.mxu0
    %v1504 = vld [vmem:[%s310] sm:$0xff]
    %v1505 = vld [vmem:[%s310 + $0x8] sm:$0xff]
    %v1506 = vld [vmem:[%s310 + $0x10] sm:$0xff]
    %v1507 = vld [vmem:[%s310 + $0x18] sm:$0xff]
    %v1508 = vld [vmem:[%s315] sm:$0x1]
    %v1510 = vlaneseq
    %v1511 = vshrl.u32 %v1510, 7
    %v1512 = vsub.s32 0, %v1511
    %v1513 = vrot.slane %v1508, %v1512
    %v1515 = vsel %vm124, %v1223, 0
    %1517 = vmatprep.subr.mxu0 0.0
    %1518 = vmatpush1.msra.mxu0 %v1504
    %1519 = vmatprep.subr.mxu0 0.0
    %1520 = vmatpush1.msra.mxu0 %v1505
    %1521 = vmatprep.subr.mxu0 0.0
    %1522 = vmatpush1.msra.mxu0 %v1506
    %1523 = vmatprep.subr.mxu0 0.0
    %1524 = vmatpush1.msra.mxu0 %v1507
    %1525 = vmatprep.subr.mxu0 0.0
    %1526 = vmatpush1.msra.mxu0 0.0
    %1527 = vmatprep.subr.mxu0 0.0
    %1528 = vmatpush1.msra.mxu0 0.0
    %1529 = vmatprep.subr.mxu0 0.0
    %1530 = vmatpush1.msra.mxu0 0.0
    %1531 = vmatprep.subr.mxu0 0.0
    %1532 = vmatpush1.msra.mxu0 0.0
    %1533 = vmatprep.subr.mxu0 0.0
    %1534 = vmatpush1.msra.mxu0 0.0
    %1535 = vmatprep.subr.mxu0 0.0
    %1536 = vmatpush1.msra.mxu0 0.0
    %1537 = vmatprep.subr.mxu0 0.0
    %1538 = vmatpush1.msra.mxu0 0.0
    %1539 = vmatprep.subr.mxu0 0.0
    %1540 = vmatpush1.msra.mxu0 0.0
    %1541 = vmatprep.subr.mxu0 0.0
    %1542 = vmatpush1.msra.mxu0 0.0
    %1543 = vmatprep.subr.mxu0 0.0
    %1544 = vmatpush1.msra.mxu0 0.0
    %1545 = vmatprep.subr.mxu0 0.0
    %1546 = vmatpush1.msra.mxu0 0.0
    %1547 = vmatprep.subr.mxu0 0.0
    %1548 = vmatpush1.msra.mxu0 0.0
    %1549 = vmatprep.subr.mxu0 0.0
    %1550 = vmatpush1.msra.mxu0 0.0
    %1551 = vmatprep.subr.mxu0 0.0
    %1552 = vmatpush1.msra.mxu0 0.0
    %1553 = vmatprep.subr.mxu0 0.0
    %1554 = vmatpush1.msra.mxu0 0.0
    %1555 = vmatprep.subr.mxu0 0.0
    %1556 = vmatpush1.msra.mxu0 0.0
    %1557 = vmatprep.subr.mxu0 0.0
    %1558 = vmatpush1.msra.mxu0 0.0
    %1559 = vmatprep.subr.mxu0 0.0
    %1560 = vmatpush1.msra.mxu0 0.0
    %1561 = vmatprep.subr.mxu0 0.0
    %1562 = vmatpush1.msra.mxu0 0.0
    %1563 = vmatprep.subr.mxu0 0.0
    %1564 = vmatpush1.msra.mxu0 0.0
    %1565 = vmatprep.subr.mxu0 0.0
    %1566 = vmatpush1.msra.mxu0 0.0
    %1567 = vmatprep.subr.mxu0 0.0
    %1568 = vmatpush1.msra.mxu0 0.0
    %1569 = vmatprep.subr.mxu0 0.0
    %1570 = vmatpush1.msra.mxu0 0.0
    %1571 = vmatprep.subr.mxu0 0.0
    %1572 = vmatpush1.msra.mxu0 0.0
    %1573 = vmatprep.subr.mxu0 0.0
    %1574 = vmatpush1.msra.mxu0 0.0
    %1575 = vmatprep.subr.mxu0 0.0
    %1576 = vmatpush1.msra.mxu0 0.0
    %1577 = vmatprep.subr.mxu0 0.0
    %1578 = vmatpush1.msra.mxu0 0.0
    %1579 = vmatprep.subr.mxu0 0.0
    %1580 = vmatpush1.msra.mxu0 0.0
    %1581 = vmatprep.mubr.f32.mxu0 0.0
    %1582 = vmatmul.mubr.f32.gmra.mrb[0].mxu0 %v1515
    %v1583 = vpop.f32.mrb[0].mxu0
    %v1584 = vadd.f32 %v1513, %v1583
    %v1585 = vpop.f32.mrb[0].mxu0
    %1586 = vdwg.mxu0
    %v1587 = vadd.f32 %v1501, %v1584
    %v1588 = vxor.u32 %v1587, 2147483648
    %v1589 = vmul.f32 %v1588, 1.442695
    %v1590 = vpow.pop %v1589
    %v1591 = vadd.f32 %v1590, 1.0
    %v1592 = vrcp.pop %v1591
    %v1593 = vmul.f32 1.0, %v1592
    %1595 = vrot.lane.b32.xlu0 %v1584, 64
    %v1596 = vpop.permute.xlu0 %1595
    %v1598 = vmul.f32 %v1593, %v1596
    %1600 = vrot.lane.b32.xlu0 %v1598, 64
    %v1601 = vpop.permute.xlu0 %1600
    %v1603 = vadd.f32 %v1501, %v1601
    %v1604 = vtanh.pop %v1603
    %v1605 = vsub.f32 1.0, %v1593
    %1607 = vrot.lane.b32.xlu0 %v1604, 96
    %v1608 = vpop.permute.xlu0 %1607
    %v1610 = vmul.f32 %v1605, %v1608
    %v1611 = vmul.f32 %v1593, %v1214
    %v1612 = vadd.f32 %v1610, %v1611
    %1614 = vrot.lane.b32.xlu0 %v1419, 96
    %v1615 = vpop.permute.xlu0 %1614
    %s1617 = scalar_lea.vmem [#allocation2], 6
    %1618 = vst.msk [vmem:[%s1617] sm:$0x3] %vm423, %v1615
    %1620 = vrot.lane.b32.xlu0 %v1612, 96
    %v1621 = vpop.permute.xlu0 %1620
    %s1623 = scalar_lea.vmem [#allocation3], 8
    %1624 = vst.msk [vmem:[%s1623] sm:$0x3] %vm423, %v1621
    %s1625 = scalar_lea.vmem %s0, 8
    %v1626 = vld [vmem:[%s1625] sm:$0x3]
    %v1627 = vld [vmem:[%s1] sm:$0xff]
    %v1628 = vld [vmem:[%s1 + $0x8] sm:$0xff]
    %v1629 = vld [vmem:[%s3] sm:$0x1]
    %v1631 = vlaneseq
    %v1632 = vshrl.u32 %v1631, 7
    %v1633 = vsub.s32 0, %v1632
    %v1634 = vrot.slane %v1629, %v1633
    %v1637 = vsel %vm39, %v1626, 0
    %1639 = vmatprep.subr.mxu0 0.0
    %1640 = vmatpush1.msra.mxu0 %v1627
    %1641 = vmatprep.subr.mxu0 0.0
    %1642 = vmatpush1.msra.mxu0 %v1628
    %1643 = vmatprep.subr.mxu0 0.0
    %1644 = vmatpush1.msra.mxu0 0.0
    %1645 = vmatprep.subr.mxu0 0.0
    %1646 = vmatpush1.msra.mxu0 0.0
    %1647 = vmatprep.subr.mxu0 0.0
    %1648 = vmatpush1.msra.mxu0 0.0
    %1649 = vmatprep.subr.mxu0 0.0
    %1650 = vmatpush1.msra.mxu0 0.0
    %1651 = vmatprep.subr.mxu0 0.0
    %1652 = vmatpush1.msra.mxu0 0.0
    %1653 = vmatprep.subr.mxu0 0.0
    %1654 = vmatpush1.msra.mxu0 0.0
    %1655 = vmatprep.subr.mxu0 0.0
    %1656 = vmatpush1.msra.mxu0 0.0
    %1657 = vmatprep.subr.mxu0 0.0
    %1658 = vmatpush1.msra.mxu0 0.0
    %1659 = vmatprep.subr.mxu0 0.0
    %1660 = vmatpush1.msra.mxu0 0.0
    %1661 = vmatprep.subr.mxu0 0.0
    %1662 = vmatpush1.msra.mxu0 0.0
    %1663 = vmatprep.subr.mxu0 0.0
    %1664 = vmatpush1.msra.mxu0 0.0
    %1665 = vmatprep.subr.mxu0 0.0
    %1666 = vmatpush1.msra.mxu0 0.0
    %1667 = vmatprep.subr.mxu0 0.0
    %1668 = vmatpush1.msra.mxu0 0.0
    %1669 = vmatprep.subr.mxu0 0.0
    %1670 = vmatpush1.msra.mxu0 0.0
    %1671 = vmatprep.subr.mxu0 0.0
    %1672 = vmatpush1.msra.mxu0 0.0
    %1673 = vmatprep.subr.mxu0 0.0
    %1674 = vmatpush1.msra.mxu0 0.0
    %1675 = vmatprep.subr.mxu0 0.0
    %1676 = vmatpush1.msra.mxu0 0.0
    %1677 = vmatprep.subr.mxu0 0.0
    %1678 = vmatpush1.msra.mxu0 0.0
    %1679 = vmatprep.subr.mxu0 0.0
    %1680 = vmatpush1.msra.mxu0 0.0
    %1681 = vmatprep.subr.mxu0 0.0
    %1682 = vmatpush1.msra.mxu0 0.0
    %1683 = vmatprep.subr.mxu0 0.0
    %1684 = vmatpush1.msra.mxu0 0.0
    %1685 = vmatprep.subr.mxu0 0.0
    %1686 = vmatpush1.msra.mxu0 0.0
    %1687 = vmatprep.subr.mxu0 0.0
    %1688 = vmatpush1.msra.mxu0 0.0
    %1689 = vmatprep.subr.mxu0 0.0
    %1690 = vmatpush1.msra.mxu0 0.0
    %1691 = vmatprep.subr.mxu0 0.0
    %1692 = vmatpush1.msra.mxu0 0.0
    %1693 = vmatprep.subr.mxu0 0.0
    %1694 = vmatpush1.msra.mxu0 0.0
    %1695 = vmatprep.subr.mxu0 0.0
    %1696 = vmatpush1.msra.mxu0 0.0
    %1697 = vmatprep.subr.mxu0 0.0
    %1698 = vmatpush1.msra.mxu0 0.0
    %1699 = vmatprep.subr.mxu0 0.0
    %1700 = vmatpush1.msra.mxu0 0.0
    %1701 = vmatprep.subr.mxu0 0.0
    %1702 = vmatpush1.msra.mxu0 0.0
    %1703 = vmatprep.mubr.f32.mxu0 0.0
    %1704 = vmatmul.mubr.f32.gmra.mrb[0].mxu0 %v1637
    %v1705 = vpop.f32.mrb[0].mxu0
    %v1706 = vadd.f32 %v1634, %v1705
    %v1707 = vpop.f32.mrb[0].mxu0
    %1708 = vdwg.mxu0
    %v1709 = vld [vmem:[%s2] sm:$0xff]
    %v1710 = vld [vmem:[%s2 + $0x8] sm:$0xff]
    %v1711 = vld [vmem:[%s2 + $0x10] sm:$0xff]
    %v1712 = vld [vmem:[%s2 + $0x18] sm:$0xff]
    %v1713 = vld [vmem:[%s4] sm:$0x1]
    %v1715 = vlaneseq
    %v1716 = vshrl.u32 %v1715, 7
    %v1717 = vsub.s32 0, %v1716
    %v1718 = vrot.slane %v1713, %v1717
    %v1720 = vsel %vm124, %v1615, 0
    %1722 = vmatprep.subr.mxu0 0.0
    %1723 = vmatpush1.msra.mxu0 %v1709
    %1724 = vmatprep.subr.mxu0 0.0
    %1725 = vmatpush1.msra.mxu0 %v1710
    %1726 = vmatprep.subr.mxu0 0.0
    %1727 = vmatpush1.msra.mxu0 %v1711
    %1728 = vmatprep.subr.mxu0 0.0
    %1729 = vmatpush1.msra.mxu0 %v1712
    %1730 = vmatprep.subr.mxu0 0.0
    %1731 = vmatpush1.msra.mxu0 0.0
    %1732 = vmatprep.subr.mxu0 0.0
    %1733 = vmatpush1.msra.mxu0 0.0
    %1734 = vmatprep.subr.mxu0 0.0
    %1735 = vmatpush1.msra.mxu0 0.0
    %1736 = vmatprep.subr.mxu0 0.0
    %1737 = vmatpush1.msra.mxu0 0.0
    %1738 = vmatprep.subr.mxu0 0.0
    %1739 = vmatpush1.msra.mxu0 0.0
    %1740 = vmatprep.subr.mxu0 0.0
    %1741 = vmatpush1.msra.mxu0 0.0
    %1742 = vmatprep.subr.mxu0 0.0
    %1743 = vmatpush1.msra.mxu0 0.0
    %1744 = vmatprep.subr.mxu0 0.0
    %1745 = vmatpush1.msra.mxu0 0.0
    %1746 = vmatprep.subr.mxu0 0.0
    %1747 = vmatpush1.msra.mxu0 0.0
    %1748 = vmatprep.subr.mxu0 0.0
    %1749 = vmatpush1.msra.mxu0 0.0
    %1750 = vmatprep.subr.mxu0 0.0
    %1751 = vmatpush1.msra.mxu0 0.0
    %1752 = vmatprep.subr.mxu0 0.0
    %1753 = vmatpush1.msra.mxu0 0.0
    %1754 = vmatprep.subr.mxu0 0.0
    %1755 = vmatpush1.msra.mxu0 0.0
    %1756 = vmatprep.subr.mxu0 0.0
    %1757 = vmatpush1.msra.mxu0 0.0
    %1758 = vmatprep.subr.mxu0 0.0
    %1759 = vmatpush1.msra.mxu0 0.0
    %1760 = vmatprep.subr.mxu0 0.0
    %1761 = vmatpush1.msra.mxu0 0.0
    %1762 = vmatprep.subr.mxu0 0.0
    %1763 = vmatpush1.msra.mxu0 0.0
    %1764 = vmatprep.subr.mxu0 0.0
    %1765 = vmatpush1.msra.mxu0 0.0
    %1766 = vmatprep.subr.mxu0 0.0
    %1767 = vmatpush1.msra.mxu0 0.0
    %1768 = vmatprep.subr.mxu0 0.0
    %1769 = vmatpush1.msra.mxu0 0.0
    %1770 = vmatprep.subr.mxu0 0.0
    %1771 = vmatpush1.msra.mxu0 0.0
    %1772 = vmatprep.subr.mxu0 0.0
    %1773 = vmatpush1.msra.mxu0 0.0
    %1774 = vmatprep.subr.mxu0 0.0
    %1775 = vmatpush1.msra.mxu0 0.0
    %1776 = vmatprep.subr.mxu0 0.0
    %1777 = vmatpush1.msra.mxu0 0.0
    %1778 = vmatprep.subr.mxu0 0.0
    %1779 = vmatpush1.msra.mxu0 0.0
    %1780 = vmatprep.subr.mxu0 0.0
    %1781 = vmatpush1.msra.mxu0 0.0
    %1782 = vmatprep.subr.mxu0 0.0
    %1783 = vmatpush1.msra.mxu0 0.0
    %1784 = vmatprep.subr.mxu0 0.0
    %1785 = vmatpush1.msra.mxu0 0.0
    %1786 = vmatprep.mubr.f32.mxu0 0.0
    %1787 = vmatmul.mubr.f32.gmra.mrb[0].mxu0 %v1720
    %v1788 = vpop.f32.mrb[0].mxu0
    %v1789 = vadd.f32 %v1718, %v1788
    %v1790 = vpop.f32.mrb[0].mxu0
    %1791 = vdwg.mxu0
    %v1792 = vadd.f32 %v1706, %v1789
    %v1793 = vxor.u32 %v1792, 2147483648
    %v1794 = vmul.f32 %v1793, 1.442695
    %v1795 = vpow.pop %v1794
    %v1796 = vadd.f32 %v1795, 1.0
    %v1797 = vrcp.pop %v1796
    %v1798 = vmul.f32 1.0, %v1797
    %1800 = vrot.lane.b32.xlu0 %v1789, 64
    %v1801 = vpop.permute.xlu0 %1800
    %v1803 = vmul.f32 %v1798, %v1801
    %1805 = vrot.lane.b32.xlu0 %v1803, 64
    %v1806 = vpop.permute.xlu0 %1805
    %v1808 = vadd.f32 %v1706, %v1806
    %v1809 = vtanh.pop %v1808
    %v1810 = vsub.f32 1.0, %v1798
    %1812 = vrot.lane.b32.xlu0 %v1809, 96
    %v1813 = vpop.permute.xlu0 %1812
    %v1815 = vmul.f32 %v1810, %v1813
    %v1816 = vmul.f32 %v1798, %v1419
    %v1817 = vadd.f32 %v1815, %v1816
    %s1818 = scalar_lea.vmem %s0, 24
    %v1819 = vld [vmem:[%s1818] sm:$0x3]
    %v1820 = vld [vmem:[%s226] sm:$0xff]
    %v1821 = vld [vmem:[%s226 + $0x8] sm:$0xff]
    %v1822 = vld [vmem:[%s229] sm:$0x1]
    %v1824 = vlaneseq
    %v1825 = vshrl.u32 %v1824, 7
    %v1826 = vsub.s32 0, %v1825
    %v1827 = vrot.slane %v1822, %v1826
    %v1830 = vsel %vm39, %v1819, 0
    %1832 = vmatprep.subr.mxu0 0.0
    %1833 = vmatpush1.msra.mxu0 %v1820
    %1834 = vmatprep.subr.mxu0 0.0
    %1835 = vmatpush1.msra.mxu0 %v1821
    %1836 = vmatprep.subr.mxu0 0.0
    %1837 = vmatpush1.msra.mxu0 0.0
    %1838 = vmatprep.subr.mxu0 0.0
    %1839 = vmatpush1.msra.mxu0 0.0
    %1840 = vmatprep.subr.mxu0 0.0
    %1841 = vmatpush1.msra.mxu0 0.0
    %1842 = vmatprep.subr.mxu0 0.0
    %1843 = vmatpush1.msra.mxu0 0.0
    %1844 = vmatprep.subr.mxu0 0.0
    %1845 = vmatpush1.msra.mxu0 0.0
    %1846 = vmatprep.subr.mxu0 0.0
    %1847 = vmatpush1.msra.mxu0 0.0
    %1848 = vmatprep.subr.mxu0 0.0
    %1849 = vmatpush1.msra.mxu0 0.0
    %1850 = vmatprep.subr.mxu0 0.0
    %1851 = vmatpush1.msra.mxu0 0.0
    %1852 = vmatprep.subr.mxu0 0.0
    %1853 = vmatpush1.msra.mxu0 0.0
    %1854 = vmatprep.subr.mxu0 0.0
    %1855 = vmatpush1.msra.mxu0 0.0
    %1856 = vmatprep.subr.mxu0 0.0
    %1857 = vmatpush1.msra.mxu0 0.0
    %1858 = vmatprep.subr.mxu0 0.0
    %1859 = vmatpush1.msra.mxu0 0.0
    %1860 = vmatprep.subr.mxu0 0.0
    %1861 = vmatpush1.msra.mxu0 0.0
    %1862 = vmatprep.subr.mxu0 0.0
    %1863 = vmatpush1.msra.mxu0 0.0
    %1864 = vmatprep.subr.mxu0 0.0
    %1865 = vmatpush1.msra.mxu0 0.0
    %1866 = vmatprep.subr.mxu0 0.0
    %1867 = vmatpush1.msra.mxu0 0.0
    %1868 = vmatprep.subr.mxu0 0.0
    %1869 = vmatpush1.msra.mxu0 0.0
    %1870 = vmatprep.subr.mxu0 0.0
    %1871 = vmatpush1.msra.mxu0 0.0
    %1872 = vmatprep.subr.mxu0 0.0
    %1873 = vmatpush1.msra.mxu0 0.0
    %1874 = vmatprep.subr.mxu0 0.0
    %1875 = vmatpush1.msra.mxu0 0.0
    %1876 = vmatprep.subr.mxu0 0.0
    %1877 = vmatpush1.msra.mxu0 0.0
    %1878 = vmatprep.subr.mxu0 0.0
    %1879 = vmatpush1.msra.mxu0 0.0
    %1880 = vmatprep.subr.mxu0 0.0
    %1881 = vmatpush1.msra.mxu0 0.0
    %1882 = vmatprep.subr.mxu0 0.0
    %1883 = vmatpush1.msra.mxu0 0.0
    %1884 = vmatprep.subr.mxu0 0.0
    %1885 = vmatpush1.msra.mxu0 0.0
    %1886 = vmatprep.subr.mxu0 0.0
    %1887 = vmatpush1.msra.mxu0 0.0
    %1888 = vmatprep.subr.mxu0 0.0
    %1889 = vmatpush1.msra.mxu0 0.0
    %1890 = vmatprep.subr.mxu0 0.0
    %1891 = vmatpush1.msra.mxu0 0.0
    %1892 = vmatprep.subr.mxu0 0.0
    %1893 = vmatpush1.msra.mxu0 0.0
    %1894 = vmatprep.subr.mxu0 0.0
    %1895 = vmatpush1.msra.mxu0 0.0
    %1896 = vmatprep.mubr.f32.mxu0 0.0
    %1897 = vmatmul.mubr.f32.gmra.mrb[0].mxu0 %v1830
    %v1898 = vpop.f32.mrb[0].mxu0
    %v1899 = vadd.f32 %v1827, %v1898
    %v1900 = vpop.f32.mrb[0].mxu0
    %1901 = vdwg.mxu0
    %v1902 = vld [vmem:[%s310] sm:$0xff]
    %v1903 = vld [vmem:[%s310 + $0x8] sm:$0xff]
    %v1904 = vld [vmem:[%s310 + $0x10] sm:$0xff]
    %v1905 = vld [vmem:[%s310 + $0x18] sm:$0xff]
    %v1906 = vld [vmem:[%s315] sm:$0x1]
    %v1908 = vlaneseq
    %v1909 = vshrl.u32 %v1908, 7
    %v1910 = vsub.s32 0, %v1909
    %v1911 = vrot.slane %v1906, %v1910
    %v1913 = vsel %vm124, %v1621, 0
    %1915 = vmatprep.subr.mxu0 0.0
    %1916 = vmatpush1.msra.mxu0 %v1902
    %1917 = vmatprep.subr.mxu0 0.0
    %1918 = vmatpush1.msra.mxu0 %v1903
    %1919 = vmatprep.subr.mxu0 0.0
    %1920 = vmatpush1.msra.mxu0 %v1904
    %1921 = vmatprep.subr.mxu0 0.0
    %1922 = vmatpush1.msra.mxu0 %v1905
    %1923 = vmatprep.subr.mxu0 0.0
    %1924 = vmatpush1.msra.mxu0 0.0
    %1925 = vmatprep.subr.mxu0 0.0
    %1926 = vmatpush1.msra.mxu0 0.0
    %1927 = vmatprep.subr.mxu0 0.0
    %1928 = vmatpush1.msra.mxu0 0.0
    %1929 = vmatprep.subr.mxu0 0.0
    %1930 = vmatpush1.msra.mxu0 0.0
    %1931 = vmatprep.subr.mxu0 0.0
    %1932 = vmatpush1.msra.mxu0 0.0
    %1933 = vmatprep.subr.mxu0 0.0
    %1934 = vmatpush1.msra.mxu0 0.0
    %1935 = vmatprep.subr.mxu0 0.0
    %1936 = vmatpush1.msra.mxu0 0.0
    %1937 = vmatprep.subr.mxu0 0.0
    %1938 = vmatpush1.msra.mxu0 0.0
    %1939 = vmatprep.subr.mxu0 0.0
    %1940 = vmatpush1.msra.mxu0 0.0
    %1941 = vmatprep.subr.mxu0 0.0
    %1942 = vmatpush1.msra.mxu0 0.0
    %1943 = vmatprep.subr.mxu0 0.0
    %1944 = vmatpush1.msra.mxu0 0.0
    %1945 = vmatprep.subr.mxu0 0.0
    %1946 = vmatpush1.msra.mxu0 0.0
    %1947 = vmatprep.subr.mxu0 0.0
    %1948 = vmatpush1.msra.mxu0 0.0
    %1949 = vmatprep.subr.mxu0 0.0
    %1950 = vmatpush1.msra.mxu0 0.0
    %1951 = vmatprep.subr.mxu0 0.0
    %1952 = vmatpush1.msra.mxu0 0.0
    %1953 = vmatprep.subr.mxu0 0.0
    %1954 = vmatpush1.msra.mxu0 0.0
    %1955 = vmatprep.subr.mxu0 0.0
    %1956 = vmatpush1.msra.mxu0 0.0
    %1957 = vmatprep.subr.mxu0 0.0
    %1958 = vmatpush1.msra.mxu0 0.0
    %1959 = vmatprep.subr.mxu0 0.0
    %1960 = vmatpush1.msra.mxu0 0.0
    %1961 = vmatprep.subr.mxu0 0.0
    %1962 = vmatpush1.msra.mxu0 0.0
    %1963 = vmatprep.subr.mxu0 0.0
    %1964 = vmatpush1.msra.mxu0 0.0
    %1965 = vmatprep.subr.mxu0 0.0
    %1966 = vmatpush1.msra.mxu0 0.0
    %1967 = vmatprep.subr.mxu0 0.0
    %1968 = vmatpush1.msra.mxu0 0.0
    %1969 = vmatprep.subr.mxu0 0.0
    %1970 = vmatpush1.msra.mxu0 0.0
    %1971 = vmatprep.subr.mxu0 0.0
    %1972 = vmatpush1.msra.mxu0 0.0
    %1973 = vmatprep.subr.mxu0 0.0
    %1974 = vmatpush1.msra.mxu0 0.0
    %1975 = vmatprep.subr.mxu0 0.0
    %1976 = vmatpush1.msra.mxu0 0.0
    %1977 = vmatprep.subr.mxu0 0.0
    %1978 = vmatpush1.msra.mxu0 0.0
    %1979 = vmatprep.mubr.f32.mxu0 0.0
    %1980 = vmatmul.mubr.f32.gmra.mrb[0].mxu0 %v1913
    %v1981 = vpop.f32.mrb[0].mxu0
    %v1982 = vadd.f32 %v1911, %v1981
    %v1983 = vpop.f32.mrb[0].mxu0
    %1984 = vdwg.mxu0
    %v1985 = vadd.f32 %v1899, %v1982
    %v1986 = vxor.u32 %v1985, 2147483648
    %v1987 = vmul.f32 %v1986, 1.442695
    %v1988 = vpow.pop %v1987
    %v1989 = vadd.f32 %v1988, 1.0
    %v1990 = vrcp.pop %v1989
    %v1991 = vmul.f32 1.0, %v1990
    %1993 = vrot.lane.b32.xlu0 %v1982, 64
    %v1994 = vpop.permute.xlu0 %1993
    %v1996 = vmul.f32 %v1991, %v1994
    %1998 = vrot.lane.b32.xlu0 %v1996, 64
    %v1999 = vpop.permute.xlu0 %1998
    %v2001 = vadd.f32 %v1899, %v1999
    %v2002 = vtanh.pop %v2001
    %v2003 = vsub.f32 1.0, %v1991
    %2005 = vrot.lane.b32.xlu0 %v2002, 96
    %v2006 = vpop.permute.xlu0 %2005
    %v2008 = vmul.f32 %v2003, %v2006
    %v2009 = vmul.f32 %v1991, %v1612
    %v2010 = vadd.f32 %v2008, %v2009
    %2012 = vrot.lane.b32.xlu0 %v1817, 96
    %v2013 = vpop.permute.xlu0 %2012
    %s2015 = scalar_lea.vmem [#allocation2], 8
    %2016 = vst.msk [vmem:[%s2015] sm:$0x3] %vm423, %v2013
    %2018 = vrot.lane.b32.xlu0 %v2010, 96
    %v2019 = vpop.permute.xlu0 %2018
    %s2021 = scalar_lea.vmem [#allocation3], 6
    %2022 = vst.msk [vmem:[%s2021] sm:$0x3] %vm423, %v2019
    %s2023 = scalar_lea.vmem %s0, 10
    %v2024 = vld [vmem:[%s2023] sm:$0x3]
    %v2025 = vld [vmem:[%s1] sm:$0xff]
    %v2026 = vld [vmem:[%s1 + $0x8] sm:$0xff]
    %v2027 = vld [vmem:[%s3] sm:$0x1]
    %v2029 = vlaneseq
    %v2030 = vshrl.u32 %v2029, 7
    %v2031 = vsub.s32 0, %v2030
    %v2032 = vrot.slane %v2027, %v2031
    %v2035 = vsel %vm39, %v2024, 0
    %2037 = vmatprep.subr.mxu0 0.0
    %2038 = vmatpush1.msra.mxu0 %v2025
    %2039 = vmatprep.subr.mxu0 0.0
    %2040 = vmatpush1.msra.mxu0 %v2026
    %2041 = vmatprep.subr.mxu0 0.0
    %2042 = vmatpush1.msra.mxu0 0.0
    %2043 = vmatprep.subr.mxu0 0.0
    %2044 = vmatpush1.msra.mxu0 0.0
    %2045 = vmatprep.subr.mxu0 0.0
    %2046 = vmatpush1.msra.mxu0 0.0
    %2047 = vmatprep.subr.mxu0 0.0
    %2048 = vmatpush1.msra.mxu0 0.0
    %2049 = vmatprep.subr.mxu0 0.0
    %2050 = vmatpush1.msra.mxu0 0.0
    %2051 = vmatprep.subr.mxu0 0.0
    %2052 = vmatpush1.msra.mxu0 0.0
    %2053 = vmatprep.subr.mxu0 0.0
    %2054 = vmatpush1.msra.mxu0 0.0
    %2055 = vmatprep.subr.mxu0 0.0
    %2056 = vmatpush1.msra.mxu0 0.0
    %2057 = vmatprep.subr.mxu0 0.0
    %2058 = vmatpush1.msra.mxu0 0.0
    %2059 = vmatprep.subr.mxu0 0.0
    %2060 = vmatpush1.msra.mxu0 0.0
    %2061 = vmatprep.subr.mxu0 0.0
    %2062 = vmatpush1.msra.mxu0 0.0
    %2063 = vmatprep.subr.mxu0 0.0
    %2064 = vmatpush1.msra.mxu0 0.0
    %2065 = vmatprep.subr.mxu0 0.0
    %2066 = vmatpush1.msra.mxu0 0.0
    %2067 = vmatprep.subr.mxu0 0.0
    %2068 = vmatpush1.msra.mxu0 0.0
    %2069 = vmatprep.subr.mxu0 0.0
    %2070 = vmatpush1.msra.mxu0 0.0
    %2071 = vmatprep.subr.mxu0 0.0
    %2072 = vmatpush1.msra.mxu0 0.0
    %2073 = vmatprep.subr.mxu0 0.0
    %2074 = vmatpush1.msra.mxu0 0.0
    %2075 = vmatprep.subr.mxu0 0.0
    %2076 = vmatpush1.msra.mxu0 0.0
    %2077 = vmatprep.subr.mxu0 0.0
    %2078 = vmatpush1.msra.mxu0 0.0
    %2079 = vmatprep.subr.mxu0 0.0
    %2080 = vmatpush1.msra.mxu0 0.0
    %2081 = vmatprep.subr.mxu0 0.0
    %2082 = vmatpush1.msra.mxu0 0.0
    %2083 = vmatprep.subr.mxu0 0.0
    %2084 = vmatpush1.msra.mxu0 0.0
    %2085 = vmatprep.subr.mxu0 0.0
    %2086 = vmatpush1.msra.mxu0 0.0
    %2087 = vmatprep.subr.mxu0 0.0
    %2088 = vmatpush1.msra.mxu0 0.0
    %2089 = vmatprep.subr.mxu0 0.0
    %2090 = vmatpush1.msra.mxu0 0.0
    %2091 = vmatprep.subr.mxu0 0.0
    %2092 = vmatpush1.msra.mxu0 0.0
    %2093 = vmatprep.subr.mxu0 0.0
    %2094 = vmatpush1.msra.mxu0 0.0
    %2095 = vmatprep.subr.mxu0 0.0
    %2096 = vmatpush1.msra.mxu0 0.0
    %2097 = vmatprep.subr.mxu0 0.0
    %2098 = vmatpush1.msra.mxu0 0.0
    %2099 = vmatprep.subr.mxu0 0.0
    %2100 = vmatpush1.msra.mxu0 0.0
    %2101 = vmatprep.mubr.f32.mxu0 0.0
    %2102 = vmatmul.mubr.f32.gmra.mrb[0].mxu0 %v2035
    %v2103 = vpop.f32.mrb[0].mxu0
    %v2104 = vadd.f32 %v2032, %v2103
    %v2105 = vpop.f32.mrb[0].mxu0
    %2106 = vdwg.mxu0
    %v2107 = vld [vmem:[%s2] sm:$0xff]
    %v2108 = vld [vmem:[%s2 + $0x8] sm:$0xff]
    %v2109 = vld [vmem:[%s2 + $0x10] sm:$0xff]
    %v2110 = vld [vmem:[%s2 + $0x18] sm:$0xff]
    %v2111 = vld [vmem:[%s4] sm:$0x1]
    %v2113 = vlaneseq
    %v2114 = vshrl.u32 %v2113, 7
    %v2115 = vsub.s32 0, %v2114
    %v2116 = vrot.slane %v2111, %v2115
    %v2118 = vsel %vm124, %v2013, 0
    %2120 = vmatprep.subr.mxu0 0.0
    %2121 = vmatpush1.msra.mxu0 %v2107
    %2122 = vmatprep.subr.mxu0 0.0
    %2123 = vmatpush1.msra.mxu0 %v2108
    %2124 = vmatprep.subr.mxu0 0.0
    %2125 = vmatpush1.msra.mxu0 %v2109
    %2126 = vmatprep.subr.mxu0 0.0
    %2127 = vmatpush1.msra.mxu0 %v2110
    %2128 = vmatprep.subr.mxu0 0.0
    %2129 = vmatpush1.msra.mxu0 0.0
    %2130 = vmatprep.subr.mxu0 0.0
    %2131 = vmatpush1.msra.mxu0 0.0
    %2132 = vmatprep.subr.mxu0 0.0
    %2133 = vmatpush1.msra.mxu0 0.0
    %2134 = vmatprep.subr.mxu0 0.0
    %2135 = vmatpush1.msra.mxu0 0.0
    %2136 = vmatprep.subr.mxu0 0.0
    %2137 = vmatpush1.msra.mxu0 0.0
    %2138 = vmatprep.subr.mxu0 0.0
    %2139 = vmatpush1.msra.mxu0 0.0
    %2140 = vmatprep.subr.mxu0 0.0
    %2141 = vmatpush1.msra.mxu0 0.0
    %2142 = vmatprep.subr.mxu0 0.0
    %2143 = vmatpush1.msra.mxu0 0.0
    %2144 = vmatprep.subr.mxu0 0.0
    %2145 = vmatpush1.msra.mxu0 0.0
    %2146 = vmatprep.subr.mxu0 0.0
    %2147 = vmatpush1.msra.mxu0 0.0
    %2148 = vmatprep.subr.mxu0 0.0
    %2149 = vmatpush1.msra.mxu0 0.0
    %2150 = vmatprep.subr.mxu0 0.0
    %2151 = vmatpush1.msra.mxu0 0.0
    %2152 = vmatprep.subr.mxu0 0.0
    %2153 = vmatpush1.msra.mxu0 0.0
    %2154 = vmatprep.subr.mxu0 0.0
    %2155 = vmatpush1.msra.mxu0 0.0
    %2156 = vmatprep.subr.mxu0 0.0
    %2157 = vmatpush1.msra.mxu0 0.0
    %2158 = vmatprep.subr.mxu0 0.0
    %2159 = vmatpush1.msra.mxu0 0.0
    %2160 = vmatprep.subr.mxu0 0.0
    %2161 = vmatpush1.msra.mxu0 0.0
    %2162 = vmatprep.subr.mxu0 0.0
    %2163 = vmatpush1.msra.mxu0 0.0
    %2164 = vmatprep.subr.mxu0 0.0
    %2165 = vmatpush1.msra.mxu0 0.0
    %2166 = vmatprep.subr.mxu0 0.0
    %2167 = vmatpush1.msra.mxu0 0.0
    %2168 = vmatprep.subr.mxu0 0.0
    %2169 = vmatpush1.msra.mxu0 0.0
    %2170 = vmatprep.subr.mxu0 0.0
    %2171 = vmatpush1.msra.mxu0 0.0
    %2172 = vmatprep.subr.mxu0 0.0
    %2173 = vmatpush1.msra.mxu0 0.0
    %2174 = vmatprep.subr.mxu0 0.0
    %2175 = vmatpush1.msra.mxu0 0.0
    %2176 = vmatprep.subr.mxu0 0.0
    %2177 = vmatpush1.msra.mxu0 0.0
    %2178 = vmatprep.subr.mxu0 0.0
    %2179 = vmatpush1.msra.mxu0 0.0
    %2180 = vmatprep.subr.mxu0 0.0
    %2181 = vmatpush1.msra.mxu0 0.0
    %2182 = vmatprep.subr.mxu0 0.0
    %2183 = vmatpush1.msra.mxu0 0.0
    %2184 = vmatprep.mubr.f32.mxu0 0.0
    %2185 = vmatmul.mubr.f32.gmra.mrb[0].mxu0 %v2118
    %v2186 = vpop.f32.mrb[0].mxu0
    %v2187 = vadd.f32 %v2116, %v2186
    %v2188 = vpop.f32.mrb[0].mxu0
    %2189 = vdwg.mxu0
    %v2190 = vadd.f32 %v2104, %v2187
    %v2191 = vxor.u32 %v2190, 2147483648
    %v2192 = vmul.f32 %v2191, 1.442695
    %v2193 = vpow.pop %v2192
    %v2194 = vadd.f32 %v2193, 1.0
    %v2195 = vrcp.pop %v2194
    %v2196 = vmul.f32 1.0, %v2195
    %2198 = vrot.lane.b32.xlu0 %v2187, 64
    %v2199 = vpop.permute.xlu0 %2198
    %v2201 = vmul.f32 %v2196, %v2199
    %2203 = vrot.lane.b32.xlu0 %v2201, 64
    %v2204 = vpop.permute.xlu0 %2203
    %v2206 = vadd.f32 %v2104, %v2204
    %v2207 = vtanh.pop %v2206
    %v2208 = vsub.f32 1.0, %v2196
    %2210 = vrot.lane.b32.xlu0 %v2207, 96
    %v2211 = vpop.permute.xlu0 %2210
    %v2213 = vmul.f32 %v2208, %v2211
    %v2214 = vmul.f32 %v2196, %v1817
    %v2215 = vadd.f32 %v2213, %v2214
    %s2216 = scalar_lea.vmem %s0, 26
    %v2217 = vld [vmem:[%s2216] sm:$0x3]
    %v2218 = vld [vmem:[%s226] sm:$0xff]
    %v2219 = vld [vmem:[%s226 + $0x8] sm:$0xff]
    %v2220 = vld [vmem:[%s229] sm:$0x1]
    %v2222 = vlaneseq
    %v2223 = vshrl.u32 %v2222, 7
    %v2224 = vsub.s32 0, %v2223
    %v2225 = vrot.slane %v2220, %v2224
    %v2228 = vsel %vm39, %v2217, 0
    %2230 = vmatprep.subr.mxu0 0.0
    %2231 = vmatpush1.msra.mxu0 %v2218
    %2232 = vmatprep.subr.mxu0 0.0
    %2233 = vmatpush1.msra.mxu0 %v2219
    %2234 = vmatprep.subr.mxu0 0.0
    %2235 = vmatpush1.msra.mxu0 0.0
    %2236 = vmatprep.subr.mxu0 0.0
    %2237 = vmatpush1.msra.mxu0 0.0
    %2238 = vmatprep.subr.mxu0 0.0
    %2239 = vmatpush1.msra.mxu0 0.0
    %2240 = vmatprep.subr.mxu0 0.0
    %2241 = vmatpush1.msra.mxu0 0.0
    %2242 = vmatprep.subr.mxu0 0.0
    %2243 = vmatpush1.msra.mxu0 0.0
    %2244 = vmatprep.subr.mxu0 0.0
    %2245 = vmatpush1.msra.mxu0 0.0
    %2246 = vmatprep.subr.mxu0 0.0
    %2247 = vmatpush1.msra.mxu0 0.0
    %2248 = vmatprep.subr.mxu0 0.0
    %2249 = vmatpush1.msra.mxu0 0.0
    %2250 = vmatprep.subr.mxu0 0.0
    %2251 = vmatpush1.msra.mxu0 0.0
    %2252 = vmatprep.subr.mxu0 0.0
    %2253 = vmatpush1.msra.mxu0 0.0
    %2254 = vmatprep.subr.mxu0 0.0
    %2255 = vmatpush1.msra.mxu0 0.0
    %2256 = vmatprep.subr.mxu0 0.0
    %2257 = vmatpush1.msra.mxu0 0.0
    %2258 = vmatprep.subr.mxu0 0.0
    %2259 = vmatpush1.msra.mxu0 0.0
    %2260 = vmatprep.subr.mxu0 0.0
    %2261 = vmatpush1.msra.mxu0 0.0
    %2262 = vmatprep.subr.mxu0 0.0
    %2263 = vmatpush1.msra.mxu0 0.0
    %2264 = vmatprep.subr.mxu0 0.0
    %2265 = vmatpush1.msra.mxu0 0.0
    %2266 = vmatprep.subr.mxu0 0.0
    %2267 = vmatpush1.msra.mxu0 0.0
    %2268 = vmatprep.subr.mxu0 0.0
    %2269 = vmatpush1.msra.mxu0 0.0
    %2270 = vmatprep.subr.mxu0 0.0
    %2271 = vmatpush1.msra.mxu0 0.0
    %2272 = vmatprep.subr.mxu0 0.0
    %2273 = vmatpush1.msra.mxu0 0.0
    %2274 = vmatprep.subr.mxu0 0.0
    %2275 = vmatpush1.msra.mxu0 0.0
    %2276 = vmatprep.subr.mxu0 0.0
    %2277 = vmatpush1.msra.mxu0 0.0
    %2278 = vmatprep.subr.mxu0 0.0
    %2279 = vmatpush1.msra.mxu0 0.0
    %2280 = vmatprep.subr.mxu0 0.0
    %2281 = vmatpush1.msra.mxu0 0.0
    %2282 = vmatprep.subr.mxu0 0.0
    %2283 = vmatpush1.msra.mxu0 0.0
    %2284 = vmatprep.subr.mxu0 0.0
    %2285 = vmatpush1.msra.mxu0 0.0
    %2286 = vmatprep.subr.mxu0 0.0
    %2287 = vmatpush1.msra.mxu0 0.0
    %2288 = vmatprep.subr.mxu0 0.0
    %2289 = vmatpush1.msra.mxu0 0.0
    %2290 = vmatprep.subr.mxu0 0.0
    %2291 = vmatpush1.msra.mxu0 0.0
    %2292 = vmatprep.subr.mxu0 0.0
    %2293 = vmatpush1.msra.mxu0 0.0
    %2294 = vmatprep.mubr.f32.mxu0 0.0
    %2295 = vmatmul.mubr.f32.gmra.mrb[0].mxu0 %v2228
    %v2296 = vpop.f32.mrb[0].mxu0
    %v2297 = vadd.f32 %v2225, %v2296
    %v2298 = vpop.f32.mrb[0].mxu0
    %2299 = vdwg.mxu0
    %v2300 = vld [vmem:[%s310] sm:$0xff]
    %v2301 = vld [vmem:[%s310 + $0x8] sm:$0xff]
    %v2302 = vld [vmem:[%s310 + $0x10] sm:$0xff]
    %v2303 = vld [vmem:[%s310 + $0x18] sm:$0xff]
    %v2304 = vld [vmem:[%s315] sm:$0x1]
    %v2306 = vlaneseq
    %v2307 = vshrl.u32 %v2306, 7
    %v2308 = vsub.s32 0, %v2307
    %v2309 = vrot.slane %v2304, %v2308
    %v2311 = vsel %vm124, %v2019, 0
    %2313 = vmatprep.subr.mxu0 0.0
    %2314 = vmatpush1.msra.mxu0 %v2300
    %2315 = vmatprep.subr.mxu0 0.0
    %2316 = vmatpush1.msra.mxu0 %v2301
    %2317 = vmatprep.subr.mxu0 0.0
    %2318 = vmatpush1.msra.mxu0 %v2302
    %2319 = vmatprep.subr.mxu0 0.0
    %2320 = vmatpush1.msra.mxu0 %v2303
    %2321 = vmatprep.subr.mxu0 0.0
    %2322 = vmatpush1.msra.mxu0 0.0
    %2323 = vmatprep.subr.mxu0 0.0
    %2324 = vmatpush1.msra.mxu0 0.0
    %2325 = vmatprep.subr.mxu0 0.0
    %2326 = vmatpush1.msra.mxu0 0.0
    %2327 = vmatprep.subr.mxu0 0.0
    %2328 = vmatpush1.msra.mxu0 0.0
    %2329 = vmatprep.subr.mxu0 0.0
    %2330 = vmatpush1.msra.mxu0 0.0
    %2331 = vmatprep.subr.mxu0 0.0
    %2332 = vmatpush1.msra.mxu0 0.0
    %2333 = vmatprep.subr.mxu0 0.0
    %2334 = vmatpush1.msra.mxu0 0.0
    %2335 = vmatprep.subr.mxu0 0.0
    %2336 = vmatpush1.msra.mxu0 0.0
    %2337 = vmatprep.subr.mxu0 0.0
    %2338 = vmatpush1.msra.mxu0 0.0
    %2339 = vmatprep.subr.mxu0 0.0
    %2340 = vmatpush1.msra.mxu0 0.0
    %2341 = vmatprep.subr.mxu0 0.0
    %2342 = vmatpush1.msra.mxu0 0.0
    %2343 = vmatprep.subr.mxu0 0.0
    %2344 = vmatpush1.msra.mxu0 0.0
    %2345 = vmatprep.subr.mxu0 0.0
    %2346 = vmatpush1.msra.mxu0 0.0
    %2347 = vmatprep.subr.mxu0 0.0
    %2348 = vmatpush1.msra.mxu0 0.0
    %2349 = vmatprep.subr.mxu0 0.0
    %2350 = vmatpush1.msra.mxu0 0.0
    %2351 = vmatprep.subr.mxu0 0.0
    %2352 = vmatpush1.msra.mxu0 0.0
    %2353 = vmatprep.subr.mxu0 0.0
    %2354 = vmatpush1.msra.mxu0 0.0
    %2355 = vmatprep.subr.mxu0 0.0
    %2356 = vmatpush1.msra.mxu0 0.0
    %2357 = vmatprep.subr.mxu0 0.0
    %2358 = vmatpush1.msra.mxu0 0.0
    %2359 = vmatprep.subr.mxu0 0.0
    %2360 = vmatpush1.msra.mxu0 0.0
    %2361 = vmatprep.subr.mxu0 0.0
    %2362 = vmatpush1.msra.mxu0 0.0
    %2363 = vmatprep.subr.mxu0 0.0
    %2364 = vmatpush1.msra.mxu0 0.0
    %2365 = vmatprep.subr.mxu0 0.0
    %2366 = vmatpush1.msra.mxu0 0.0
    %2367 = vmatprep.subr.mxu0 0.0
    %2368 = vmatpush1.msra.mxu0 0.0
    %2369 = vmatprep.subr.mxu0 0.0
    %2370 = vmatpush1.msra.mxu0 0.0
    %2371 = vmatprep.subr.mxu0 0.0
    %2372 = vmatpush1.msra.mxu0 0.0
    %2373 = vmatprep.subr.mxu0 0.0
    %2374 = vmatpush1.msra.mxu0 0.0
    %2375 = vmatprep.subr.mxu0 0.0
    %2376 = vmatpush1.msra.mxu0 0.0
    %2377 = vmatprep.mubr.f32.mxu0 0.0
    %2378 = vmatmul.mubr.f32.gmra.mrb[0].mxu0 %v2311
    %v2379 = vpop.f32.mrb[0].mxu0
    %v2380 = vadd.f32 %v2309, %v2379
    %v2381 = vpop.f32.mrb[0].mxu0
    %2382 = vdwg.mxu0
    %v2383 = vadd.f32 %v2297, %v2380
    %v2384 = vxor.u32 %v2383, 2147483648
    %v2385 = vmul.f32 %v2384, 1.442695
    %v2386 = vpow.pop %v2385
    %v2387 = vadd.f32 %v2386, 1.0
    %v2388 = vrcp.pop %v2387
    %v2389 = vmul.f32 1.0, %v2388
    %2391 = vrot.lane.b32.xlu0 %v2380, 64
    %v2392 = vpop.permute.xlu0 %2391
    %v2394 = vmul.f32 %v2389, %v2392
    %2396 = vrot.lane.b32.xlu0 %v2394, 64
    %v2397 = vpop.permute.xlu0 %2396
    %v2399 = vadd.f32 %v2297, %v2397
    %v2400 = vtanh.pop %v2399
    %v2401 = vsub.f32 1.0, %v2389
    %2403 = vrot.lane.b32.xlu0 %v2400, 96
    %v2404 = vpop.permute.xlu0 %2403
    %v2406 = vmul.f32 %v2401, %v2404
    %v2407 = vmul.f32 %v2389, %v2010
    %v2408 = vadd.f32 %v2406, %v2407
    %2410 = vrot.lane.b32.xlu0 %v2215, 96
    %v2411 = vpop.permute.xlu0 %2410
    %s2413 = scalar_lea.vmem [#allocation2], 10
    %2414 = vst.msk [vmem:[%s2413] sm:$0x3] %vm423, %v2411
    %2416 = vrot.lane.b32.xlu0 %v2408, 96
    %v2417 = vpop.permute.xlu0 %2416
    %s2419 = scalar_lea.vmem [#allocation3], 4
    %2420 = vst.msk [vmem:[%s2419] sm:$0x3] %vm423, %v2417
    %s2421 = scalar_lea.vmem %s0, 12
    %v2422 = vld [vmem:[%s2421] sm:$0x3]
    %v2423 = vld [vmem:[%s1] sm:$0xff]
    %v2424 = vld [vmem:[%s1 + $0x8] sm:$0xff]
    %v2425 = vld [vmem:[%s3] sm:$0x1]
    %v2427 = vlaneseq
    %v2428 = vshrl.u32 %v2427, 7
    %v2429 = vsub.s32 0, %v2428
    %v2430 = vrot.slane %v2425, %v2429
    %v2433 = vsel %vm39, %v2422, 0
    %2435 = vmatprep.subr.mxu0 0.0
    %2436 = vmatpush1.msra.mxu0 %v2423
    %2437 = vmatprep.subr.mxu0 0.0
    %2438 = vmatpush1.msra.mxu0 %v2424
    %2439 = vmatprep.subr.mxu0 0.0
    %2440 = vmatpush1.msra.mxu0 0.0
    %2441 = vmatprep.subr.mxu0 0.0
    %2442 = vmatpush1.msra.mxu0 0.0
    %2443 = vmatprep.subr.mxu0 0.0
    %2444 = vmatpush1.msra.mxu0 0.0
    %2445 = vmatprep.subr.mxu0 0.0
    %2446 = vmatpush1.msra.mxu0 0.0
    %2447 = vmatprep.subr.mxu0 0.0
    %2448 = vmatpush1.msra.mxu0 0.0
    %2449 = vmatprep.subr.mxu0 0.0
    %2450 = vmatpush1.msra.mxu0 0.0
    %2451 = vmatprep.subr.mxu0 0.0
    %2452 = vmatpush1.msra.mxu0 0.0
    %2453 = vmatprep.subr.mxu0 0.0
    %2454 = vmatpush1.msra.mxu0 0.0
    %2455 = vmatprep.subr.mxu0 0.0
    %2456 = vmatpush1.msra.mxu0 0.0
    %2457 = vmatprep.subr.mxu0 0.0
    %2458 = vmatpush1.msra.mxu0 0.0
    %2459 = vmatprep.subr.mxu0 0.0
    %2460 = vmatpush1.msra.mxu0 0.0
    %2461 = vmatprep.subr.mxu0 0.0
    %2462 = vmatpush1.msra.mxu0 0.0
    %2463 = vmatprep.subr.mxu0 0.0
    %2464 = vmatpush1.msra.mxu0 0.0
    %2465 = vmatprep.subr.mxu0 0.0
    %2466 = vmatpush1.msra.mxu0 0.0
    %2467 = vmatprep.subr.mxu0 0.0
    %2468 = vmatpush1.msra.mxu0 0.0
    %2469 = vmatprep.subr.mxu0 0.0
    %2470 = vmatpush1.msra.mxu0 0.0
    %2471 = vmatprep.subr.mxu0 0.0
    %2472 = vmatpush1.msra.mxu0 0.0
    %2473 = vmatprep.subr.mxu0 0.0
    %2474 = vmatpush1.msra.mxu0 0.0
    %2475 = vmatprep.subr.mxu0 0.0
    %2476 = vmatpush1.msra.mxu0 0.0
    %2477 = vmatprep.subr.mxu0 0.0
    %2478 = vmatpush1.msra.mxu0 0.0
    %2479 = vmatprep.subr.mxu0 0.0
    %2480 = vmatpush1.msra.mxu0 0.0
    %2481 = vmatprep.subr.mxu0 0.0
    %2482 = vmatpush1.msra.mxu0 0.0
    %2483 = vmatprep.subr.mxu0 0.0
    %2484 = vmatpush1.msra.mxu0 0.0
    %2485 = vmatprep.subr.mxu0 0.0
    %2486 = vmatpush1.msra.mxu0 0.0
    %2487 = vmatprep.subr.mxu0 0.0
    %2488 = vmatpush1.msra.mxu0 0.0
    %2489 = vmatprep.subr.mxu0 0.0
    %2490 = vmatpush1.msra.mxu0 0.0
    %2491 = vmatprep.subr.mxu0 0.0
    %2492 = vmatpush1.msra.mxu0 0.0
    %2493 = vmatprep.subr.mxu0 0.0
    %2494 = vmatpush1.msra.mxu0 0.0
    %2495 = vmatprep.subr.mxu0 0.0
    %2496 = vmatpush1.msra.mxu0 0.0
    %2497 = vmatprep.subr.mxu0 0.0
    %2498 = vmatpush1.msra.mxu0 0.0
    %2499 = vmatprep.mubr.f32.mxu0 0.0
    %2500 = vmatmul.mubr.f32.gmra.mrb[0].mxu0 %v2433
    %v2501 = vpop.f32.mrb[0].mxu0
    %v2502 = vadd.f32 %v2430, %v2501
    %v2503 = vpop.f32.mrb[0].mxu0
    %2504 = vdwg.mxu0
    %v2505 = vld [vmem:[%s2] sm:$0xff]
    %v2506 = vld [vmem:[%s2 + $0x8] sm:$0xff]
    %v2507 = vld [vmem:[%s2 + $0x10] sm:$0xff]
    %v2508 = vld [vmem:[%s2 + $0x18] sm:$0xff]
    %v2509 = vld [vmem:[%s4] sm:$0x1]
    %v2511 = vlaneseq
    %v2512 = vshrl.u32 %v2511, 7
    %v2513 = vsub.s32 0, %v2512
    %v2514 = vrot.slane %v2509, %v2513
    %v2516 = vsel %vm124, %v2411, 0
    %2518 = vmatprep.subr.mxu0 0.0
    %2519 = vmatpush1.msra.mxu0 %v2505
    %2520 = vmatprep.subr.mxu0 0.0
    %2521 = vmatpush1.msra.mxu0 %v2506
    %2522 = vmatprep.subr.mxu0 0.0
    %2523 = vmatpush1.msra.mxu0 %v2507
    %2524 = vmatprep.subr.mxu0 0.0
    %2525 = vmatpush1.msra.mxu0 %v2508
    %2526 = vmatprep.subr.mxu0 0.0
    %2527 = vmatpush1.msra.mxu0 0.0
    %2528 = vmatprep.subr.mxu0 0.0
    %2529 = vmatpush1.msra.mxu0 0.0
    %2530 = vmatprep.subr.mxu0 0.0
    %2531 = vmatpush1.msra.mxu0 0.0
    %2532 = vmatprep.subr.mxu0 0.0
    %2533 = vmatpush1.msra.mxu0 0.0
    %2534 = vmatprep.subr.mxu0 0.0
    %2535 = vmatpush1.msra.mxu0 0.0
    %2536 = vmatprep.subr.mxu0 0.0
    %2537 = vmatpush1.msra.mxu0 0.0
    %2538 = vmatprep.subr.mxu0 0.0
    %2539 = vmatpush1.msra.mxu0 0.0
    %2540 = vmatprep.subr.mxu0 0.0
    %2541 = vmatpush1.msra.mxu0 0.0
    %2542 = vmatprep.subr.mxu0 0.0
    %2543 = vmatpush1.msra.mxu0 0.0
    %2544 = vmatprep.subr.mxu0 0.0
    %2545 = vmatpush1.msra.mxu0 0.0
    %2546 = vmatprep.subr.mxu0 0.0
    %2547 = vmatpush1.msra.mxu0 0.0
    %2548 = vmatprep.subr.mxu0 0.0
    %2549 = vmatpush1.msra.mxu0 0.0
    %2550 = vmatprep.subr.mxu0 0.0
    %2551 = vmatpush1.msra.mxu0 0.0
    %2552 = vmatprep.subr.mxu0 0.0
    %2553 = vmatpush1.msra.mxu0 0.0
    %2554 = vmatprep.subr.mxu0 0.0
    %2555 = vmatpush1.msra.mxu0 0.0
    %2556 = vmatprep.subr.mxu0 0.0
    %2557 = vmatpush1.msra.mxu0 0.0
    %2558 = vmatprep.subr.mxu0 0.0
    %2559 = vmatpush1.msra.mxu0 0.0
    %2560 = vmatprep.subr.mxu0 0.0
    %2561 = vmatpush1.msra.mxu0 0.0
    %2562 = vmatprep.subr.mxu0 0.0
    %2563 = vmatpush1.msra.mxu0 0.0
    %2564 = vmatprep.subr.mxu0 0.0
    %2565 = vmatpush1.msra.mxu0 0.0
    %2566 = vmatprep.subr.mxu0 0.0
    %2567 = vmatpush1.msra.mxu0 0.0
    %2568 = vmatprep.subr.mxu0 0.0
    %2569 = vmatpush1.msra.mxu0 0.0
    %2570 = vmatprep.subr.mxu0 0.0
    %2571 = vmatpush1.msra.mxu0 0.0
    %2572 = vmatprep.subr.mxu0 0.0
    %2573 = vmatpush1.msra.mxu0 0.0
    %2574 = vmatprep.subr.mxu0 0.0
    %2575 = vmatpush1.msra.mxu0 0.0
    %2576 = vmatprep.subr.mxu0 0.0
    %2577 = vmatpush1.msra.mxu0 0.0
    %2578 = vmatprep.subr.mxu0 0.0
    %2579 = vmatpush1.msra.mxu0 0.0
    %2580 = vmatprep.subr.mxu0 0.0
    %2581 = vmatpush1.msra.mxu0 0.0
    %2582 = vmatprep.mubr.f32.mxu0 0.0
    %2583 = vmatmul.mubr.f32.gmra.mrb[0].mxu0 %v2516
    %v2584 = vpop.f32.mrb[0].mxu0
    %v2585 = vadd.f32 %v2514, %v2584
    %v2586 = vpop.f32.mrb[0].mxu0
    %2587 = vdwg.mxu0
    %v2588 = vadd.f32 %v2502, %v2585
    %v2589 = vxor.u32 %v2588, 2147483648
    %v2590 = vmul.f32 %v2589, 1.442695
    %v2591 = vpow.pop %v2590
    %v2592 = vadd.f32 %v2591, 1.0
    %v2593 = vrcp.pop %v2592
    %v2594 = vmul.f32 1.0, %v2593
    %2596 = vrot.lane.b32.xlu0 %v2585, 64
    %v2597 = vpop.permute.xlu0 %2596
    %v2599 = vmul.f32 %v2594, %v2597
    %2601 = vrot.lane.b32.xlu0 %v2599, 64
    %v2602 = vpop.permute.xlu0 %2601
    %v2604 = vadd.f32 %v2502, %v2602
    %v2605 = vtanh.pop %v2604
    %v2606 = vsub.f32 1.0, %v2594
    %2608 = vrot.lane.b32.xlu0 %v2605, 96
    %v2609 = vpop.permute.xlu0 %2608
    %v2611 = vmul.f32 %v2606, %v2609
    %v2612 = vmul.f32 %v2594, %v2215
    %v2613 = vadd.f32 %v2611, %v2612
    %s2614 = scalar_lea.vmem %s0, 28
    %v2615 = vld [vmem:[%s2614] sm:$0x3]
    %v2616 = vld [vmem:[%s226] sm:$0xff]
    %v2617 = vld [vmem:[%s226 + $0x8] sm:$0xff]
    %v2618 = vld [vmem:[%s229] sm:$0x1]
    %v2620 = vlaneseq
    %v2621 = vshrl.u32 %v2620, 7
    %v2622 = vsub.s32 0, %v2621
    %v2623 = vrot.slane %v2618, %v2622
    %v2626 = vsel %vm39, %v2615, 0
    %2628 = vmatprep.subr.mxu0 0.0
    %2629 = vmatpush1.msra.mxu0 %v2616
    %2630 = vmatprep.subr.mxu0 0.0
    %2631 = vmatpush1.msra.mxu0 %v2617
    %2632 = vmatprep.subr.mxu0 0.0
    %2633 = vmatpush1.msra.mxu0 0.0
    %2634 = vmatprep.subr.mxu0 0.0
    %2635 = vmatpush1.msra.mxu0 0.0
    %2636 = vmatprep.subr.mxu0 0.0
    %2637 = vmatpush1.msra.mxu0 0.0
    %2638 = vmatprep.subr.mxu0 0.0
    %2639 = vmatpush1.msra.mxu0 0.0
    %2640 = vmatprep.subr.mxu0 0.0
    %2641 = vmatpush1.msra.mxu0 0.0
    %2642 = vmatprep.subr.mxu0 0.0
    %2643 = vmatpush1.msra.mxu0 0.0
    %2644 = vmatprep.subr.mxu0 0.0
    %2645 = vmatpush1.msra.mxu0 0.0
    %2646 = vmatprep.subr.mxu0 0.0
    %2647 = vmatpush1.msra.mxu0 0.0
    %2648 = vmatprep.subr.mxu0 0.0
    %2649 = vmatpush1.msra.mxu0 0.0
    %2650 = vmatprep.subr.mxu0 0.0
    %2651 = vmatpush1.msra.mxu0 0.0
    %2652 = vmatprep.subr.mxu0 0.0
    %2653 = vmatpush1.msra.mxu0 0.0
    %2654 = vmatprep.subr.mxu0 0.0
    %2655 = vmatpush1.msra.mxu0 0.0
    %2656 = vmatprep.subr.mxu0 0.0
    %2657 = vmatpush1.msra.mxu0 0.0
    %2658 = vmatprep.subr.mxu0 0.0
    %2659 = vmatpush1.msra.mxu0 0.0
    %2660 = vmatprep.subr.mxu0 0.0
    %2661 = vmatpush1.msra.mxu0 0.0
    %2662 = vmatprep.subr.mxu0 0.0
    %2663 = vmatpush1.msra.mxu0 0.0
    %2664 = vmatprep.subr.mxu0 0.0
    %2665 = vmatpush1.msra.mxu0 0.0
    %2666 = vmatprep.subr.mxu0 0.0
    %2667 = vmatpush1.msra.mxu0 0.0
    %2668 = vmatprep.subr.mxu0 0.0
    %2669 = vmatpush1.msra.mxu0 0.0
    %2670 = vmatprep.subr.mxu0 0.0
    %2671 = vmatpush1.msra.mxu0 0.0
    %2672 = vmatprep.subr.mxu0 0.0
    %2673 = vmatpush1.msra.mxu0 0.0
    %2674 = vmatprep.subr.mxu0 0.0
    %2675 = vmatpush1.msra.mxu0 0.0
    %2676 = vmatprep.subr.mxu0 0.0
    %2677 = vmatpush1.msra.mxu0 0.0
    %2678 = vmatprep.subr.mxu0 0.0
    %2679 = vmatpush1.msra.mxu0 0.0
    %2680 = vmatprep.subr.mxu0 0.0
    %2681 = vmatpush1.msra.mxu0 0.0
    %2682 = vmatprep.subr.mxu0 0.0
    %2683 = vmatpush1.msra.mxu0 0.0
    %2684 = vmatprep.subr.mxu0 0.0
    %2685 = vmatpush1.msra.mxu0 0.0
    %2686 = vmatprep.subr.mxu0 0.0
    %2687 = vmatpush1.msra.mxu0 0.0
    %2688 = vmatprep.subr.mxu0 0.0
    %2689 = vmatpush1.msra.mxu0 0.0
    %2690 = vmatprep.subr.mxu0 0.0
    %2691 = vmatpush1.msra.mxu0 0.0
    %2692 = vmatprep.mubr.f32.mxu0 0.0
    %2693 = vmatmul.mubr.f32.gmra.mrb[0].mxu0 %v2626
    %v2694 = vpop.f32.mrb[0].mxu0
    %v2695 = vadd.f32 %v2623, %v2694
    %v2696 = vpop.f32.mrb[0].mxu0
    %2697 = vdwg.mxu0
    %v2698 = vld [vmem:[%s310] sm:$0xff]
    %v2699 = vld [vmem:[%s310 + $0x8] sm:$0xff]
    %v2700 = vld [vmem:[%s310 + $0x10] sm:$0xff]
    %v2701 = vld [vmem:[%s310 + $0x18] sm:$0xff]
    %v2702 = vld [vmem:[%s315] sm:$0x1]
    %v2704 = vlaneseq
    %v2705 = vshrl.u32 %v2704, 7
    %v2706 = vsub.s32 0, %v2705
    %v2707 = vrot.slane %v2702, %v2706
    %v2709 = vsel %vm124, %v2417, 0
    %2711 = vmatprep.subr.mxu0 0.0
    %2712 = vmatpush1.msra.mxu0 %v2698
    %2713 = vmatprep.subr.mxu0 0.0
    %2714 = vmatpush1.msra.mxu0 %v2699
    %2715 = vmatprep.subr.mxu0 0.0
    %2716 = vmatpush1.msra.mxu0 %v2700
    %2717 = vmatprep.subr.mxu0 0.0
    %2718 = vmatpush1.msra.mxu0 %v2701
    %2719 = vmatprep.subr.mxu0 0.0
    %2720 = vmatpush1.msra.mxu0 0.0
    %2721 = vmatprep.subr.mxu0 0.0
    %2722 = vmatpush1.msra.mxu0 0.0
    %2723 = vmatprep.subr.mxu0 0.0
    %2724 = vmatpush1.msra.mxu0 0.0
    %2725 = vmatprep.subr.mxu0 0.0
    %2726 = vmatpush1.msra.mxu0 0.0
    %2727 = vmatprep.subr.mxu0 0.0
    %2728 = vmatpush1.msra.mxu0 0.0
    %2729 = vmatprep.subr.mxu0 0.0
    %2730 = vmatpush1.msra.mxu0 0.0
    %2731 = vmatprep.subr.mxu0 0.0
    %2732 = vmatpush1.msra.mxu0 0.0
    %2733 = vmatprep.subr.mxu0 0.0
    %2734 = vmatpush1.msra.mxu0 0.0
    %2735 = vmatprep.subr.mxu0 0.0
    %2736 = vmatpush1.msra.mxu0 0.0
    %2737 = vmatprep.subr.mxu0 0.0
    %2738 = vmatpush1.msra.mxu0 0.0
    %2739 = vmatprep.subr.mxu0 0.0
    %2740 = vmatpush1.msra.mxu0 0.0
    %2741 = vmatprep.subr.mxu0 0.0
    %2742 = vmatpush1.msra.mxu0 0.0
    %2743 = vmatprep.subr.mxu0 0.0
    %2744 = vmatpush1.msra.mxu0 0.0
    %2745 = vmatprep.subr.mxu0 0.0
    %2746 = vmatpush1.msra.mxu0 0.0
    %2747 = vmatprep.subr.mxu0 0.0
    %2748 = vmatpush1.msra.mxu0 0.0
    %2749 = vmatprep.subr.mxu0 0.0
    %2750 = vmatpush1.msra.mxu0 0.0
    %2751 = vmatprep.subr.mxu0 0.0
    %2752 = vmatpush1.msra.mxu0 0.0
    %2753 = vmatprep.subr.mxu0 0.0
    %2754 = vmatpush1.msra.mxu0 0.0
    %2755 = vmatprep.subr.mxu0 0.0
    %2756 = vmatpush1.msra.mxu0 0.0
    %2757 = vmatprep.subr.mxu0 0.0
    %2758 = vmatpush1.msra.mxu0 0.0
    %2759 = vmatprep.subr.mxu0 0.0
    %2760 = vmatpush1.msra.mxu0 0.0
    %2761 = vmatprep.subr.mxu0 0.0
    %2762 = vmatpush1.msra.mxu0 0.0
    %2763 = vmatprep.subr.mxu0 0.0
    %2764 = vmatpush1.msra.mxu0 0.0
    %2765 = vmatprep.subr.mxu0 0.0
    %2766 = vmatpush1.msra.mxu0 0.0
    %2767 = vmatprep.subr.mxu0 0.0
    %2768 = vmatpush1.msra.mxu0 0.0
    %2769 = vmatprep.subr.mxu0 0.0
    %2770 = vmatpush1.msra.mxu0 0.0
    %2771 = vmatprep.subr.mxu0 0.0
    %2772 = vmatpush1.msra.mxu0 0.0
    %2773 = vmatprep.subr.mxu0 0.0
    %2774 = vmatpush1.msra.mxu0 0.0
    %2775 = vmatprep.mubr.f32.mxu0 0.0
    %2776 = vmatmul.mubr.f32.gmra.mrb[0].mxu0 %v2709
    %v2777 = vpop.f32.mrb[0].mxu0
    %v2778 = vadd.f32 %v2707, %v2777
    %v2779 = vpop.f32.mrb[0].mxu0
    %2780 = vdwg.mxu0
    %v2781 = vadd.f32 %v2695, %v2778
    %v2782 = vxor.u32 %v2781, 2147483648
    %v2783 = vmul.f32 %v2782, 1.442695
    %v2784 = vpow.pop %v2783
    %v2785 = vadd.f32 %v2784, 1.0
    %v2786 = vrcp.pop %v2785
    %v2787 = vmul.f32 1.0, %v2786
    %2789 = vrot.lane.b32.xlu0 %v2778, 64
    %v2790 = vpop.permute.xlu0 %2789
    %v2792 = vmul.f32 %v2787, %v2790
    %2794 = vrot.lane.b32.xlu0 %v2792, 64
    %v2795 = vpop.permute.xlu0 %2794
    %v2797 = vadd.f32 %v2695, %v2795
    %v2798 = vtanh.pop %v2797
    %v2799 = vsub.f32 1.0, %v2787
    %2801 = vrot.lane.b32.xlu0 %v2798, 96
    %v2802 = vpop.permute.xlu0 %2801
    %v2804 = vmul.f32 %v2799, %v2802
    %v2805 = vmul.f32 %v2787, %v2408
    %v2806 = vadd.f32 %v2804, %v2805
    %2808 = vrot.lane.b32.xlu0 %v2613, 96
    %v2809 = vpop.permute.xlu0 %2808
    %s2811 = scalar_lea.vmem [#allocation2], 12
    %2812 = vst.msk [vmem:[%s2811] sm:$0x3] %vm423, %v2809
    %2814 = vrot.lane.b32.xlu0 %v2806, 96
    %v2815 = vpop.permute.xlu0 %2814
    %s2817 = scalar_lea.vmem [#allocation3], 2
    %2818 = vst.msk [vmem:[%s2817] sm:$0x3] %vm423, %v2815
    %s2819 = scalar_lea.vmem %s0, 14
    %v2820 = vld [vmem:[%s2819] sm:$0x3]
    %v2821 = vld [vmem:[%s1] sm:$0xff]
    %v2822 = vld [vmem:[%s1 + $0x8] sm:$0xff]
    %v2823 = vld [vmem:[%s3] sm:$0x1]
    %v2825 = vlaneseq
    %v2826 = vshrl.u32 %v2825, 7
    %v2827 = vsub.s32 0, %v2826
    %v2828 = vrot.slane %v2823, %v2827
    %v2831 = vsel %vm39, %v2820, 0
    %2833 = vmatprep.subr.mxu0 0.0
    %2834 = vmatpush1.msra.mxu0 %v2821
    %2835 = vmatprep.subr.mxu0 0.0
    %2836 = vmatpush1.msra.mxu0 %v2822
    %2837 = vmatprep.subr.mxu0 0.0
    %2838 = vmatpush1.msra.mxu0 0.0
    %2839 = vmatprep.subr.mxu0 0.0
    %2840 = vmatpush1.msra.mxu0 0.0
    %2841 = vmatprep.subr.mxu0 0.0
    %2842 = vmatpush1.msra.mxu0 0.0
    %2843 = vmatprep.subr.mxu0 0.0
    %2844 = vmatpush1.msra.mxu0 0.0
    %2845 = vmatprep.subr.mxu0 0.0
    %2846 = vmatpush1.msra.mxu0 0.0
    %2847 = vmatprep.subr.mxu0 0.0
    %2848 = vmatpush1.msra.mxu0 0.0
    %2849 = vmatprep.subr.mxu0 0.0
    %2850 = vmatpush1.msra.mxu0 0.0
    %2851 = vmatprep.subr.mxu0 0.0
    %2852 = vmatpush1.msra.mxu0 0.0
    %2853 = vmatprep.subr.mxu0 0.0
    %2854 = vmatpush1.msra.mxu0 0.0
    %2855 = vmatprep.subr.mxu0 0.0
    %2856 = vmatpush1.msra.mxu0 0.0
    %2857 = vmatprep.subr.mxu0 0.0
    %2858 = vmatpush1.msra.mxu0 0.0
    %2859 = vmatprep.subr.mxu0 0.0
    %2860 = vmatpush1.msra.mxu0 0.0
    %2861 = vmatprep.subr.mxu0 0.0
    %2862 = vmatpush1.msra.mxu0 0.0
    %2863 = vmatprep.subr.mxu0 0.0
    %2864 = vmatpush1.msra.mxu0 0.0
    %2865 = vmatprep.subr.mxu0 0.0
    %2866 = vmatpush1.msra.mxu0 0.0
    %2867 = vmatprep.subr.mxu0 0.0
    %2868 = vmatpush1.msra.mxu0 0.0
    %2869 = vmatprep.subr.mxu0 0.0
    %2870 = vmatpush1.msra.mxu0 0.0
    %2871 = vmatprep.subr.mxu0 0.0
    %2872 = vmatpush1.msra.mxu0 0.0
    %2873 = vmatprep.subr.mxu0 0.0
    %2874 = vmatpush1.msra.mxu0 0.0
    %2875 = vmatprep.subr.mxu0 0.0
    %2876 = vmatpush1.msra.mxu0 0.0
    %2877 = vmatprep.subr.mxu0 0.0
    %2878 = vmatpush1.msra.mxu0 0.0
    %2879 = vmatprep.subr.mxu0 0.0
    %2880 = vmatpush1.msra.mxu0 0.0
    %2881 = vmatprep.subr.mxu0 0.0
    %2882 = vmatpush1.msra.mxu0 0.0
    %2883 = vmatprep.subr.mxu0 0.0
    %2884 = vmatpush1.msra.mxu0 0.0
    %2885 = vmatprep.subr.mxu0 0.0
    %2886 = vmatpush1.msra.mxu0 0.0
    %2887 = vmatprep.subr.mxu0 0.0
    %2888 = vmatpush1.msra.mxu0 0.0
    %2889 = vmatprep.subr.mxu0 0.0
    %2890 = vmatpush1.msra.mxu0 0.0
    %2891 = vmatprep.subr.mxu0 0.0
    %2892 = vmatpush1.msra.mxu0 0.0
    %2893 = vmatprep.subr.mxu0 0.0
    %2894 = vmatpush1.msra.mxu0 0.0
    %2895 = vmatprep.subr.mxu0 0.0
    %2896 = vmatpush1.msra.mxu0 0.0
    %2897 = vmatprep.mubr.f32.mxu0 0.0
    %2898 = vmatmul.mubr.f32.gmra.mrb[0].mxu0 %v2831
    %v2899 = vpop.f32.mrb[0].mxu0
    %v2900 = vadd.f32 %v2828, %v2899
    %v2901 = vpop.f32.mrb[0].mxu0
    %2902 = vdwg.mxu0
    %v2903 = vld [vmem:[%s2] sm:$0xff]
    %v2904 = vld [vmem:[%s2 + $0x8] sm:$0xff]
    %v2905 = vld [vmem:[%s2 + $0x10] sm:$0xff]
    %v2906 = vld [vmem:[%s2 + $0x18] sm:$0xff]
    %v2907 = vld [vmem:[%s4] sm:$0x1]
    %v2909 = vlaneseq
    %v2910 = vshrl.u32 %v2909, 7
    %v2911 = vsub.s32 0, %v2910
    %v2912 = vrot.slane %v2907, %v2911
    %v2914 = vsel %vm124, %v2809, 0
    %2916 = vmatprep.subr.mxu0 0.0
    %2917 = vmatpush1.msra.mxu0 %v2903
    %2918 = vmatprep.subr.mxu0 0.0
    %2919 = vmatpush1.msra.mxu0 %v2904
    %2920 = vmatprep.subr.mxu0 0.0
    %2921 = vmatpush1.msra.mxu0 %v2905
    %2922 = vmatprep.subr.mxu0 0.0
    %2923 = vmatpush1.msra.mxu0 %v2906
    %2924 = vmatprep.subr.mxu0 0.0
    %2925 = vmatpush1.msra.mxu0 0.0
    %2926 = vmatprep.subr.mxu0 0.0
    %2927 = vmatpush1.msra.mxu0 0.0
    %2928 = vmatprep.subr.mxu0 0.0
    %2929 = vmatpush1.msra.mxu0 0.0
    %2930 = vmatprep.subr.mxu0 0.0
    %2931 = vmatpush1.msra.mxu0 0.0
    %2932 = vmatprep.subr.mxu0 0.0
    %2933 = vmatpush1.msra.mxu0 0.0
    %2934 = vmatprep.subr.mxu0 0.0
    %2935 = vmatpush1.msra.mxu0 0.0
    %2936 = vmatprep.subr.mxu0 0.0
    %2937 = vmatpush1.msra.mxu0 0.0
    %2938 = vmatprep.subr.mxu0 0.0
    %2939 = vmatpush1.msra.mxu0 0.0
    %2940 = vmatprep.subr.mxu0 0.0
    %2941 = vmatpush1.msra.mxu0 0.0
    %2942 = vmatprep.subr.mxu0 0.0
    %2943 = vmatpush1.msra.mxu0 0.0
    %2944 = vmatprep.subr.mxu0 0.0
    %2945 = vmatpush1.msra.mxu0 0.0
    %2946 = vmatprep.subr.mxu0 0.0
    %2947 = vmatpush1.msra.mxu0 0.0
    %2948 = vmatprep.subr.mxu0 0.0
    %2949 = vmatpush1.msra.mxu0 0.0
    %2950 = vmatprep.subr.mxu0 0.0
    %2951 = vmatpush1.msra.mxu0 0.0
    %2952 = vmatprep.subr.mxu0 0.0
    %2953 = vmatpush1.msra.mxu0 0.0
    %2954 = vmatprep.subr.mxu0 0.0
    %2955 = vmatpush1.msra.mxu0 0.0
    %2956 = vmatprep.subr.mxu0 0.0
    %2957 = vmatpush1.msra.mxu0 0.0
    %2958 = vmatprep.subr.mxu0 0.0
    %2959 = vmatpush1.msra.mxu0 0.0
    %2960 = vmatprep.subr.mxu0 0.0
    %2961 = vmatpush1.msra.mxu0 0.0
    %2962 = vmatprep.subr.mxu0 0.0
    %2963 = vmatpush1.msra.mxu0 0.0
    %2964 = vmatprep.subr.mxu0 0.0
    %2965 = vmatpush1.msra.mxu0 0.0
    %2966 = vmatprep.subr.mxu0 0.0
    %2967 = vmatpush1.msra.mxu0 0.0
    %2968 = vmatprep.subr.mxu0 0.0
    %2969 = vmatpush1.msra.mxu0 0.0
    %2970 = vmatprep.subr.mxu0 0.0
    %2971 = vmatpush1.msra.mxu0 0.0
    %2972 = vmatprep.subr.mxu0 0.0
    %2973 = vmatpush1.msra.mxu0 0.0
    %2974 = vmatprep.subr.mxu0 0.0
    %2975 = vmatpush1.msra.mxu0 0.0
    %2976 = vmatprep.subr.mxu0 0.0
    %2977 = vmatpush1.msra.mxu0 0.0
    %2978 = vmatprep.subr.mxu0 0.0
    %2979 = vmatpush1.msra.mxu0 0.0
    %2980 = vmatprep.mubr.f32.mxu0 0.0
    %2981 = vmatmul.mubr.f32.gmra.mrb[0].mxu0 %v2914
    %v2982 = vpop.f32.mrb[0].mxu0
    %v2983 = vadd.f32 %v2912, %v2982
    %v2984 = vpop.f32.mrb[0].mxu0
    %2985 = vdwg.mxu0
    %v2986 = vadd.f32 %v2900, %v2983
    %v2987 = vxor.u32 %v2986, 2147483648
    %v2988 = vmul.f32 %v2987, 1.442695
    %v2989 = vpow.pop %v2988
    %v2990 = vadd.f32 %v2989, 1.0
    %v2991 = vrcp.pop %v2990
    %v2992 = vmul.f32 1.0, %v2991
    %2994 = vrot.lane.b32.xlu0 %v2983, 64
    %v2995 = vpop.permute.xlu0 %2994
    %v2997 = vmul.f32 %v2992, %v2995
    %2999 = vrot.lane.b32.xlu0 %v2997, 64
    %v3000 = vpop.permute.xlu0 %2999
    %v3002 = vadd.f32 %v2900, %v3000
    %v3003 = vtanh.pop %v3002
    %v3004 = vsub.f32 1.0, %v2992
    %3006 = vrot.lane.b32.xlu0 %v3003, 96
    %v3007 = vpop.permute.xlu0 %3006
    %v3009 = vmul.f32 %v3004, %v3007
    %v3010 = vmul.f32 %v2992, %v2613
    %v3011 = vadd.f32 %v3009, %v3010
    %s3012 = scalar_lea.vmem %s0, 30
    %v3013 = vld [vmem:[%s3012] sm:$0x3]
    %v3014 = vld [vmem:[%s226] sm:$0xff]
    %v3015 = vld [vmem:[%s226 + $0x8] sm:$0xff]
    %v3016 = vld [vmem:[%s229] sm:$0x1]
    %v3018 = vlaneseq
    %v3019 = vshrl.u32 %v3018, 7
    %v3020 = vsub.s32 0, %v3019
    %v3021 = vrot.slane %v3016, %v3020
    %v3024 = vsel %vm39, %v3013, 0
    %3026 = vmatprep.subr.mxu0 0.0
    %3027 = vmatpush1.msra.mxu0 %v3014
    %3028 = vmatprep.subr.mxu0 0.0
    %3029 = vmatpush1.msra.mxu0 %v3015
    %3030 = vmatprep.subr.mxu0 0.0
    %3031 = vmatpush1.msra.mxu0 0.0
    %3032 = vmatprep.subr.mxu0 0.0
    %3033 = vmatpush1.msra.mxu0 0.0
    %3034 = vmatprep.subr.mxu0 0.0
    %3035 = vmatpush1.msra.mxu0 0.0
    %3036 = vmatprep.subr.mxu0 0.0
    %3037 = vmatpush1.msra.mxu0 0.0
    %3038 = vmatprep.subr.mxu0 0.0
    %3039 = vmatpush1.msra.mxu0 0.0
    %3040 = vmatprep.subr.mxu0 0.0
    %3041 = vmatpush1.msra.mxu0 0.0
    %3042 = vmatprep.subr.mxu0 0.0
    %3043 = vmatpush1.msra.mxu0 0.0
    %3044 = vmatprep.subr.mxu0 0.0
    %3045 = vmatpush1.msra.mxu0 0.0
    %3046 = vmatprep.subr.mxu0 0.0
    %3047 = vmatpush1.msra.mxu0 0.0
    %3048 = vmatprep.subr.mxu0 0.0
    %3049 = vmatpush1.msra.mxu0 0.0
    %3050 = vmatprep.subr.mxu0 0.0
    %3051 = vmatpush1.msra.mxu0 0.0
    %3052 = vmatprep.subr.mxu0 0.0
    %3053 = vmatpush1.msra.mxu0 0.0
    %3054 = vmatprep.subr.mxu0 0.0
    %3055 = vmatpush1.msra.mxu0 0.0
    %3056 = vmatprep.subr.mxu0 0.0
    %3057 = vmatpush1.msra.mxu0 0.0
    %3058 = vmatprep.subr.mxu0 0.0
    %3059 = vmatpush1.msra.mxu0 0.0
    %3060 = vmatprep.subr.mxu0 0.0
    %3061 = vmatpush1.msra.mxu0 0.0
    %3062 = vmatprep.subr.mxu0 0.0
    %3063 = vmatpush1.msra.mxu0 0.0
    %3064 = vmatprep.subr.mxu0 0.0
    %3065 = vmatpush1.msra.mxu0 0.0
    %3066 = vmatprep.subr.mxu0 0.0
    %3067 = vmatpush1.msra.mxu0 0.0
    %3068 = vmatprep.subr.mxu0 0.0
    %3069 = vmatpush1.msra.mxu0 0.0
    %3070 = vmatprep.subr.mxu0 0.0
    %3071 = vmatpush1.msra.mxu0 0.0
    %3072 = vmatprep.subr.mxu0 0.0
    %3073 = vmatpush1.msra.mxu0 0.0
    %3074 = vmatprep.subr.mxu0 0.0
    %3075 = vmatpush1.msra.mxu0 0.0
    %3076 = vmatprep.subr.mxu0 0.0
    %3077 = vmatpush1.msra.mxu0 0.0
    %3078 = vmatprep.subr.mxu0 0.0
    %3079 = vmatpush1.msra.mxu0 0.0
    %3080 = vmatprep.subr.mxu0 0.0
    %3081 = vmatpush1.msra.mxu0 0.0
    %3082 = vmatprep.subr.mxu0 0.0
    %3083 = vmatpush1.msra.mxu0 0.0
    %3084 = vmatprep.subr.mxu0 0.0
    %3085 = vmatpush1.msra.mxu0 0.0
    %3086 = vmatprep.subr.mxu0 0.0
    %3087 = vmatpush1.msra.mxu0 0.0
    %3088 = vmatprep.subr.mxu0 0.0
    %3089 = vmatpush1.msra.mxu0 0.0
    %3090 = vmatprep.mubr.f32.mxu0 0.0
    %3091 = vmatmul.mubr.f32.gmra.mrb[0].mxu0 %v3024
    %v3092 = vpop.f32.mrb[0].mxu0
    %v3093 = vadd.f32 %v3021, %v3092
    %v3094 = vpop.f32.mrb[0].mxu0
    %3095 = vdwg.mxu0
    %v3096 = vld [vmem:[%s310] sm:$0xff]
    %v3097 = vld [vmem:[%s310 + $0x8] sm:$0xff]
    %v3098 = vld [vmem:[%s310 + $0x10] sm:$0xff]
    %v3099 = vld [vmem:[%s310 + $0x18] sm:$0xff]
    %v3100 = vld [vmem:[%s315] sm:$0x1]
    %v3102 = vlaneseq
    %v3103 = vshrl.u32 %v3102, 7
    %v3104 = vsub.s32 0, %v3103
    %v3105 = vrot.slane %v3100, %v3104
    %v3107 = vsel %vm124, %v2815, 0
    %3109 = vmatprep.subr.mxu0 0.0
    %3110 = vmatpush1.msra.mxu0 %v3096
    %3111 = vmatprep.subr.mxu0 0.0
    %3112 = vmatpush1.msra.mxu0 %v3097
    %3113 = vmatprep.subr.mxu0 0.0
    %3114 = vmatpush1.msra.mxu0 %v3098
    %3115 = vmatprep.subr.mxu0 0.0
    %3116 = vmatpush1.msra.mxu0 %v3099
    %3117 = vmatprep.subr.mxu0 0.0
    %3118 = vmatpush1.msra.mxu0 0.0
    %3119 = vmatprep.subr.mxu0 0.0
    %3120 = vmatpush1.msra.mxu0 0.0
    %3121 = vmatprep.subr.mxu0 0.0
    %3122 = vmatpush1.msra.mxu0 0.0
    %3123 = vmatprep.subr.mxu0 0.0
    %3124 = vmatpush1.msra.mxu0 0.0
    %3125 = vmatprep.subr.mxu0 0.0
    %3126 = vmatpush1.msra.mxu0 0.0
    %3127 = vmatprep.subr.mxu0 0.0
    %3128 = vmatpush1.msra.mxu0 0.0
    %3129 = vmatprep.subr.mxu0 0.0
    %3130 = vmatpush1.msra.mxu0 0.0
    %3131 = vmatprep.subr.mxu0 0.0
    %3132 = vmatpush1.msra.mxu0 0.0
    %3133 = vmatprep.subr.mxu0 0.0
    %3134 = vmatpush1.msra.mxu0 0.0
    %3135 = vmatprep.subr.mxu0 0.0
    %3136 = vmatpush1.msra.mxu0 0.0
    %3137 = vmatprep.subr.mxu0 0.0
    %3138 = vmatpush1.msra.mxu0 0.0
    %3139 = vmatprep.subr.mxu0 0.0
    %3140 = vmatpush1.msra.mxu0 0.0
    %3141 = vmatprep.subr.mxu0 0.0
    %3142 = vmatpush1.msra.mxu0 0.0
    %3143 = vmatprep.subr.mxu0 0.0
    %3144 = vmatpush1.msra.mxu0 0.0
    %3145 = vmatprep.subr.mxu0 0.0
    %3146 = vmatpush1.msra.mxu0 0.0
    %3147 = vmatprep.subr.mxu0 0.0
    %3148 = vmatpush1.msra.mxu0 0.0
    %3149 = vmatprep.subr.mxu0 0.0
    %3150 = vmatpush1.msra.mxu0 0.0
    %3151 = vmatprep.subr.mxu0 0.0
    %3152 = vmatpush1.msra.mxu0 0.0
    %3153 = vmatprep.subr.mxu0 0.0
    %3154 = vmatpush1.msra.mxu0 0.0
    %3155 = vmatprep.subr.mxu0 0.0
    %3156 = vmatpush1.msra.mxu0 0.0
    %3157 = vmatprep.subr.mxu0 0.0
    %3158 = vmatpush1.msra.mxu0 0.0
    %3159 = vmatprep.subr.mxu0 0.0
    %3160 = vmatpush1.msra.mxu0 0.0
    %3161 = vmatprep.subr.mxu0 0.0
    %3162 = vmatpush1.msra.mxu0 0.0
    %3163 = vmatprep.subr.mxu0 0.0
    %3164 = vmatpush1.msra.mxu0 0.0
    %3165 = vmatprep.subr.mxu0 0.0
    %3166 = vmatpush1.msra.mxu0 0.0
    %3167 = vmatprep.subr.mxu0 0.0
    %3168 = vmatpush1.msra.mxu0 0.0
    %3169 = vmatprep.subr.mxu0 0.0
    %3170 = vmatpush1.msra.mxu0 0.0
    %3171 = vmatprep.subr.mxu0 0.0
    %3172 = vmatpush1.msra.mxu0 0.0
    %3173 = vmatprep.mubr.f32.mxu0 0.0
    %3174 = vmatmul.mubr.f32.gmra.mrb[0].mxu0 %v3107
    %v3175 = vpop.f32.mrb[0].mxu0
    %v3176 = vadd.f32 %v3105, %v3175
    %v3177 = vpop.f32.mrb[0].mxu0
    %3178 = vdwg.mxu0
    %v3179 = vadd.f32 %v3093, %v3176
    %v3180 = vxor.u32 %v3179, 2147483648
    %v3181 = vmul.f32 %v3180, 1.442695
    %v3182 = vpow.pop %v3181
    %v3183 = vadd.f32 %v3182, 1.0
    %v3184 = vrcp.pop %v3183
    %v3185 = vmul.f32 1.0, %v3184
    %3187 = vrot.lane.b32.xlu0 %v3176, 64
    %v3188 = vpop.permute.xlu0 %3187
    %v3190 = vmul.f32 %v3185, %v3188
    %3192 = vrot.lane.b32.xlu0 %v3190, 64
    %v3193 = vpop.permute.xlu0 %3192
    %v3195 = vadd.f32 %v3093, %v3193
    %v3196 = vtanh.pop %v3195
    %v3197 = vsub.f32 1.0, %v3185
    %3199 = vrot.lane.b32.xlu0 %v3196, 96
    %v3200 = vpop.permute.xlu0 %3199
    %v3202 = vmul.f32 %v3197, %v3200
    %v3203 = vmul.f32 %v3185, %v2806
    %v3204 = vadd.f32 %v3202, %v3203
    %3206 = vrot.lane.b32.xlu0 %v3011, 96
    %v3207 = vpop.permute.xlu0 %3206
    %s3209 = scalar_lea.vmem [#allocation2], 14
    %3210 = vst.msk [vmem:[%s3209] sm:$0x3] %vm423, %v3207
    %3212 = vrot.lane.b32.xlu0 %v3204, 96
    %v3213 = vpop.permute.xlu0 %3212
    %3215 = vst.msk [vmem:[#allocation3] sm:$0x3] %vm423, %v3213
    %v3216 = vld [vmem:[#allocation2] sm:$0x3]
    %v3217 = vld [vmem:[#allocation2 + $0x2] sm:$0x3]
    %v3218 = vld [vmem:[#allocation2 + $0x4] sm:$0x3]
    %v3219 = vld [vmem:[#allocation2 + $0x6] sm:$0x3]
    %v3220 = vld [vmem:[#allocation2 + $0x8] sm:$0x3]
    %v3221 = vld [vmem:[#allocation2 + $0xa] sm:$0x3]
    %v3222 = vld [vmem:[#allocation2 + $0xc] sm:$0x3]
    %v3223 = vld [vmem:[#allocation2 + $0xe] sm:$0x3]
    %v3224 = vld [vmem:[#allocation3] sm:$0x3]
    %v3225 = vld [vmem:[#allocation3 + $0x2] sm:$0x3]
    %v3226 = vld [vmem:[#allocation3 + $0x4] sm:$0x3]
    %v3227 = vld [vmem:[#allocation3 + $0x6] sm:$0x3]
    %v3228 = vld [vmem:[#allocation3 + $0x8] sm:$0x3]
    %v3229 = vld [vmem:[#allocation3 + $0xa] sm:$0x3]
    %v3230 = vld [vmem:[#allocation3 + $0xc] sm:$0x3]
    %v3231 = vld [vmem:[#allocation3 + $0xe] sm:$0x3]
    %3240 = vrot.lane.b32.xlu0 %v3224, 32
    %v3241 = vpop.permute.xlu0 %3240
    %3242 = vrot.lane.b32.xlu0 %v3225, 32
    %v3243 = vpop.permute.xlu0 %3242
    %3244 = vrot.lane.b32.xlu0 %v3226, 32
    %v3245 = vpop.permute.xlu0 %3244
    %3246 = vrot.lane.b32.xlu0 %v3227, 32
    %v3247 = vpop.permute.xlu0 %3246
    %3248 = vrot.lane.b32.xlu0 %v3228, 32
    %v3249 = vpop.permute.xlu0 %3248
    %3250 = vrot.lane.b32.xlu0 %v3229, 32
    %v3251 = vpop.permute.xlu0 %3250
    %3252 = vrot.lane.b32.xlu0 %v3230, 32
    %v3253 = vpop.permute.xlu0 %3252
    %3254 = vrot.lane.b32.xlu0 %v3231, 32
    %v3255 = vpop.permute.xlu0 %3254
    %v3264 = vsel %vm124, %v3216, %v3241
    %v3265 = vsel %vm124, %v3217, %v3243
    %v3266 = vsel %vm124, %v3218, %v3245
    %v3267 = vsel %vm124, %v3219, %v3247
    %v3268 = vsel %vm124, %v3220, %v3249
    %v3269 = vsel %vm124, %v3221, %v3251
    %v3270 = vsel %vm124, %v3222, %v3253
    %v3271 = vsel %vm124, %v3223, %v3255
    %vm3272 = vcmask 517120
    %3273 = vst.msk [vmem:[%s7] sm:$0x3] %vm3272, %v3264
    %3274 = vst.msk [vmem:[%s7 + $0x2] sm:$0x3] %vm3272, %v3265
    %3275 = vst.msk [vmem:[%s7 + $0x4] sm:$0x3] %vm3272, %v3266
    %3276 = vst.msk [vmem:[%s7 + $0x6] sm:$0x3] %vm3272, %v3267
    %3277 = vst.msk [vmem:[%s7 + $0x8] sm:$0x3] %vm3272, %v3268
    %3278 = vst.msk [vmem:[%s7 + $0xa] sm:$0x3] %vm3272, %v3269
    %3279 = vst.msk [vmem:[%s7 + $0xc] sm:$0x3] %vm3272, %v3270
    %3280 = vst.msk [vmem:[%s7 + $0xe] sm:$0x3] %vm3272, %v3271
    %v3281 = vsel %vm124, %v3207, %v3204
    %v3282 = vld [vmem:[%s5] sm:$0xff]
    %v3283 = vld [vmem:[%s5 + $0x8] sm:$0xff]
    %v3284 = vld [vmem:[%s5 + $0x10] sm:$0xff]
    %v3285 = vld [vmem:[%s5 + $0x18] sm:$0xff]
    %v3286 = vld [vmem:[%s5 + $0x20] sm:$0xff]
    %v3287 = vld [vmem:[%s5 + $0x28] sm:$0xff]
    %v3288 = vld [vmem:[%s5 + $0x30] sm:$0xff]
    %v3289 = vld [vmem:[%s5 + $0x38] sm:$0xff]
    %v3290 = vld [vmem:[%s6] sm:$0x1]
    %v3292 = vlaneseq
    %v3293 = vshrl.u32 %v3292, 7
    %v3294 = vsub.s32 0, %v3293
    %v3295 = vrot.slane %v3290, %v3294
    %vm3297 = vcmask 523264
    %v3299 = vsel %vm3297, %v3281, 0
    %3301 = vmatprep.subr.mxu0 0.0
    %3302 = vmatpush1.msra.mxu0 %v3282
    %3303 = vmatprep.subr.mxu0 0.0
    %3304 = vmatpush1.msra.mxu0 %v3283
    %3305 = vmatprep.subr.mxu0 0.0
    %3306 = vmatpush1.msra.mxu0 %v3284
    %3307 = vmatprep.subr.mxu0 0.0
    %3308 = vmatpush1.msra.mxu0 %v3285
    %3309 = vmatprep.subr.mxu0 0.0
    %3310 = vmatpush1.msra.mxu0 %v3286
    %3311 = vmatprep.subr.mxu0 0.0
    %3312 = vmatpush1.msra.mxu0 %v3287
    %3313 = vmatprep.subr.mxu0 0.0
    %3314 = vmatpush1.msra.mxu0 %v3288
    %3315 = vmatprep.subr.mxu0 0.0
    %3316 = vmatpush1.msra.mxu0 %v3289
    %3317 = vmatprep.subr.mxu0 0.0
    %3318 = vmatpush1.msra.mxu0 0.0
    %3319 = vmatprep.subr.mxu0 0.0
    %3320 = vmatpush1.msra.mxu0 0.0
    %3321 = vmatprep.subr.mxu0 0.0
    %3322 = vmatpush1.msra.mxu0 0.0
    %3323 = vmatprep.subr.mxu0 0.0
    %3324 = vmatpush1.msra.mxu0 0.0
    %3325 = vmatprep.subr.mxu0 0.0
    %3326 = vmatpush1.msra.mxu0 0.0
    %3327 = vmatprep.subr.mxu0 0.0
    %3328 = vmatpush1.msra.mxu0 0.0
    %3329 = vmatprep.subr.mxu0 0.0
    %3330 = vmatpush1.msra.mxu0 0.0
    %3331 = vmatprep.subr.mxu0 0.0
    %3332 = vmatpush1.msra.mxu0 0.0
    %3333 = vmatprep.subr.mxu0 0.0
    %3334 = vmatpush1.msra.mxu0 0.0
    %3335 = vmatprep.subr.mxu0 0.0
    %3336 = vmatpush1.msra.mxu0 0.0
    %3337 = vmatprep.subr.mxu0 0.0
    %3338 = vmatpush1.msra.mxu0 0.0
    %3339 = vmatprep.subr.mxu0 0.0
    %3340 = vmatpush1.msra.mxu0 0.0
    %3341 = vmatprep.subr.mxu0 0.0
    %3342 = vmatpush1.msra.mxu0 0.0
    %3343 = vmatprep.subr.mxu0 0.0
    %3344 = vmatpush1.msra.mxu0 0.0
    %3345 = vmatprep.subr.mxu0 0.0
    %3346 = vmatpush1.msra.mxu0 0.0
    %3347 = vmatprep.subr.mxu0 0.0
    %3348 = vmatpush1.msra.mxu0 0.0
    %3349 = vmatprep.subr.mxu0 0.0
    %3350 = vmatpush1.msra.mxu0 0.0
    %3351 = vmatprep.subr.mxu0 0.0
    %3352 = vmatpush1.msra.mxu0 0.0
    %3353 = vmatprep.subr.mxu0 0.0
    %3354 = vmatpush1.msra.mxu0 0.0
    %3355 = vmatprep.subr.mxu0 0.0
    %3356 = vmatpush1.msra.mxu0 0.0
    %3357 = vmatprep.subr.mxu0 0.0
    %3358 = vmatpush1.msra.mxu0 0.0
    %3359 = vmatprep.subr.mxu0 0.0
    %3360 = vmatpush1.msra.mxu0 0.0
    %3361 = vmatprep.subr.mxu0 0.0
    %3362 = vmatpush1.msra.mxu0 0.0
    %3363 = vmatprep.subr.mxu0 0.0
    %3364 = vmatpush1.msra.mxu0 0.0
    %3365 = vmatprep.mubr.f32.mxu0 0.0
    %3366 = vmatmul.mubr.f32.gmra.mrb[0].mxu0 %v3299
    %v3367 = vpop.f32.mrb[0].mxu0
    %v3368 = vadd.f32 %v3295, %v3367
    %v3369 = vpop.f32.mrb[0].mxu0
    %3370 = vdwg.mxu0
    %v3371 = vtanh.pop %v3368
    %3372 = vst.msk [vmem:[#allocation4] sm:$0x3] %vm423, %v3371
    // Predicated region
    $region30: #{run_encoder.1} parent=1 // pred_check
      _
    $region31: #{run_encoder.1} parent=1 // pred_check_branch
      %3374 = sbr.rel (0) target = $region33
    $region32: #{run_encoder.1} parent=1 // pred_region
      _
    $region33: #{run_encoder.1} parent=1 // pred_fallthru
      _
    // Predicated region
    $region34: #{run_encoder.1} parent=1 // pred_check
      _
    $region35: #{run_encoder.1} parent=1 // pred_check_branch
      %3376 = sbr.rel (0) target = $region37
    $region36: #{run_encoder.1} parent=1 // pred_region
      %s3378 = ssub.s32 32, 32
      %3379 = vsyncadd [#allocation5], %s3378
      %s3381 = sshll.u32 [#allocation4], 4
      %s3382 = int_to_ptr.vmem [resolvable:$true] %s3381
      %3384 = dma.vmem_to_hbm [thread:$0]  %s3382, 32, %s8, [#allocation5]
    $region37: #{run_encoder.1} parent=1 // pred_fallthru
      _
    // Predicated region
    $region38: #{run_encoder.1} parent=1 // pred_check
      _
    $region39: #{run_encoder.1} parent=1 // pred_check_branch
      %3386 = sbr.rel (0) target = $region41
    $region40: #{run_encoder.1} parent=1 // pred_region
      _
    $region41: #{run_encoder.1} parent=1 // pred_fallthru
      _
    // Predicated region
    $region42: #{run_encoder.1} parent=1 // pred_check
      _
    $region43: #{run_encoder.1} parent=1 // pred_check_branch
      %3388 = sbr.rel (0) target = $region45
    $region44: #{run_encoder.1} parent=1 // pred_region
      %3389 = dma.done [#allocation5], 32
    $region45: #{run_encoder.1} parent=1 // pred_fallthru
      _
    %3390 = vsyncpa [#allocation5], 1

</llo_original>
